<compile_context>
chip_gen: v6e
topology: v6e:2x2x1
jax: 0.10.0
libtpu: 0.0.40
codegen_flags: <defaults>
</compile_context>

<pallas_src>
import functools

import jax
import jax.numpy as jnp
from jax.experimental import pallas as pl
from jax.experimental.pallas import tpu as pltpu


def _round_up(x, m):
    return (x + m - 1) // m * m


def _pick_time_tile(T, max_tt=16):
    """Largest divisor of T that is <= max_tt (timesteps per grid step)."""
    for tt in range(min(T, max_tt), 0, -1):
        if T % tt == 0:
            return tt
    return 1


def lstm_recurrent_kernel(xp_ref, whh_ref, seq_ref, h_ref, c_ref,
                          h_sc, c_sc, *, tt_steps, hp):
    """Recurrent part of one LSTM layer over TT timesteps.

    xp_ref  : (TT, BB, 4*Hp)  precomputed x_t @ W_ih^T + b (time-major block)
    whh_ref : (Hp, 4*Hp)      W_hh^T (hidden-padded, zero rows/cols in padding)
    seq_ref : (TT, BB, Hp)    per-step hidden output (input to next layer)
    h_ref   : (BB, Hp)        final hidden state (written on last time block)
    c_ref   : (BB, Hp)        final cell   state (written on last time block)
    h_sc/c_sc : VMEM scratch carrying the recurrence across time blocks.
    """
    t_blk = pl.program_id(1)

    @pl.when(t_blk == 0)
    def _():
        h_sc[...] = jnp.zeros_like(h_sc)
        c_sc[...] = jnp.zeros_like(c_sc)

    whh = whh_ref[...]              # keep resident in vregs across the unrolled loop
    h = h_sc[...]
    c = c_sc[...]

    # Fully unrolled static loop over TT timesteps (constant leading-dim indices,
    # long basic block so the W_hh GEMM latency hides under the gate math).
    for t in range(tt_steps):
        gates = xp_ref[t] + jnp.dot(h, whh, preferred_element_type=jnp.float32)
        # Lane-aligned gate slices (Hp is a multiple of 128): whole-vreg selects.
        i_g = jax.nn.sigmoid(gates[:, 0 * hp:1 * hp])
        f_g = jax.nn.sigmoid(gates[:, 1 * hp:2 * hp])
        g_g = jnp.tanh(gates[:, 2 * hp:3 * hp])
        o_g = jax.nn.sigmoid(gates[:, 3 * hp:4 * hp])
        c = f_g * c + i_g * g_g
        h = o_g * jnp.tanh(c)
        seq_ref[t] = h.astype(seq_ref.dtype)   # lane-dense (BB, Hp) store

    h_sc[...] = h
    c_sc[...] = c

    @pl.when(t_blk == pl.num_programs(1) - 1)
    def _():
        h_ref[...] = h.astype(h_ref.dtype)
        c_ref[...] = c.astype(c_ref.dtype)


def lstm_recurrent(xp, whh_t, hp):
    """Run the recurrence of one LSTM layer.

    xp    : (T, Bp, 4*Hp) f32  precomputed input projection + bias (time-major)
    whh_t : (Hp, 4*Hp)    f32  padded W_hh^T
    Returns (seq (T,Bp,Hp), h_n (Bp,Hp), c_n (Bp,Hp)).
    """
    T, bp, g4 = xp.shape
    assert g4 == 4 * hp

    tt = _pick_time_tile(T)
    # Split batch across TensorCores (v7x megacore) when it is big enough.
    if bp >= 16 and bp % 16 == 0:
        bb = bp // 2
    else:
        bb = bp
    n_b = bp // bb
    n_t = T // tt

    kernel = functools.partial(lstm_recurrent_kernel, tt_steps=tt, hp=hp)

    # Advisory cost estimate for the XLA scheduler.
    flops = 2 * T * bp * hp * 4 * hp + 10 * T * bp * hp
    transcendentals = 5 * T * bp * hp
    bytes_accessed = 4 * (T * bp * 4 * hp      # xp read
                          + T * bp * hp        # seq write
                          + hp * 4 * hp        # W_hh^T
                          + 4 * bp * hp)       # h/c writeback

    grid_spec = pltpu.PrefetchScalarGridSpec(
        num_scalar_prefetch=0,
        grid=(n_b, n_t),
        in_specs=[
            pl.BlockSpec((tt, bb, 4 * hp), lambda b, t: (t, b, 0)),
            pl.BlockSpec((hp, 4 * hp), lambda b, t: (0, 0)),
        ],
        out_specs=[
            pl.BlockSpec((tt, bb, hp), lambda b, t: (t, b, 0)),
            pl.BlockSpec((bb, hp), lambda b, t: (b, 0)),
            pl.BlockSpec((bb, hp), lambda b, t: (b, 0)),
        ],
        scratch_shapes=[
            pltpu.VMEM((bb, hp), jnp.float32),
            pltpu.VMEM((bb, hp), jnp.float32),
        ],
    )

    seq, h_n, c_n = pl.pallas_call(
        kernel,
        out_shape=(
            jax.ShapeDtypeStruct((T, bp, hp), jnp.float32),
            jax.ShapeDtypeStruct((bp, hp), jnp.float32),
            jax.ShapeDtypeStruct((bp, hp), jnp.float32),
        ),
        grid_spec=grid_spec,
        compiler_params=pltpu.CompilerParams(
            dimension_semantics=("parallel", "arbitrary")),  # batch par, time serial
        cost_estimate=pl.CostEstimate(flops=flops,
                                      transcendentals=transcendentals,
                                      bytes_accessed=bytes_accessed),
    )(xp, whh_t)
    return seq, h_n, c_n


def _prepare_layer_weights(w_ih, w_hh, b_ih, b_hh, in_target, hp):
    """Pad / relayout PyTorch-shaped LSTM weights for lane-aligned gates.

    w_ih : (4H, in_actual), w_hh : (4H, H), b_ih/b_hh : (4H,)
    Returns:
      wih_t : (in_target, 4*Hp)   columns ordered [i | f | g | o], each Hp wide
      whh_t : (Hp, 4*Hp)          zero rows/cols in the padded region
      b     : (4*Hp,)             b_ih + b_hh, zero in padding
    """
    four_h, in_actual = w_ih.shape
    H = four_h // 4
    w_ih_g = jnp.pad(w_ih.reshape(4, H, in_actual),
                     ((0, 0), (0, hp - H), (0, in_target - in_actual)))
    w_hh_g = jnp.pad(w_hh.reshape(4, H, H),
                     ((0, 0), (0, hp - H), (0, hp - H)))
    b_g = jnp.pad((b_ih + b_hh).reshape(4, H), ((0, 0), (0, hp - H)))
    wih_t = jnp.transpose(w_ih_g, (2, 0, 1)).reshape(in_target, 4 * hp)
    whh_t = jnp.transpose(w_hh_g, (2, 0, 1)).reshape(hp, 4 * hp)
    b = b_g.reshape(4 * hp)
    return wih_t, whh_t, b


def init_encoder_params(key, input_size, hidden_size, num_layers):
    """Deterministic parameter init matching nn.LSTM shapes:
       per layer: W_ih (4H, in_l), W_hh (4H, H), b_ih (4H,), b_hh (4H,)
       uniform(-1/sqrt(H), 1/sqrt(H)) like PyTorch."""
    k = 1.0 / jnp.sqrt(jnp.float32(hidden_size))
    params = []
    for layer in range(num_layers):
        in_l = input_size if layer == 0 else hidden_size
        key, k1, k2, k3, k4 = jax.random.split(key, 5)
        w_ih = jax.random.uniform(k1, (4 * hidden_size, in_l), jnp.float32, -k, k)
        w_hh = jax.random.uniform(k2, (4 * hidden_size, hidden_size), jnp.float32, -k, k)
        b_ih = jax.random.uniform(k3, (4 * hidden_size,), jnp.float32, -k, k)
        b_hh = jax.random.uniform(k4, (4 * hidden_size,), jnp.float32, -k, k)
        params.append((w_ih, w_hh, b_ih, b_hh))
    return params


def encoder_forward(x, params):
    """x: (B, T, input_size) batch-first (like nn.LSTM(batch_first=True)).
       Returns (hidden, cell), each (num_layers, B, hidden_size)."""
    B, T, _ = x.shape
    H = params[0][1].shape[1]
    hp = _round_up(H, 128)   # lane-align hidden dim
    bp = _round_up(B, 8)     # sublane-align batch dim

    x_pad = jnp.pad(x.astype(jnp.float32), ((0, bp - B), (0, 0), (0, 0)))

    hs, cs = [], []
    layer_in = None  # time-major (T, Bp, Hp) for layers > 0
    for li, (w_ih, w_hh, b_ih, b_hh) in enumerate(params):
        in_actual = w_ih.shape[1]
        in_target = in_actual if li == 0 else hp
        wih_t, whh_t, b = _prepare_layer_weights(w_ih, w_hh, b_ih, b_hh,
                                                 in_target, hp)
        # Hoisted input projection for the whole sequence (one big GEMM, no time
        # dependence). For layer 0 the batch-first -> time-major reorder is fused
        # into the GEMM output layout (no standalone transpose pass).
        if li == 0:
            xp = jnp.einsum('bti,ig->tbg', x_pad, wih_t,
                            preferred_element_type=jnp.float32) + b
        else:
            xp = jnp.einsum('tbi,ig->tbg', layer_in, wih_t,
                            preferred_element_type=jnp.float32) + b

        seq, h_n, c_n = lstm_recurrent(xp, whh_t, hp)
        hs.append(h_n[:B, :H])
        cs.append(c_n[:B, :H])
        layer_in = seq  # padded lanes of seq are exactly 0; fed padded to next layer
        # TODO(synk): nn.LSTM's inter-layer dropout (and self.dropout) only act in
        # training mode; forward here follows eval semantics (identity).
    return jnp.stack(hs, axis=0), jnp.stack(cs, axis=0)


if __name__ == "__main__":
    # Small shapes consistent with Encoder(input_size, hidden_size, num_layers, dropout)
    B, T = 2, 8
    input_size, hidden_size, num_layers, dropout = 4, 32, 2, 0.1

    key = jax.random.PRNGKey(0)
    key, xk = jax.random.split(key)
    x = jax.random.normal(xk, (B, T, input_size), dtype=jnp.float32)

    params = init_encoder_params(key, input_size, hidden_size, num_layers)

    fwd = jax.jit(encoder_forward)
    hidden, cell = fwd(x, params)
    hidden = jax.block_until_ready(hidden)
    cell = jax.block_until_ready(cell)

    assert hidden.shape == (num_layers, B, hidden_size)
    assert cell.shape == (num_layers, B, hidden_size)
    assert bool(jnp.all(jnp.isfinite(hidden))) and bool(jnp.all(jnp.isfinite(cell)))
    print("KERNEL_OK")
</pallas_src>

<mosaic_0001>
module attributes {stable_mosaic.version = 11 : i64} {
  func.func @lstm_recurrent_kernel(%arg0: i32, %arg1: i32, %arg2: memref<8x8x512xf32, #tpu.memory_space<vmem>>, %arg3: memref<128x512xf32, #tpu.memory_space<vmem>>, %arg4: memref<8x8x128xf32, #tpu.memory_space<vmem>>, %arg5: memref<8x128xf32, #tpu.memory_space<vmem>>, %arg6: memref<8x128xf32, #tpu.memory_space<vmem>>, %arg7: memref<8x128xf32, #tpu.memory_space<vmem>>, %arg8: memref<8x128xf32, #tpu.memory_space<vmem>>) attributes {dimension_semantics = [#tpu.dimension_semantics<parallel>, #tpu.dimension_semantics<arbitrary>], iteration_bounds = array<i64: 1, 1>, scalar_prefetch = 0 : i64, scratch_operands = 2 : i64, tpu.core_type = #tpu.core_type<tc>, window_params = [{transform_indices = @transform_0, window_bounds = array<i64: 8, 8, 512>}, {pipeline_mode = #tpu.pipeline_mode<synchronous>, transform_indices = @transform_1, window_bounds = array<i64: 128, 512>}, {transform_indices = @transform_2, window_bounds = array<i64: 8, 8, 128>}, {transform_indices = @transform_3, window_bounds = array<i64: 8, 128>}, {transform_indices = @transform_4, window_bounds = array<i64: 8, 128>}]} {
    %c0_i32 = arith.constant 0 : i32
    %0 = arith.cmpi eq, %arg1, %c0_i32 : i32
    %1 = arith.extui %0 : i1 to i32
    %c0_i32_0 = arith.constant 0 : i32
    %2 = arith.cmpi ne, %1, %c0_i32_0 : i32
    scf.if %2 {
      %cst_84 = arith.constant 0.000000e+00 : f32
      %267 = vector.broadcast %cst_84 : f32 to vector<8x128xf32>
      %c0_85 = arith.constant 0 : index
      %c0_86 = arith.constant 0 : index
      %268 = vector.load %arg7[%c0_85, %c0_86] : memref<8x128xf32, #tpu.memory_space<vmem>>, vector<8x128xf32>
      tpu.vector_store %arg7[%c0_85, %c0_86], %267 {strides = array<i32>} : memref<8x128xf32, #tpu.memory_space<vmem>>, vector<8x128xf32>,
      %cst_87 = arith.constant 0.000000e+00 : f32
      %269 = vector.broadcast %cst_87 : f32 to vector<8x128xf32>
      %c0_88 = arith.constant 0 : index
      %c0_89 = arith.constant 0 : index
      %270 = vector.load %arg8[%c0_88, %c0_89] : memref<8x128xf32, #tpu.memory_space<vmem>>, vector<8x128xf32>
      tpu.vector_store %arg8[%c0_88, %c0_89], %269 {strides = array<i32>} : memref<8x128xf32, #tpu.memory_space<vmem>>, vector<8x128xf32>,
    } else {
    }
    %c0 = arith.constant 0 : index
    %c0_1 = arith.constant 0 : index
    %3 = vector.load %arg3[%c0, %c0_1] : memref<128x512xf32, #tpu.memory_space<vmem>>, vector<128x512xf32>
    %c0_2 = arith.constant 0 : index
    %c0_3 = arith.constant 0 : index
    %4 = vector.load %arg7[%c0_2, %c0_3] : memref<8x128xf32, #tpu.memory_space<vmem>>, vector<8x128xf32>
    %c0_4 = arith.constant 0 : index
    %c0_5 = arith.constant 0 : index
    %5 = vector.load %arg8[%c0_4, %c0_5] : memref<8x128xf32, #tpu.memory_space<vmem>>, vector<8x128xf32>
    %c0_6 = arith.constant 0 : index
    %c0_7 = arith.constant 0 : index
    %c0_8 = arith.constant 0 : index
    %6 = vector.load %arg2[%c0_6, %c0_7, %c0_8] : memref<8x8x512xf32, #tpu.memory_space<vmem>>, vector<1x8x512xf32>
    %7 = vector.shape_cast %6 : vector<1x8x512xf32> to vector<8x512xf32>
    %cst = arith.constant dense<0.000000e+00> : vector<8x512xf32>
    %8 = tpu.matmul %4, %3, %cst {dimension_numbers = #tpu.dot_dimension_numbers<[1], [0], [0], [1], [0, 0, 1, 1], [], []>} : vector<8x128xf32>, vector<128x512xf32>, vector<8x512xf32> -> vector<8x512xf32>
    %9 = arith.addf %7, %8 : vector<8x512xf32>
    %10 = vector.extract_strided_slice %9 {offsets = [0, 0], sizes = [8, 128], strides = [1, 1]} : vector<8x512xf32> to vector<8x128xf32>
    %11 = arith.negf %10 : vector<8x128xf32>
    %12 = math.exp %11 : vector<8x128xf32>
    %cst_9 = arith.constant 1.000000e+00 : f32
    %13 = vector.broadcast %cst_9 : f32 to vector<8x128xf32>
    %14 = arith.addf %13, %12 : vector<8x128xf32>
    %15 = arith.divf %13, %14 : vector<8x128xf32>
    %16 = vector.extract_strided_slice %9 {offsets = [0, 128], sizes = [8, 128], strides = [1, 1]} : vector<8x512xf32> to vector<8x128xf32>
    %17 = arith.negf %16 : vector<8x128xf32>
    %18 = math.exp %17 : vector<8x128xf32>
    %cst_10 = arith.constant 1.000000e+00 : f32
    %19 = vector.broadcast %cst_10 : f32 to vector<8x128xf32>
    %20 = arith.addf %19, %18 : vector<8x128xf32>
    %21 = arith.divf %19, %20 : vector<8x128xf32>
    %22 = vector.extract_strided_slice %9 {offsets = [0, 256], sizes = [8, 128], strides = [1, 1]} : vector<8x512xf32> to vector<8x128xf32>
    %23 = math.tanh %22 : vector<8x128xf32>
    %24 = vector.extract_strided_slice %9 {offsets = [0, 384], sizes = [8, 128], strides = [1, 1]} : vector<8x512xf32> to vector<8x128xf32>
    %25 = arith.negf %24 : vector<8x128xf32>
    %26 = math.exp %25 : vector<8x128xf32>
    %cst_11 = arith.constant 1.000000e+00 : f32
    %27 = vector.broadcast %cst_11 : f32 to vector<8x128xf32>
    %28 = arith.addf %27, %26 : vector<8x128xf32>
    %29 = arith.divf %27, %28 : vector<8x128xf32>
    %30 = arith.mulf %21, %5 : vector<8x128xf32>
    %31 = arith.mulf %15, %23 : vector<8x128xf32>
    %32 = arith.addf %30, %31 : vector<8x128xf32>
    %33 = math.tanh %32 : vector<8x128xf32>
    %34 = arith.mulf %29, %33 : vector<8x128xf32>
    %c0_12 = arith.constant 0 : index
    %c0_13 = arith.constant 0 : index
    %c0_14 = arith.constant 0 : index
    %35 = vector.load %arg4[%c0_12, %c0_13, %c0_14] : memref<8x8x128xf32, #tpu.memory_space<vmem>>, vector<1x8x128xf32>
    %36 = vector.shape_cast %35 : vector<1x8x128xf32> to vector<8x128xf32>
    %37 = vector.shape_cast %34 : vector<8x128xf32> to vector<1x8x128xf32>
    tpu.vector_store %arg4[%c0_12, %c0_13, %c0_14], %37 {strides = array<i32>} : memref<8x8x128xf32, #tpu.memory_space<vmem>>, vector<1x8x128xf32>,
    %c1 = arith.constant 1 : index
    %c0_15 = arith.constant 0 : index
    %c0_16 = arith.constant 0 : index
    %38 = vector.load %arg2[%c1, %c0_15, %c0_16] : memref<8x8x512xf32, #tpu.memory_space<vmem>>, vector<1x8x512xf32>
    %39 = vector.shape_cast %38 : vector<1x8x512xf32> to vector<8x512xf32>
    %cst_17 = arith.constant dense<0.000000e+00> : vector<8x512xf32>
    %40 = tpu.matmul %34, %3, %cst_17 {dimension_numbers = #tpu.dot_dimension_numbers<[1], [0], [0], [1], [0, 0, 1, 1], [], []>} : vector<8x128xf32>, vector<128x512xf32>, vector<8x512xf32> -> vector<8x512xf32>
    %41 = arith.addf %39, %40 : vector<8x512xf32>
    %42 = vector.extract_strided_slice %41 {offsets = [0, 0], sizes = [8, 128], strides = [1, 1]} : vector<8x512xf32> to vector<8x128xf32>
    %43 = arith.negf %42 : vector<8x128xf32>
    %44 = math.exp %43 : vector<8x128xf32>
    %cst_18 = arith.constant 1.000000e+00 : f32
    %45 = vector.broadcast %cst_18 : f32 to vector<8x128xf32>
    %46 = arith.addf %45, %44 : vector<8x128xf32>
    %47 = arith.divf %45, %46 : vector<8x128xf32>
    %48 = vector.extract_strided_slice %41 {offsets = [0, 128], sizes = [8, 128], strides = [1, 1]} : vector<8x512xf32> to vector<8x128xf32>
    %49 = arith.negf %48 : vector<8x128xf32>
    %50 = math.exp %49 : vector<8x128xf32>
    %cst_19 = arith.constant 1.000000e+00 : f32
    %51 = vector.broadcast %cst_19 : f32 to vector<8x128xf32>
    %52 = arith.addf %51, %50 : vector<8x128xf32>
    %53 = arith.divf %51, %52 : vector<8x128xf32>
    %54 = vector.extract_strided_slice %41 {offsets = [0, 256], sizes = [8, 128], strides = [1, 1]} : vector<8x512xf32> to vector<8x128xf32>
    %55 = math.tanh %54 : vector<8x128xf32>
    %56 = vector.extract_strided_slice %41 {offsets = [0, 384], sizes = [8, 128], strides = [1, 1]} : vector<8x512xf32> to vector<8x128xf32>
    %57 = arith.negf %56 : vector<8x128xf32>
    %58 = math.exp %57 : vector<8x128xf32>
    %cst_20 = arith.constant 1.000000e+00 : f32
    %59 = vector.broadcast %cst_20 : f32 to vector<8x128xf32>
    %60 = arith.addf %59, %58 : vector<8x128xf32>
    %61 = arith.divf %59, %60 : vector<8x128xf32>
    %62 = arith.mulf %53, %32 : vector<8x128xf32>
    %63 = arith.mulf %47, %55 : vector<8x128xf32>
    %64 = arith.addf %62, %63 : vector<8x128xf32>
    %65 = math.tanh %64 : vector<8x128xf32>
    %66 = arith.mulf %61, %65 : vector<8x128xf32>
    %c1_21 = arith.constant 1 : index
    %c0_22 = arith.constant 0 : index
    %c0_23 = arith.constant 0 : index
    %67 = vector.load %arg4[%c1_21, %c0_22, %c0_23] : memref<8x8x128xf32, #tpu.memory_space<vmem>>, vector<1x8x128xf32>
    %68 = vector.shape_cast %67 : vector<1x8x128xf32> to vector<8x128xf32>
    %69 = vector.shape_cast %66 : vector<8x128xf32> to vector<1x8x128xf32>
    tpu.vector_store %arg4[%c1_21, %c0_22, %c0_23], %69 {strides = array<i32>} : memref<8x8x128xf32, #tpu.memory_space<vmem>>, vector<1x8x128xf32>,
    %c2 = arith.constant 2 : index
    %c0_24 = arith.constant 0 : index
    %c0_25 = arith.constant 0 : index
    %70 = vector.load %arg2[%c2, %c0_24, %c0_25] : memref<8x8x512xf32, #tpu.memory_space<vmem>>, vector<1x8x512xf32>
    %71 = vector.shape_cast %70 : vector<1x8x512xf32> to vector<8x512xf32>
    %cst_26 = arith.constant dense<0.000000e+00> : vector<8x512xf32>
    %72 = tpu.matmul %66, %3, %cst_26 {dimension_numbers = #tpu.dot_dimension_numbers<[1], [0], [0], [1], [0, 0, 1, 1], [], []>} : vector<8x128xf32>, vector<128x512xf32>, vector<8x512xf32> -> vector<8x512xf32>
    %73 = arith.addf %71, %72 : vector<8x512xf32>
    %74 = vector.extract_strided_slice %73 {offsets = [0, 0], sizes = [8, 128], strides = [1, 1]} : vector<8x512xf32> to vector<8x128xf32>
    %75 = arith.negf %74 : vector<8x128xf32>
    %76 = math.exp %75 : vector<8x128xf32>
    %cst_27 = arith.constant 1.000000e+00 : f32
    %77 = vector.broadcast %cst_27 : f32 to vector<8x128xf32>
    %78 = arith.addf %77, %76 : vector<8x128xf32>
    %79 = arith.divf %77, %78 : vector<8x128xf32>
    %80 = vector.extract_strided_slice %73 {offsets = [0, 128], sizes = [8, 128], strides = [1, 1]} : vector<8x512xf32> to vector<8x128xf32>
    %81 = arith.negf %80 : vector<8x128xf32>
    %82 = math.exp %81 : vector<8x128xf32>
    %cst_28 = arith.constant 1.000000e+00 : f32
    %83 = vector.broadcast %cst_28 : f32 to vector<8x128xf32>
    %84 = arith.addf %83, %82 : vector<8x128xf32>
    %85 = arith.divf %83, %84 : vector<8x128xf32>
    %86 = vector.extract_strided_slice %73 {offsets = [0, 256], sizes = [8, 128], strides = [1, 1]} : vector<8x512xf32> to vector<8x128xf32>
    %87 = math.tanh %86 : vector<8x128xf32>
    %88 = vector.extract_strided_slice %73 {offsets = [0, 384], sizes = [8, 128], strides = [1, 1]} : vector<8x512xf32> to vector<8x128xf32>
    %89 = arith.negf %88 : vector<8x128xf32>
    %90 = math.exp %89 : vector<8x128xf32>
    %cst_29 = arith.constant 1.000000e+00 : f32
    %91 = vector.broadcast %cst_29 : f32 to vector<8x128xf32>
    %92 = arith.addf %91, %90 : vector<8x128xf32>
    %93 = arith.divf %91, %92 : vector<8x128xf32>
    %94 = arith.mulf %85, %64 : vector<8x128xf32>
    %95 = arith.mulf %79, %87 : vector<8x128xf32>
    %96 = arith.addf %94, %95 : vector<8x128xf32>
    %97 = math.tanh %96 : vector<8x128xf32>
    %98 = arith.mulf %93, %97 : vector<8x128xf32>
    %c2_30 = arith.constant 2 : index
    %c0_31 = arith.constant 0 : index
    %c0_32 = arith.constant 0 : index
    %99 = vector.load %arg4[%c2_30, %c0_31, %c0_32] : memref<8x8x128xf32, #tpu.memory_space<vmem>>, vector<1x8x128xf32>
    %100 = vector.shape_cast %99 : vector<1x8x128xf32> to vector<8x128xf32>
    %101 = vector.shape_cast %98 : vector<8x128xf32> to vector<1x8x128xf32>
    tpu.vector_store %arg4[%c2_30, %c0_31, %c0_32], %101 {strides = array<i32>} : memref<8x8x128xf32, #tpu.memory_space<vmem>>, vector<1x8x128xf32>,
    %c3 = arith.constant 3 : index
    %c0_33 = arith.constant 0 : index
    %c0_34 = arith.constant 0 : index
    %102 = vector.load %arg2[%c3, %c0_33, %c0_34] : memref<8x8x512xf32, #tpu.memory_space<vmem>>, vector<1x8x512xf32>
    %103 = vector.shape_cast %102 : vector<1x8x512xf32> to vector<8x512xf32>
    %cst_35 = arith.constant dense<0.000000e+00> : vector<8x512xf32>
    %104 = tpu.matmul %98, %3, %cst_35 {dimension_numbers = #tpu.dot_dimension_numbers<[1], [0], [0], [1], [0, 0, 1, 1], [], []>} : vector<8x128xf32>, vector<128x512xf32>, vector<8x512xf32> -> vector<8x512xf32>
    %105 = arith.addf %103, %104 : vector<8x512xf32>
    %106 = vector.extract_strided_slice %105 {offsets = [0, 0], sizes = [8, 128], strides = [1, 1]} : vector<8x512xf32> to vector<8x128xf32>
    %107 = arith.negf %106 : vector<8x128xf32>
    %108 = math.exp %107 : vector<8x128xf32>
    %cst_36 = arith.constant 1.000000e+00 : f32
    %109 = vector.broadcast %cst_36 : f32 to vector<8x128xf32>
    %110 = arith.addf %109, %108 : vector<8x128xf32>
    %111 = arith.divf %109, %110 : vector<8x128xf32>
    %112 = vector.extract_strided_slice %105 {offsets = [0, 128], sizes = [8, 128], strides = [1, 1]} : vector<8x512xf32> to vector<8x128xf32>
    %113 = arith.negf %112 : vector<8x128xf32>
    %114 = math.exp %113 : vector<8x128xf32>
    %cst_37 = arith.constant 1.000000e+00 : f32
    %115 = vector.broadcast %cst_37 : f32 to vector<8x128xf32>
    %116 = arith.addf %115, %114 : vector<8x128xf32>
    %117 = arith.divf %115, %116 : vector<8x128xf32>
    %118 = vector.extract_strided_slice %105 {offsets = [0, 256], sizes = [8, 128], strides = [1, 1]} : vector<8x512xf32> to vector<8x128xf32>
    %119 = math.tanh %118 : vector<8x128xf32>
    %120 = vector.extract_strided_slice %105 {offsets = [0, 384], sizes = [8, 128], strides = [1, 1]} : vector<8x512xf32> to vector<8x128xf32>
    %121 = arith.negf %120 : vector<8x128xf32>
    %122 = math.exp %121 : vector<8x128xf32>
    %cst_38 = arith.constant 1.000000e+00 : f32
    %123 = vector.broadcast %cst_38 : f32 to vector<8x128xf32>
    %124 = arith.addf %123, %122 : vector<8x128xf32>
    %125 = arith.divf %123, %124 : vector<8x128xf32>
    %126 = arith.mulf %117, %96 : vector<8x128xf32>
    %127 = arith.mulf %111, %119 : vector<8x128xf32>
    %128 = arith.addf %126, %127 : vector<8x128xf32>
    %129 = math.tanh %128 : vector<8x128xf32>
    %130 = arith.mulf %125, %129 : vector<8x128xf32>
    %c3_39 = arith.constant 3 : index
    %c0_40 = arith.constant 0 : index
    %c0_41 = arith.constant 0 : index
    %131 = vector.load %arg4[%c3_39, %c0_40, %c0_41] : memref<8x8x128xf32, #tpu.memory_space<vmem>>, vector<1x8x128xf32>
    %132 = vector.shape_cast %131 : vector<1x8x128xf32> to vector<8x128xf32>
    %133 = vector.shape_cast %130 : vector<8x128xf32> to vector<1x8x128xf32>
    tpu.vector_store %arg4[%c3_39, %c0_40, %c0_41], %133 {strides = array<i32>} : memref<8x8x128xf32, #tpu.memory_space<vmem>>, vector<1x8x128xf32>,
    %c4 = arith.constant 4 : index
    %c0_42 = arith.constant 0 : index
    %c0_43 = arith.constant 0 : index
    %134 = vector.load %arg2[%c4, %c0_42, %c0_43] : memref<8x8x512xf32, #tpu.memory_space<vmem>>, vector<1x8x512xf32>
    %135 = vector.shape_cast %134 : vector<1x8x512xf32> to vector<8x512xf32>
    %cst_44 = arith.constant dense<0.000000e+00> : vector<8x512xf32>
    %136 = tpu.matmul %130, %3, %cst_44 {dimension_numbers = #tpu.dot_dimension_numbers<[1], [0], [0], [1], [0, 0, 1, 1], [], []>} : vector<8x128xf32>, vector<128x512xf32>, vector<8x512xf32> -> vector<8x512xf32>
    %137 = arith.addf %135, %136 : vector<8x512xf32>
    %138 = vector.extract_strided_slice %137 {offsets = [0, 0], sizes = [8, 128], strides = [1, 1]} : vector<8x512xf32> to vector<8x128xf32>
    %139 = arith.negf %138 : vector<8x128xf32>
    %140 = math.exp %139 : vector<8x128xf32>
    %cst_45 = arith.constant 1.000000e+00 : f32
    %141 = vector.broadcast %cst_45 : f32 to vector<8x128xf32>
    %142 = arith.addf %141, %140 : vector<8x128xf32>
    %143 = arith.divf %141, %142 : vector<8x128xf32>
    %144 = vector.extract_strided_slice %137 {offsets = [0, 128], sizes = [8, 128], strides = [1, 1]} : vector<8x512xf32> to vector<8x128xf32>
    %145 = arith.negf %144 : vector<8x128xf32>
    %146 = math.exp %145 : vector<8x128xf32>
    %cst_46 = arith.constant 1.000000e+00 : f32
    %147 = vector.broadcast %cst_46 : f32 to vector<8x128xf32>
    %148 = arith.addf %147, %146 : vector<8x128xf32>
    %149 = arith.divf %147, %148 : vector<8x128xf32>
    %150 = vector.extract_strided_slice %137 {offsets = [0, 256], sizes = [8, 128], strides = [1, 1]} : vector<8x512xf32> to vector<8x128xf32>
    %151 = math.tanh %150 : vector<8x128xf32>
    %152 = vector.extract_strided_slice %137 {offsets = [0, 384], sizes = [8, 128], strides = [1, 1]} : vector<8x512xf32> to vector<8x128xf32>
    %153 = arith.negf %152 : vector<8x128xf32>
    %154 = math.exp %153 : vector<8x128xf32>
    %cst_47 = arith.constant 1.000000e+00 : f32
    %155 = vector.broadcast %cst_47 : f32 to vector<8x128xf32>
    %156 = arith.addf %155, %154 : vector<8x128xf32>
    %157 = arith.divf %155, %156 : vector<8x128xf32>
    %158 = arith.mulf %149, %128 : vector<8x128xf32>
    %159 = arith.mulf %143, %151 : vector<8x128xf32>
    %160 = arith.addf %158, %159 : vector<8x128xf32>
    %161 = math.tanh %160 : vector<8x128xf32>
    %162 = arith.mulf %157, %161 : vector<8x128xf32>
    %c4_48 = arith.constant 4 : index
    %c0_49 = arith.constant 0 : index
    %c0_50 = arith.constant 0 : index
    %163 = vector.load %arg4[%c4_48, %c0_49, %c0_50] : memref<8x8x128xf32, #tpu.memory_space<vmem>>, vector<1x8x128xf32>
    %164 = vector.shape_cast %163 : vector<1x8x128xf32> to vector<8x128xf32>
    %165 = vector.shape_cast %162 : vector<8x128xf32> to vector<1x8x128xf32>
    tpu.vector_store %arg4[%c4_48, %c0_49, %c0_50], %165 {strides = array<i32>} : memref<8x8x128xf32, #tpu.memory_space<vmem>>, vector<1x8x128xf32>,
    %c5 = arith.constant 5 : index
    %c0_51 = arith.constant 0 : index
    %c0_52 = arith.constant 0 : index
    %166 = vector.load %arg2[%c5, %c0_51, %c0_52] : memref<8x8x512xf32, #tpu.memory_space<vmem>>, vector<1x8x512xf32>
    %167 = vector.shape_cast %166 : vector<1x8x512xf32> to vector<8x512xf32>
    %cst_53 = arith.constant dense<0.000000e+00> : vector<8x512xf32>
    %168 = tpu.matmul %162, %3, %cst_53 {dimension_numbers = #tpu.dot_dimension_numbers<[1], [0], [0], [1], [0, 0, 1, 1], [], []>} : vector<8x128xf32>, vector<128x512xf32>, vector<8x512xf32> -> vector<8x512xf32>
    %169 = arith.addf %167, %168 : vector<8x512xf32>
    %170 = vector.extract_strided_slice %169 {offsets = [0, 0], sizes = [8, 128], strides = [1, 1]} : vector<8x512xf32> to vector<8x128xf32>
    %171 = arith.negf %170 : vector<8x128xf32>
    %172 = math.exp %171 : vector<8x128xf32>
    %cst_54 = arith.constant 1.000000e+00 : f32
    %173 = vector.broadcast %cst_54 : f32 to vector<8x128xf32>
    %174 = arith.addf %173, %172 : vector<8x128xf32>
    %175 = arith.divf %173, %174 : vector<8x128xf32>
    %176 = vector.extract_strided_slice %169 {offsets = [0, 128], sizes = [8, 128], strides = [1, 1]} : vector<8x512xf32> to vector<8x128xf32>
    %177 = arith.negf %176 : vector<8x128xf32>
    %178 = math.exp %177 : vector<8x128xf32>
    %cst_55 = arith.constant 1.000000e+00 : f32
    %179 = vector.broadcast %cst_55 : f32 to vector<8x128xf32>
    %180 = arith.addf %179, %178 : vector<8x128xf32>
    %181 = arith.divf %179, %180 : vector<8x128xf32>
    %182 = vector.extract_strided_slice %169 {offsets = [0, 256], sizes = [8, 128], strides = [1, 1]} : vector<8x512xf32> to vector<8x128xf32>
    %183 = math.tanh %182 : vector<8x128xf32>
    %184 = vector.extract_strided_slice %169 {offsets = [0, 384], sizes = [8, 128], strides = [1, 1]} : vector<8x512xf32> to vector<8x128xf32>
    %185 = arith.negf %184 : vector<8x128xf32>
    %186 = math.exp %185 : vector<8x128xf32>
    %cst_56 = arith.constant 1.000000e+00 : f32
    %187 = vector.broadcast %cst_56 : f32 to vector<8x128xf32>
    %188 = arith.addf %187, %186 : vector<8x128xf32>
    %189 = arith.divf %187, %188 : vector<8x128xf32>
    %190 = arith.mulf %181, %160 : vector<8x128xf32>
    %191 = arith.mulf %175, %183 : vector<8x128xf32>
    %192 = arith.addf %190, %191 : vector<8x128xf32>
    %193 = math.tanh %192 : vector<8x128xf32>
    %194 = arith.mulf %189, %193 : vector<8x128xf32>
    %c5_57 = arith.constant 5 : index
    %c0_58 = arith.constant 0 : index
    %c0_59 = arith.constant 0 : index
    %195 = vector.load %arg4[%c5_57, %c0_58, %c0_59] : memref<8x8x128xf32, #tpu.memory_space<vmem>>, vector<1x8x128xf32>
    %196 = vector.shape_cast %195 : vector<1x8x128xf32> to vector<8x128xf32>
    %197 = vector.shape_cast %194 : vector<8x128xf32> to vector<1x8x128xf32>
    tpu.vector_store %arg4[%c5_57, %c0_58, %c0_59], %197 {strides = array<i32>} : memref<8x8x128xf32, #tpu.memory_space<vmem>>, vector<1x8x128xf32>,
    %c6 = arith.constant 6 : index
    %c0_60 = arith.constant 0 : index
    %c0_61 = arith.constant 0 : index
    %198 = vector.load %arg2[%c6, %c0_60, %c0_61] : memref<8x8x512xf32, #tpu.memory_space<vmem>>, vector<1x8x512xf32>
    %199 = vector.shape_cast %198 : vector<1x8x512xf32> to vector<8x512xf32>
    %cst_62 = arith.constant dense<0.000000e+00> : vector<8x512xf32>
    %200 = tpu.matmul %194, %3, %cst_62 {dimension_numbers = #tpu.dot_dimension_numbers<[1], [0], [0], [1], [0, 0, 1, 1], [], []>} : vector<8x128xf32>, vector<128x512xf32>, vector<8x512xf32> -> vector<8x512xf32>
    %201 = arith.addf %199, %200 : vector<8x512xf32>
    %202 = vector.extract_strided_slice %201 {offsets = [0, 0], sizes = [8, 128], strides = [1, 1]} : vector<8x512xf32> to vector<8x128xf32>
    %203 = arith.negf %202 : vector<8x128xf32>
    %204 = math.exp %203 : vector<8x128xf32>
    %cst_63 = arith.constant 1.000000e+00 : f32
    %205 = vector.broadcast %cst_63 : f32 to vector<8x128xf32>
    %206 = arith.addf %205, %204 : vector<8x128xf32>
    %207 = arith.divf %205, %206 : vector<8x128xf32>
    %208 = vector.extract_strided_slice %201 {offsets = [0, 128], sizes = [8, 128], strides = [1, 1]} : vector<8x512xf32> to vector<8x128xf32>
    %209 = arith.negf %208 : vector<8x128xf32>
    %210 = math.exp %209 : vector<8x128xf32>
    %cst_64 = arith.constant 1.000000e+00 : f32
    %211 = vector.broadcast %cst_64 : f32 to vector<8x128xf32>
    %212 = arith.addf %211, %210 : vector<8x128xf32>
    %213 = arith.divf %211, %212 : vector<8x128xf32>
    %214 = vector.extract_strided_slice %201 {offsets = [0, 256], sizes = [8, 128], strides = [1, 1]} : vector<8x512xf32> to vector<8x128xf32>
    %215 = math.tanh %214 : vector<8x128xf32>
    %216 = vector.extract_strided_slice %201 {offsets = [0, 384], sizes = [8, 128], strides = [1, 1]} : vector<8x512xf32> to vector<8x128xf32>
    %217 = arith.negf %216 : vector<8x128xf32>
    %218 = math.exp %217 : vector<8x128xf32>
    %cst_65 = arith.constant 1.000000e+00 : f32
    %219 = vector.broadcast %cst_65 : f32 to vector<8x128xf32>
    %220 = arith.addf %219, %218 : vector<8x128xf32>
    %221 = arith.divf %219, %220 : vector<8x128xf32>
    %222 = arith.mulf %213, %192 : vector<8x128xf32>
    %223 = arith.mulf %207, %215 : vector<8x128xf32>
    %224 = arith.addf %222, %223 : vector<8x128xf32>
    %225 = math.tanh %224 : vector<8x128xf32>
    %226 = arith.mulf %221, %225 : vector<8x128xf32>
    %c6_66 = arith.constant 6 : index
    %c0_67 = arith.constant 0 : index
    %c0_68 = arith.constant 0 : index
    %227 = vector.load %arg4[%c6_66, %c0_67, %c0_68] : memref<8x8x128xf32, #tpu.memory_space<vmem>>, vector<1x8x128xf32>
    %228 = vector.shape_cast %227 : vector<1x8x128xf32> to vector<8x128xf32>
    %229 = vector.shape_cast %226 : vector<8x128xf32> to vector<1x8x128xf32>
    tpu.vector_store %arg4[%c6_66, %c0_67, %c0_68], %229 {strides = array<i32>} : memref<8x8x128xf32, #tpu.memory_space<vmem>>, vector<1x8x128xf32>,
    %c7 = arith.constant 7 : index
    %c0_69 = arith.constant 0 : index
    %c0_70 = arith.constant 0 : index
    %230 = vector.load %arg2[%c7, %c0_69, %c0_70] : memref<8x8x512xf32, #tpu.memory_space<vmem>>, vector<1x8x512xf32>
    %231 = vector.shape_cast %230 : vector<1x8x512xf32> to vector<8x512xf32>
    %cst_71 = arith.constant dense<0.000000e+00> : vector<8x512xf32>
    %232 = tpu.matmul %226, %3, %cst_71 {dimension_numbers = #tpu.dot_dimension_numbers<[1], [0], [0], [1], [0, 0, 1, 1], [], []>} : vector<8x128xf32>, vector<128x512xf32>, vector<8x512xf32> -> vector<8x512xf32>
    %233 = arith.addf %231, %232 : vector<8x512xf32>
    %234 = vector.extract_strided_slice %233 {offsets = [0, 0], sizes = [8, 128], strides = [1, 1]} : vector<8x512xf32> to vector<8x128xf32>
    %235 = arith.negf %234 : vector<8x128xf32>
    %236 = math.exp %235 : vector<8x128xf32>
    %cst_72 = arith.constant 1.000000e+00 : f32
    %237 = vector.broadcast %cst_72 : f32 to vector<8x128xf32>
    %238 = arith.addf %237, %236 : vector<8x128xf32>
    %239 = arith.divf %237, %238 : vector<8x128xf32>
    %240 = vector.extract_strided_slice %233 {offsets = [0, 128], sizes = [8, 128], strides = [1, 1]} : vector<8x512xf32> to vector<8x128xf32>
    %241 = arith.negf %240 : vector<8x128xf32>
    %242 = math.exp %241 : vector<8x128xf32>
    %cst_73 = arith.constant 1.000000e+00 : f32
    %243 = vector.broadcast %cst_73 : f32 to vector<8x128xf32>
    %244 = arith.addf %243, %242 : vector<8x128xf32>
    %245 = arith.divf %243, %244 : vector<8x128xf32>
    %246 = vector.extract_strided_slice %233 {offsets = [0, 256], sizes = [8, 128], strides = [1, 1]} : vector<8x512xf32> to vector<8x128xf32>
    %247 = math.tanh %246 : vector<8x128xf32>
    %248 = vector.extract_strided_slice %233 {offsets = [0, 384], sizes = [8, 128], strides = [1, 1]} : vector<8x512xf32> to vector<8x128xf32>
    %249 = arith.negf %248 : vector<8x128xf32>
    %250 = math.exp %249 : vector<8x128xf32>
    %cst_74 = arith.constant 1.000000e+00 : f32
    %251 = vector.broadcast %cst_74 : f32 to vector<8x128xf32>
    %252 = arith.addf %251, %250 : vector<8x128xf32>
    %253 = arith.divf %251, %252 : vector<8x128xf32>
    %254 = arith.mulf %245, %224 : vector<8x128xf32>
    %255 = arith.mulf %239, %247 : vector<8x128xf32>
    %256 = arith.addf %254, %255 : vector<8x128xf32>
    %257 = math.tanh %256 : vector<8x128xf32>
    %258 = arith.mulf %253, %257 : vector<8x128xf32>
    %c7_75 = arith.constant 7 : index
    %c0_76 = arith.constant 0 : index
    %c0_77 = arith.constant 0 : index
    %259 = vector.load %arg4[%c7_75, %c0_76, %c0_77] : memref<8x8x128xf32, #tpu.memory_space<vmem>>, vector<1x8x128xf32>
    %260 = vector.shape_cast %259 : vector<1x8x128xf32> to vector<8x128xf32>
    %261 = vector.shape_cast %258 : vector<8x128xf32> to vector<1x8x128xf32>
    tpu.vector_store %arg4[%c7_75, %c0_76, %c0_77], %261 {strides = array<i32>} : memref<8x8x128xf32, #tpu.memory_space<vmem>>, vector<1x8x128xf32>,
    %c0_78 = arith.constant 0 : index
    %c0_79 = arith.constant 0 : index
    %262 = vector.load %arg7[%c0_78, %c0_79] : memref<8x128xf32, #tpu.memory_space<vmem>>, vector<8x128xf32>
    tpu.vector_store %arg7[%c0_78, %c0_79], %258 {strides = array<i32>} : memref<8x128xf32, #tpu.memory_space<vmem>>, vector<8x128xf32>,
    %c0_80 = arith.constant 0 : index
    %c0_81 = arith.constant 0 : index
    %263 = vector.load %arg8[%c0_80, %c0_81] : memref<8x128xf32, #tpu.memory_space<vmem>>, vector<8x128xf32>
    tpu.vector_store %arg8[%c0_80, %c0_81], %256 {strides = array<i32>} : memref<8x128xf32, #tpu.memory_space<vmem>>, vector<8x128xf32>,
    %c0_i32_82 = arith.constant 0 : i32
    %264 = arith.cmpi eq, %arg1, %c0_i32_82 : i32
    %265 = arith.extui %264 : i1 to i32
    %c0_i32_83 = arith.constant 0 : i32
    %266 = arith.cmpi ne, %265, %c0_i32_83 : i32
    scf.if %266 {
      %c0_84 = arith.constant 0 : index
      %c0_85 = arith.constant 0 : index
      %267 = vector.load %arg5[%c0_84, %c0_85] : memref<8x128xf32, #tpu.memory_space<vmem>>, vector<8x128xf32>
      tpu.vector_store %arg5[%c0_84, %c0_85], %258 {strides = array<i32>} : memref<8x128xf32, #tpu.memory_space<vmem>>, vector<8x128xf32>,
      %c0_86 = arith.constant 0 : index
      %c0_87 = arith.constant 0 : index
      %268 = vector.load %arg6[%c0_86, %c0_87] : memref<8x128xf32, #tpu.memory_space<vmem>>, vector<8x128xf32>
      tpu.vector_store %arg6[%c0_86, %c0_87], %256 {strides = array<i32>} : memref<8x128xf32, #tpu.memory_space<vmem>>, vector<8x128xf32>,
    } else {
    }
    return
  }
  func.func @transform_0(%arg0: i32, %arg1: i32) -> (i32, i32, i32) {
    %c0_i32 = arith.constant 0 : i32
    %c0_i32_0 = arith.constant 0 : i32
    return %arg1, %arg0, %c0_i32 : i32, i32, i32
  }
  func.func @transform_1(%arg0: i32, %arg1: i32) -> (i32, i32) {
    %c0_i32 = arith.constant 0 : i32
    %c0_i32_0 = arith.constant 0 : i32
    %c0_i32_1 = arith.constant 0 : i32
    return %c0_i32, %c0_i32_0 : i32, i32
  }
  func.func @transform_2(%arg0: i32, %arg1: i32) -> (i32, i32, i32) {
    %c0_i32 = arith.constant 0 : i32
    %c0_i32_0 = arith.constant 0 : i32
    return %arg1, %arg0, %c0_i32 : i32, i32, i32
  }
  func.func @transform_3(%arg0: i32, %arg1: i32) -> (i32, i32) {
    %c0_i32 = arith.constant 0 : i32
    %c0_i32_0 = arith.constant 0 : i32
    return %arg0, %c0_i32 : i32, i32
  }
  func.func @transform_4(%arg0: i32, %arg1: i32) -> (i32, i32) {
    %c0_i32 = arith.constant 0 : i32
    %c0_i32_0 = arith.constant 0 : i32
    return %arg0, %c0_i32 : i32, i32
  }
}

module attributes {stable_mosaic.version = 11 : i64} {
  func.func @lstm_recurrent_kernel(%arg0: i32, %arg1: i32, %arg2: memref<8x8x512xf32, #tpu.memory_space<vmem>>, %arg3: memref<128x512xf32, #tpu.memory_space<vmem>>, %arg4: memref<8x8x128xf32, #tpu.memory_space<vmem>>, %arg5: memref<8x128xf32, #tpu.memory_space<vmem>>, %arg6: memref<8x128xf32, #tpu.memory_space<vmem>>, %arg7: memref<8x128xf32, #tpu.memory_space<vmem>>, %arg8: memref<8x128xf32, #tpu.memory_space<vmem>>) attributes {dimension_semantics = [#tpu.dimension_semantics<parallel>, #tpu.dimension_semantics<arbitrary>], iteration_bounds = array<i64: 1, 1>, scalar_prefetch = 0 : i64, scratch_operands = 2 : i64, tpu.core_type = #tpu.core_type<tc>, window_params = [{transform_indices = @transform_0, window_bounds = array<i64: 8, 8, 512>}, {pipeline_mode = #tpu.pipeline_mode<synchronous>, transform_indices = @transform_1, window_bounds = array<i64: 128, 512>}, {transform_indices = @transform_2, window_bounds = array<i64: 8, 8, 128>}, {transform_indices = @transform_3, window_bounds = array<i64: 8, 128>}, {transform_indices = @transform_4, window_bounds = array<i64: 8, 128>}]} {
    %c0_i32 = arith.constant 0 : i32
    %0 = arith.cmpi eq, %arg1, %c0_i32 : i32
    %1 = arith.extui %0 : i1 to i32
    %c0_i32_0 = arith.constant 0 : i32
    %2 = arith.cmpi ne, %1, %c0_i32_0 : i32
    scf.if %2 {
      %cst_84 = arith.constant 0.000000e+00 : f32
      %267 = vector.broadcast %cst_84 : f32 to vector<8x128xf32>
      %c0_85 = arith.constant 0 : index
      %c0_86 = arith.constant 0 : index
      %268 = vector.load %arg7[%c0_85, %c0_86] : memref<8x128xf32, #tpu.memory_space<vmem>>, vector<8x128xf32>
      tpu.vector_store %arg7[%c0_85, %c0_86], %267 {strides = array<i32>} : memref<8x128xf32, #tpu.memory_space<vmem>>, vector<8x128xf32>,
      %cst_87 = arith.constant 0.000000e+00 : f32
      %269 = vector.broadcast %cst_87 : f32 to vector<8x128xf32>
      %c0_88 = arith.constant 0 : index
      %c0_89 = arith.constant 0 : index
      %270 = vector.load %arg8[%c0_88, %c0_89] : memref<8x128xf32, #tpu.memory_space<vmem>>, vector<8x128xf32>
      tpu.vector_store %arg8[%c0_88, %c0_89], %269 {strides = array<i32>} : memref<8x128xf32, #tpu.memory_space<vmem>>, vector<8x128xf32>,
    } else {
    }
    %c0 = arith.constant 0 : index
    %c0_1 = arith.constant 0 : index
    %3 = vector.load %arg3[%c0, %c0_1] : memref<128x512xf32, #tpu.memory_space<vmem>>, vector<128x512xf32>
    %c0_2 = arith.constant 0 : index
    %c0_3 = arith.constant 0 : index
    %4 = vector.load %arg7[%c0_2, %c0_3] : memref<8x128xf32, #tpu.memory_space<vmem>>, vector<8x128xf32>
    %c0_4 = arith.constant 0 : index
    %c0_5 = arith.constant 0 : index
    %5 = vector.load %arg8[%c0_4, %c0_5] : memref<8x128xf32, #tpu.memory_space<vmem>>, vector<8x128xf32>
    %c0_6 = arith.constant 0 : index
    %c0_7 = arith.constant 0 : index
    %c0_8 = arith.constant 0 : index
    %6 = vector.load %arg2[%c0_6, %c0_7, %c0_8] : memref<8x8x512xf32, #tpu.memory_space<vmem>>, vector<1x8x512xf32>
    %7 = vector.shape_cast %6 : vector<1x8x512xf32> to vector<8x512xf32>
    %cst = arith.constant dense<0.000000e+00> : vector<8x512xf32>
    %8 = tpu.matmul %4, %3, %cst {dimension_numbers = #tpu.dot_dimension_numbers<[1], [0], [0], [1], [0, 0, 1, 1], [], []>} : vector<8x128xf32>, vector<128x512xf32>, vector<8x512xf32> -> vector<8x512xf32>
    %9 = arith.addf %7, %8 : vector<8x512xf32>
    %10 = vector.extract_strided_slice %9 {offsets = [0, 0], sizes = [8, 128], strides = [1, 1]} : vector<8x512xf32> to vector<8x128xf32>
    %11 = arith.negf %10 : vector<8x128xf32>
    %12 = math.exp %11 : vector<8x128xf32>
    %cst_9 = arith.constant 1.000000e+00 : f32
    %13 = vector.broadcast %cst_9 : f32 to vector<8x128xf32>
    %14 = arith.addf %13, %12 : vector<8x128xf32>
    %15 = arith.divf %13, %14 : vector<8x128xf32>
    %16 = vector.extract_strided_slice %9 {offsets = [0, 128], sizes = [8, 128], strides = [1, 1]} : vector<8x512xf32> to vector<8x128xf32>
    %17 = arith.negf %16 : vector<8x128xf32>
    %18 = math.exp %17 : vector<8x128xf32>
    %cst_10 = arith.constant 1.000000e+00 : f32
    %19 = vector.broadcast %cst_10 : f32 to vector<8x128xf32>
    %20 = arith.addf %19, %18 : vector<8x128xf32>
    %21 = arith.divf %19, %20 : vector<8x128xf32>
    %22 = vector.extract_strided_slice %9 {offsets = [0, 256], sizes = [8, 128], strides = [1, 1]} : vector<8x512xf32> to vector<8x128xf32>
    %23 = math.tanh %22 : vector<8x128xf32>
    %24 = vector.extract_strided_slice %9 {offsets = [0, 384], sizes = [8, 128], strides = [1, 1]} : vector<8x512xf32> to vector<8x128xf32>
    %25 = arith.negf %24 : vector<8x128xf32>
    %26 = math.exp %25 : vector<8x128xf32>
    %cst_11 = arith.constant 1.000000e+00 : f32
    %27 = vector.broadcast %cst_11 : f32 to vector<8x128xf32>
    %28 = arith.addf %27, %26 : vector<8x128xf32>
    %29 = arith.divf %27, %28 : vector<8x128xf32>
    %30 = arith.mulf %21, %5 : vector<8x128xf32>
    %31 = arith.mulf %15, %23 : vector<8x128xf32>
    %32 = arith.addf %30, %31 : vector<8x128xf32>
    %33 = math.tanh %32 : vector<8x128xf32>
    %34 = arith.mulf %29, %33 : vector<8x128xf32>
    %c0_12 = arith.constant 0 : index
    %c0_13 = arith.constant 0 : index
    %c0_14 = arith.constant 0 : index
    %35 = vector.load %arg4[%c0_12, %c0_13, %c0_14] : memref<8x8x128xf32, #tpu.memory_space<vmem>>, vector<1x8x128xf32>
    %36 = vector.shape_cast %35 : vector<1x8x128xf32> to vector<8x128xf32>
    %37 = vector.shape_cast %34 : vector<8x128xf32> to vector<1x8x128xf32>
    tpu.vector_store %arg4[%c0_12, %c0_13, %c0_14], %37 {strides = array<i32>} : memref<8x8x128xf32, #tpu.memory_space<vmem>>, vector<1x8x128xf32>,
    %c1 = arith.constant 1 : index
    %c0_15 = arith.constant 0 : index
    %c0_16 = arith.constant 0 : index
    %38 = vector.load %arg2[%c1, %c0_15, %c0_16] : memref<8x8x512xf32, #tpu.memory_space<vmem>>, vector<1x8x512xf32>
    %39 = vector.shape_cast %38 : vector<1x8x512xf32> to vector<8x512xf32>
    %cst_17 = arith.constant dense<0.000000e+00> : vector<8x512xf32>
    %40 = tpu.matmul %34, %3, %cst_17 {dimension_numbers = #tpu.dot_dimension_numbers<[1], [0], [0], [1], [0, 0, 1, 1], [], []>} : vector<8x128xf32>, vector<128x512xf32>, vector<8x512xf32> -> vector<8x512xf32>
    %41 = arith.addf %39, %40 : vector<8x512xf32>
    %42 = vector.extract_strided_slice %41 {offsets = [0, 0], sizes = [8, 128], strides = [1, 1]} : vector<8x512xf32> to vector<8x128xf32>
    %43 = arith.negf %42 : vector<8x128xf32>
    %44 = math.exp %43 : vector<8x128xf32>
    %cst_18 = arith.constant 1.000000e+00 : f32
    %45 = vector.broadcast %cst_18 : f32 to vector<8x128xf32>
    %46 = arith.addf %45, %44 : vector<8x128xf32>
    %47 = arith.divf %45, %46 : vector<8x128xf32>
    %48 = vector.extract_strided_slice %41 {offsets = [0, 128], sizes = [8, 128], strides = [1, 1]} : vector<8x512xf32> to vector<8x128xf32>
    %49 = arith.negf %48 : vector<8x128xf32>
    %50 = math.exp %49 : vector<8x128xf32>
    %cst_19 = arith.constant 1.000000e+00 : f32
    %51 = vector.broadcast %cst_19 : f32 to vector<8x128xf32>
    %52 = arith.addf %51, %50 : vector<8x128xf32>
    %53 = arith.divf %51, %52 : vector<8x128xf32>
    %54 = vector.extract_strided_slice %41 {offsets = [0, 256], sizes = [8, 128], strides = [1, 1]} : vector<8x512xf32> to vector<8x128xf32>
    %55 = math.tanh %54 : vector<8x128xf32>
    %56 = vector.extract_strided_slice %41 {offsets = [0, 384], sizes = [8, 128], strides = [1, 1]} : vector<8x512xf32> to vector<8x128xf32>
    %57 = arith.negf %56 : vector<8x128xf32>
    %58 = math.exp %57 : vector<8x128xf32>
    %cst_20 = arith.constant 1.000000e+00 : f32
    %59 = vector.broadcast %cst_20 : f32 to vector<8x128xf32>
    %60 = arith.addf %59, %58 : vector<8x128xf32>
    %61 = arith.divf %59, %60 : vector<8x128xf32>
    %62 = arith.mulf %53, %32 : vector<8x128xf32>
    %63 = arith.mulf %47, %55 : vector<8x128xf32>
    %64 = arith.addf %62, %63 : vector<8x128xf32>
    %65 = math.tanh %64 : vector<8x128xf32>
    %66 = arith.mulf %61, %65 : vector<8x128xf32>
    %c1_21 = arith.constant 1 : index
    %c0_22 = arith.constant 0 : index
    %c0_23 = arith.constant 0 : index
    %67 = vector.load %arg4[%c1_21, %c0_22, %c0_23] : memref<8x8x128xf32, #tpu.memory_space<vmem>>, vector<1x8x128xf32>
    %68 = vector.shape_cast %67 : vector<1x8x128xf32> to vector<8x128xf32>
    %69 = vector.shape_cast %66 : vector<8x128xf32> to vector<1x8x128xf32>
    tpu.vector_store %arg4[%c1_21, %c0_22, %c0_23], %69 {strides = array<i32>} : memref<8x8x128xf32, #tpu.memory_space<vmem>>, vector<1x8x128xf32>,
    %c2 = arith.constant 2 : index
    %c0_24 = arith.constant 0 : index
    %c0_25 = arith.constant 0 : index
    %70 = vector.load %arg2[%c2, %c0_24, %c0_25] : memref<8x8x512xf32, #tpu.memory_space<vmem>>, vector<1x8x512xf32>
    %71 = vector.shape_cast %70 : vector<1x8x512xf32> to vector<8x512xf32>
    %cst_26 = arith.constant dense<0.000000e+00> : vector<8x512xf32>
    %72 = tpu.matmul %66, %3, %cst_26 {dimension_numbers = #tpu.dot_dimension_numbers<[1], [0], [0], [1], [0, 0, 1, 1], [], []>} : vector<8x128xf32>, vector<128x512xf32>, vector<8x512xf32> -> vector<8x512xf32>
    %73 = arith.addf %71, %72 : vector<8x512xf32>
    %74 = vector.extract_strided_slice %73 {offsets = [0, 0], sizes = [8, 128], strides = [1, 1]} : vector<8x512xf32> to vector<8x128xf32>
    %75 = arith.negf %74 : vector<8x128xf32>
    %76 = math.exp %75 : vector<8x128xf32>
    %cst_27 = arith.constant 1.000000e+00 : f32
    %77 = vector.broadcast %cst_27 : f32 to vector<8x128xf32>
    %78 = arith.addf %77, %76 : vector<8x128xf32>
    %79 = arith.divf %77, %78 : vector<8x128xf32>
    %80 = vector.extract_strided_slice %73 {offsets = [0, 128], sizes = [8, 128], strides = [1, 1]} : vector<8x512xf32> to vector<8x128xf32>
    %81 = arith.negf %80 : vector<8x128xf32>
    %82 = math.exp %81 : vector<8x128xf32>
    %cst_28 = arith.constant 1.000000e+00 : f32
    %83 = vector.broadcast %cst_28 : f32 to vector<8x128xf32>
    %84 = arith.addf %83, %82 : vector<8x128xf32>
    %85 = arith.divf %83, %84 : vector<8x128xf32>
    %86 = vector.extract_strided_slice %73 {offsets = [0, 256], sizes = [8, 128], strides = [1, 1]} : vector<8x512xf32> to vector<8x128xf32>
    %87 = math.tanh %86 : vector<8x128xf32>
    %88 = vector.extract_strided_slice %73 {offsets = [0, 384], sizes = [8, 128], strides = [1, 1]} : vector<8x512xf32> to vector<8x128xf32>
    %89 = arith.negf %88 : vector<8x128xf32>
    %90 = math.exp %89 : vector<8x128xf32>
    %cst_29 = arith.constant 1.000000e+00 : f32
    %91 = vector.broadcast %cst_29 : f32 to vector<8x128xf32>
    %92 = arith.addf %91, %90 : vector<8x128xf32>
    %93 = arith.divf %91, %92 : vector<8x128xf32>
    %94 = arith.mulf %85, %64 : vector<8x128xf32>
    %95 = arith.mulf %79, %87 : vector<8x128xf32>
    %96 = arith.addf %94, %95 : vector<8x128xf32>
    %97 = math.tanh %96 : vector<8x128xf32>
    %98 = arith.mulf %93, %97 : vector<8x128xf32>
    %c2_30 = arith.constant 2 : index
    %c0_31 = arith.constant 0 : index
    %c0_32 = arith.constant 0 : index
    %99 = vector.load %arg4[%c2_30, %c0_31, %c0_32] : memref<8x8x128xf32, #tpu.memory_space<vmem>>, vector<1x8x128xf32>
    %100 = vector.shape_cast %99 : vector<1x8x128xf32> to vector<8x128xf32>
    %101 = vector.shape_cast %98 : vector<8x128xf32> to vector<1x8x128xf32>
    tpu.vector_store %arg4[%c2_30, %c0_31, %c0_32], %101 {strides = array<i32>} : memref<8x8x128xf32, #tpu.memory_space<vmem>>, vector<1x8x128xf32>,
    %c3 = arith.constant 3 : index
    %c0_33 = arith.constant 0 : index
    %c0_34 = arith.constant 0 : index
    %102 = vector.load %arg2[%c3, %c0_33, %c0_34] : memref<8x8x512xf32, #tpu.memory_space<vmem>>, vector<1x8x512xf32>
    %103 = vector.shape_cast %102 : vector<1x8x512xf32> to vector<8x512xf32>
    %cst_35 = arith.constant dense<0.000000e+00> : vector<8x512xf32>
    %104 = tpu.matmul %98, %3, %cst_35 {dimension_numbers = #tpu.dot_dimension_numbers<[1], [0], [0], [1], [0, 0, 1, 1], [], []>} : vector<8x128xf32>, vector<128x512xf32>, vector<8x512xf32> -> vector<8x512xf32>
    %105 = arith.addf %103, %104 : vector<8x512xf32>
    %106 = vector.extract_strided_slice %105 {offsets = [0, 0], sizes = [8, 128], strides = [1, 1]} : vector<8x512xf32> to vector<8x128xf32>
    %107 = arith.negf %106 : vector<8x128xf32>
    %108 = math.exp %107 : vector<8x128xf32>
    %cst_36 = arith.constant 1.000000e+00 : f32
    %109 = vector.broadcast %cst_36 : f32 to vector<8x128xf32>
    %110 = arith.addf %109, %108 : vector<8x128xf32>
    %111 = arith.divf %109, %110 : vector<8x128xf32>
    %112 = vector.extract_strided_slice %105 {offsets = [0, 128], sizes = [8, 128], strides = [1, 1]} : vector<8x512xf32> to vector<8x128xf32>
    %113 = arith.negf %112 : vector<8x128xf32>
    %114 = math.exp %113 : vector<8x128xf32>
    %cst_37 = arith.constant 1.000000e+00 : f32
    %115 = vector.broadcast %cst_37 : f32 to vector<8x128xf32>
    %116 = arith.addf %115, %114 : vector<8x128xf32>
    %117 = arith.divf %115, %116 : vector<8x128xf32>
    %118 = vector.extract_strided_slice %105 {offsets = [0, 256], sizes = [8, 128], strides = [1, 1]} : vector<8x512xf32> to vector<8x128xf32>
    %119 = math.tanh %118 : vector<8x128xf32>
    %120 = vector.extract_strided_slice %105 {offsets = [0, 384], sizes = [8, 128], strides = [1, 1]} : vector<8x512xf32> to vector<8x128xf32>
    %121 = arith.negf %120 : vector<8x128xf32>
    %122 = math.exp %121 : vector<8x128xf32>
    %cst_38 = arith.constant 1.000000e+00 : f32
    %123 = vector.broadcast %cst_38 : f32 to vector<8x128xf32>
    %124 = arith.addf %123, %122 : vector<8x128xf32>
    %125 = arith.divf %123, %124 : vector<8x128xf32>
    %126 = arith.mulf %117, %96 : vector<8x128xf32>
    %127 = arith.mulf %111, %119 : vector<8x128xf32>
    %128 = arith.addf %126, %127 : vector<8x128xf32>
    %129 = math.tanh %128 : vector<8x128xf32>
    %130 = arith.mulf %125, %129 : vector<8x128xf32>
    %c3_39 = arith.constant 3 : index
    %c0_40 = arith.constant 0 : index
    %c0_41 = arith.constant 0 : index
    %131 = vector.load %arg4[%c3_39, %c0_40, %c0_41] : memref<8x8x128xf32, #tpu.memory_space<vmem>>, vector<1x8x128xf32>
    %132 = vector.shape_cast %131 : vector<1x8x128xf32> to vector<8x128xf32>
    %133 = vector.shape_cast %130 : vector<8x128xf32> to vector<1x8x128xf32>
    tpu.vector_store %arg4[%c3_39, %c0_40, %c0_41], %133 {strides = array<i32>} : memref<8x8x128xf32, #tpu.memory_space<vmem>>, vector<1x8x128xf32>,
    %c4 = arith.constant 4 : index
    %c0_42 = arith.constant 0 : index
    %c0_43 = arith.constant 0 : index
    %134 = vector.load %arg2[%c4, %c0_42, %c0_43] : memref<8x8x512xf32, #tpu.memory_space<vmem>>, vector<1x8x512xf32>
    %135 = vector.shape_cast %134 : vector<1x8x512xf32> to vector<8x512xf32>
    %cst_44 = arith.constant dense<0.000000e+00> : vector<8x512xf32>
    %136 = tpu.matmul %130, %3, %cst_44 {dimension_numbers = #tpu.dot_dimension_numbers<[1], [0], [0], [1], [0, 0, 1, 1], [], []>} : vector<8x128xf32>, vector<128x512xf32>, vector<8x512xf32> -> vector<8x512xf32>
    %137 = arith.addf %135, %136 : vector<8x512xf32>
    %138 = vector.extract_strided_slice %137 {offsets = [0, 0], sizes = [8, 128], strides = [1, 1]} : vector<8x512xf32> to vector<8x128xf32>
    %139 = arith.negf %138 : vector<8x128xf32>
    %140 = math.exp %139 : vector<8x128xf32>
    %cst_45 = arith.constant 1.000000e+00 : f32
    %141 = vector.broadcast %cst_45 : f32 to vector<8x128xf32>
    %142 = arith.addf %141, %140 : vector<8x128xf32>
    %143 = arith.divf %141, %142 : vector<8x128xf32>
    %144 = vector.extract_strided_slice %137 {offsets = [0, 128], sizes = [8, 128], strides = [1, 1]} : vector<8x512xf32> to vector<8x128xf32>
    %145 = arith.negf %144 : vector<8x128xf32>
    %146 = math.exp %145 : vector<8x128xf32>
    %cst_46 = arith.constant 1.000000e+00 : f32
    %147 = vector.broadcast %cst_46 : f32 to vector<8x128xf32>
    %148 = arith.addf %147, %146 : vector<8x128xf32>
    %149 = arith.divf %147, %148 : vector<8x128xf32>
    %150 = vector.extract_strided_slice %137 {offsets = [0, 256], sizes = [8, 128], strides = [1, 1]} : vector<8x512xf32> to vector<8x128xf32>
    %151 = math.tanh %150 : vector<8x128xf32>
    %152 = vector.extract_strided_slice %137 {offsets = [0, 384], sizes = [8, 128], strides = [1, 1]} : vector<8x512xf32> to vector<8x128xf32>
    %153 = arith.negf %152 : vector<8x128xf32>
    %154 = math.exp %153 : vector<8x128xf32>
    %cst_47 = arith.constant 1.000000e+00 : f32
    %155 = vector.broadcast %cst_47 : f32 to vector<8x128xf32>
    %156 = arith.addf %155, %154 : vector<8x128xf32>
    %157 = arith.divf %155, %156 : vector<8x128xf32>
    %158 = arith.mulf %149, %128 : vector<8x128xf32>
    %159 = arith.mulf %143, %151 : vector<8x128xf32>
    %160 = arith.addf %158, %159 : vector<8x128xf32>
    %161 = math.tanh %160 : vector<8x128xf32>
    %162 = arith.mulf %157, %161 : vector<8x128xf32>
    %c4_48 = arith.constant 4 : index
    %c0_49 = arith.constant 0 : index
    %c0_50 = arith.constant 0 : index
    %163 = vector.load %arg4[%c4_48, %c0_49, %c0_50] : memref<8x8x128xf32, #tpu.memory_space<vmem>>, vector<1x8x128xf32>
    %164 = vector.shape_cast %163 : vector<1x8x128xf32> to vector<8x128xf32>
    %165 = vector.shape_cast %162 : vector<8x128xf32> to vector<1x8x128xf32>
    tpu.vector_store %arg4[%c4_48, %c0_49, %c0_50], %165 {strides = array<i32>} : memref<8x8x128xf32, #tpu.memory_space<vmem>>, vector<1x8x128xf32>,
    %c5 = arith.constant 5 : index
    %c0_51 = arith.constant 0 : index
    %c0_52 = arith.constant 0 : index
    %166 = vector.load %arg2[%c5, %c0_51, %c0_52] : memref<8x8x512xf32, #tpu.memory_space<vmem>>, vector<1x8x512xf32>
    %167 = vector.shape_cast %166 : vector<1x8x512xf32> to vector<8x512xf32>
    %cst_53 = arith.constant dense<0.000000e+00> : vector<8x512xf32>
    %168 = tpu.matmul %162, %3, %cst_53 {dimension_numbers = #tpu.dot_dimension_numbers<[1], [0], [0], [1], [0, 0, 1, 1], [], []>} : vector<8x128xf32>, vector<128x512xf32>, vector<8x512xf32> -> vector<8x512xf32>
    %169 = arith.addf %167, %168 : vector<8x512xf32>
    %170 = vector.extract_strided_slice %169 {offsets = [0, 0], sizes = [8, 128], strides = [1, 1]} : vector<8x512xf32> to vector<8x128xf32>
    %171 = arith.negf %170 : vector<8x128xf32>
    %172 = math.exp %171 : vector<8x128xf32>
    %cst_54 = arith.constant 1.000000e+00 : f32
    %173 = vector.broadcast %cst_54 : f32 to vector<8x128xf32>
    %174 = arith.addf %173, %172 : vector<8x128xf32>
    %175 = arith.divf %173, %174 : vector<8x128xf32>
    %176 = vector.extract_strided_slice %169 {offsets = [0, 128], sizes = [8, 128], strides = [1, 1]} : vector<8x512xf32> to vector<8x128xf32>
    %177 = arith.negf %176 : vector<8x128xf32>
    %178 = math.exp %177 : vector<8x128xf32>
    %cst_55 = arith.constant 1.000000e+00 : f32
    %179 = vector.broadcast %cst_55 : f32 to vector<8x128xf32>
    %180 = arith.addf %179, %178 : vector<8x128xf32>
    %181 = arith.divf %179, %180 : vector<8x128xf32>
    %182 = vector.extract_strided_slice %169 {offsets = [0, 256], sizes = [8, 128], strides = [1, 1]} : vector<8x512xf32> to vector<8x128xf32>
    %183 = math.tanh %182 : vector<8x128xf32>
    %184 = vector.extract_strided_slice %169 {offsets = [0, 384], sizes = [8, 128], strides = [1, 1]} : vector<8x512xf32> to vector<8x128xf32>
    %185 = arith.negf %184 : vector<8x128xf32>
    %186 = math.exp %185 : vector<8x128xf32>
    %cst_56 = arith.constant 1.000000e+00 : f32
    %187 = vector.broadcast %cst_56 : f32 to vector<8x128xf32>
    %188 = arith.addf %187, %186 : vector<8x128xf32>
    %189 = arith.divf %187, %188 : vector<8x128xf32>
    %190 = arith.mulf %181, %160 : vector<8x128xf32>
    %191 = arith.mulf %175, %183 : vector<8x128xf32>
    %192 = arith.addf %190, %191 : vector<8x128xf32>
    %193 = math.tanh %192 : vector<8x128xf32>
    %194 = arith.mulf %189, %193 : vector<8x128xf32>
    %c5_57 = arith.constant 5 : index
    %c0_58 = arith.constant 0 : index
    %c0_59 = arith.constant 0 : index
    %195 = vector.load %arg4[%c5_57, %c0_58, %c0_59] : memref<8x8x128xf32, #tpu.memory_space<vmem>>, vector<1x8x128xf32>
    %196 = vector.shape_cast %195 : vector<1x8x128xf32> to vector<8x128xf32>
    %197 = vector.shape_cast %194 : vector<8x128xf32> to vector<1x8x128xf32>
    tpu.vector_store %arg4[%c5_57, %c0_58, %c0_59], %197 {strides = array<i32>} : memref<8x8x128xf32, #tpu.memory_space<vmem>>, vector<1x8x128xf32>,
    %c6 = arith.constant 6 : index
    %c0_60 = arith.constant 0 : index
    %c0_61 = arith.constant 0 : index
    %198 = vector.load %arg2[%c6, %c0_60, %c0_61] : memref<8x8x512xf32, #tpu.memory_space<vmem>>, vector<1x8x512xf32>
    %199 = vector.shape_cast %198 : vector<1x8x512xf32> to vector<8x512xf32>
    %cst_62 = arith.constant dense<0.000000e+00> : vector<8x512xf32>
    %200 = tpu.matmul %194, %3, %cst_62 {dimension_numbers = #tpu.dot_dimension_numbers<[1], [0], [0], [1], [0, 0, 1, 1], [], []>} : vector<8x128xf32>, vector<128x512xf32>, vector<8x512xf32> -> vector<8x512xf32>
    %201 = arith.addf %199, %200 : vector<8x512xf32>
    %202 = vector.extract_strided_slice %201 {offsets = [0, 0], sizes = [8, 128], strides = [1, 1]} : vector<8x512xf32> to vector<8x128xf32>
    %203 = arith.negf %202 : vector<8x128xf32>
    %204 = math.exp %203 : vector<8x128xf32>
    %cst_63 = arith.constant 1.000000e+00 : f32
    %205 = vector.broadcast %cst_63 : f32 to vector<8x128xf32>
    %206 = arith.addf %205, %204 : vector<8x128xf32>
    %207 = arith.divf %205, %206 : vector<8x128xf32>
    %208 = vector.extract_strided_slice %201 {offsets = [0, 128], sizes = [8, 128], strides = [1, 1]} : vector<8x512xf32> to vector<8x128xf32>
    %209 = arith.negf %208 : vector<8x128xf32>
    %210 = math.exp %209 : vector<8x128xf32>
    %cst_64 = arith.constant 1.000000e+00 : f32
    %211 = vector.broadcast %cst_64 : f32 to vector<8x128xf32>
    %212 = arith.addf %211, %210 : vector<8x128xf32>
    %213 = arith.divf %211, %212 : vector<8x128xf32>
    %214 = vector.extract_strided_slice %201 {offsets = [0, 256], sizes = [8, 128], strides = [1, 1]} : vector<8x512xf32> to vector<8x128xf32>
    %215 = math.tanh %214 : vector<8x128xf32>
    %216 = vector.extract_strided_slice %201 {offsets = [0, 384], sizes = [8, 128], strides = [1, 1]} : vector<8x512xf32> to vector<8x128xf32>
    %217 = arith.negf %216 : vector<8x128xf32>
    %218 = math.exp %217 : vector<8x128xf32>
    %cst_65 = arith.constant 1.000000e+00 : f32
    %219 = vector.broadcast %cst_65 : f32 to vector<8x128xf32>
    %220 = arith.addf %219, %218 : vector<8x128xf32>
    %221 = arith.divf %219, %220 : vector<8x128xf32>
    %222 = arith.mulf %213, %192 : vector<8x128xf32>
    %223 = arith.mulf %207, %215 : vector<8x128xf32>
    %224 = arith.addf %222, %223 : vector<8x128xf32>
    %225 = math.tanh %224 : vector<8x128xf32>
    %226 = arith.mulf %221, %225 : vector<8x128xf32>
    %c6_66 = arith.constant 6 : index
    %c0_67 = arith.constant 0 : index
    %c0_68 = arith.constant 0 : index
    %227 = vector.load %arg4[%c6_66, %c0_67, %c0_68] : memref<8x8x128xf32, #tpu.memory_space<vmem>>, vector<1x8x128xf32>
    %228 = vector.shape_cast %227 : vector<1x8x128xf32> to vector<8x128xf32>
    %229 = vector.shape_cast %226 : vector<8x128xf32> to vector<1x8x128xf32>
    tpu.vector_store %arg4[%c6_66, %c0_67, %c0_68], %229 {strides = array<i32>} : memref<8x8x128xf32, #tpu.memory_space<vmem>>, vector<1x8x128xf32>,
    %c7 = arith.constant 7 : index
    %c0_69 = arith.constant 0 : index
    %c0_70 = arith.constant 0 : index
    %230 = vector.load %arg2[%c7, %c0_69, %c0_70] : memref<8x8x512xf32, #tpu.memory_space<vmem>>, vector<1x8x512xf32>
    %231 = vector.shape_cast %230 : vector<1x8x512xf32> to vector<8x512xf32>
    %cst_71 = arith.constant dense<0.000000e+00> : vector<8x512xf32>
    %232 = tpu.matmul %226, %3, %cst_71 {dimension_numbers = #tpu.dot_dimension_numbers<[1], [0], [0], [1], [0, 0, 1, 1], [], []>} : vector<8x128xf32>, vector<128x512xf32>, vector<8x512xf32> -> vector<8x512xf32>
    %233 = arith.addf %231, %232 : vector<8x512xf32>
    %234 = vector.extract_strided_slice %233 {offsets = [0, 0], sizes = [8, 128], strides = [1, 1]} : vector<8x512xf32> to vector<8x128xf32>
    %235 = arith.negf %234 : vector<8x128xf32>
    %236 = math.exp %235 : vector<8x128xf32>
    %cst_72 = arith.constant 1.000000e+00 : f32
    %237 = vector.broadcast %cst_72 : f32 to vector<8x128xf32>
    %238 = arith.addf %237, %236 : vector<8x128xf32>
    %239 = arith.divf %237, %238 : vector<8x128xf32>
    %240 = vector.extract_strided_slice %233 {offsets = [0, 128], sizes = [8, 128], strides = [1, 1]} : vector<8x512xf32> to vector<8x128xf32>
    %241 = arith.negf %240 : vector<8x128xf32>
    %242 = math.exp %241 : vector<8x128xf32>
    %cst_73 = arith.constant 1.000000e+00 : f32
    %243 = vector.broadcast %cst_73 : f32 to vector<8x128xf32>
    %244 = arith.addf %243, %242 : vector<8x128xf32>
    %245 = arith.divf %243, %244 : vector<8x128xf32>
    %246 = vector.extract_strided_slice %233 {offsets = [0, 256], sizes = [8, 128], strides = [1, 1]} : vector<8x512xf32> to vector<8x128xf32>
    %247 = math.tanh %246 : vector<8x128xf32>
    %248 = vector.extract_strided_slice %233 {offsets = [0, 384], sizes = [8, 128], strides = [1, 1]} : vector<8x512xf32> to vector<8x128xf32>
    %249 = arith.negf %248 : vector<8x128xf32>
    %250 = math.exp %249 : vector<8x128xf32>
    %cst_74 = arith.constant 1.000000e+00 : f32
    %251 = vector.broadcast %cst_74 : f32 to vector<8x128xf32>
    %252 = arith.addf %251, %250 : vector<8x128xf32>
    %253 = arith.divf %251, %252 : vector<8x128xf32>
    %254 = arith.mulf %245, %224 : vector<8x128xf32>
    %255 = arith.mulf %239, %247 : vector<8x128xf32>
    %256 = arith.addf %254, %255 : vector<8x128xf32>
    %257 = math.tanh %256 : vector<8x128xf32>
    %258 = arith.mulf %253, %257 : vector<8x128xf32>
    %c7_75 = arith.constant 7 : index
    %c0_76 = arith.constant 0 : index
    %c0_77 = arith.constant 0 : index
    %259 = vector.load %arg4[%c7_75, %c0_76, %c0_77] : memref<8x8x128xf32, #tpu.memory_space<vmem>>, vector<1x8x128xf32>
    %260 = vector.shape_cast %259 : vector<1x8x128xf32> to vector<8x128xf32>
    %261 = vector.shape_cast %258 : vector<8x128xf32> to vector<1x8x128xf32>
    tpu.vector_store %arg4[%c7_75, %c0_76, %c0_77], %261 {strides = array<i32>} : memref<8x8x128xf32, #tpu.memory_space<vmem>>, vector<1x8x128xf32>,
    %c0_78 = arith.constant 0 : index
    %c0_79 = arith.constant 0 : index
    %262 = vector.load %arg7[%c0_78, %c0_79] : memref<8x128xf32, #tpu.memory_space<vmem>>, vector<8x128xf32>
    tpu.vector_store %arg7[%c0_78, %c0_79], %258 {strides = array<i32>} : memref<8x128xf32, #tpu.memory_space<vmem>>, vector<8x128xf32>,
    %c0_80 = arith.constant 0 : index
    %c0_81 = arith.constant 0 : index
    %263 = vector.load %arg8[%c0_80, %c0_81] : memref<8x128xf32, #tpu.memory_space<vmem>>, vector<8x128xf32>
    tpu.vector_store %arg8[%c0_80, %c0_81], %256 {strides = array<i32>} : memref<8x128xf32, #tpu.memory_space<vmem>>, vector<8x128xf32>,
    %c0_i32_82 = arith.constant 0 : i32
    %264 = arith.cmpi eq, %arg1, %c0_i32_82 : i32
    %265 = arith.extui %264 : i1 to i32
    %c0_i32_83 = arith.constant 0 : i32
    %266 = arith.cmpi ne, %265, %c0_i32_83 : i32
    scf.if %266 {
      %c0_84 = arith.constant 0 : index
      %c0_85 = arith.constant 0 : index
      %267 = vector.load %arg5[%c0_84, %c0_85] : memref<8x128xf32, #tpu.memory_space<vmem>>, vector<8x128xf32>
      tpu.vector_store %arg5[%c0_84, %c0_85], %258 {strides = array<i32>} : memref<8x128xf32, #tpu.memory_space<vmem>>, vector<8x128xf32>,
      %c0_86 = arith.constant 0 : index
      %c0_87 = arith.constant 0 : index
      %268 = vector.load %arg6[%c0_86, %c0_87] : memref<8x128xf32, #tpu.memory_space<vmem>>, vector<8x128xf32>
      tpu.vector_store %arg6[%c0_86, %c0_87], %256 {strides = array<i32>} : memref<8x128xf32, #tpu.memory_space<vmem>>, vector<8x128xf32>,
    } else {
    }
    return
  }
  func.func @transform_0(%arg0: i32, %arg1: i32) -> (i32, i32, i32) {
    %c0_i32 = arith.constant 0 : i32
    %c0_i32_0 = arith.constant 0 : i32
    return %arg1, %arg0, %c0_i32 : i32, i32, i32
  }
  func.func @transform_1(%arg0: i32, %arg1: i32) -> (i32, i32) {
    %c0_i32 = arith.constant 0 : i32
    %c0_i32_0 = arith.constant 0 : i32
    %c0_i32_1 = arith.constant 0 : i32
    return %c0_i32, %c0_i32_0 : i32, i32
  }
  func.func @transform_2(%arg0: i32, %arg1: i32) -> (i32, i32, i32) {
    %c0_i32 = arith.constant 0 : i32
    %c0_i32_0 = arith.constant 0 : i32
    return %arg1, %arg0, %c0_i32 : i32, i32, i32
  }
  func.func @transform_3(%arg0: i32, %arg1: i32) -> (i32, i32) {
    %c0_i32 = arith.constant 0 : i32
    %c0_i32_0 = arith.constant 0 : i32
    return %arg0, %c0_i32 : i32, i32
  }
  func.func @transform_4(%arg0: i32, %arg1: i32) -> (i32, i32) {
    %c0_i32 = arith.constant 0 : i32
    %c0_i32_0 = arith.constant 0 : i32
    return %arg0, %c0_i32 : i32, i32
  }
}

</mosaic_0001>

<llo_original>
// kernel: encoder_forward.2
$region0: #{encoder_forward.2}
  #allocation0 [shape = 'u32[]', space=smem, size = 0x4, offset = 0x4, fixed_abs, tag = 'smem constant byte address 0x4 - core index']
  #allocation1 [shape = 'u32[144,128]{1,0:T(1,128)}', space=vmem, size = 0x12000, scoped, tag = 'internal scratch']
  #allocation2 [shape = 'f32[8,128]{1,0:T(8,128)}', space=vmem, size = 0x1000, scoped, tag = 'scratch operand']
  #allocation3 [shape = 'f32[8,128]{1,0:T(8,128)}', space=vmem, size = 0x1000, scoped, tag = 'scratch operand']
  %s0 = inlined_call_operand.vmem [shape: f32[8,8,512], index: 0, kind: input, shape index: {}]
  %s1 = inlined_call_operand.vmem [shape: f32[128,512], index: 1, kind: input, shape index: {}]
  %s2 = inlined_call_operand.vmem [shape: f32[8,8,128], index: 2, kind: output, shape index: {0}]
  %s3 = inlined_call_operand.vmem [shape: f32[8,128], index: 3, kind: output, shape index: {1}]
  %s4 = inlined_call_operand.vmem [shape: f32[8,128], index: 4, kind: output, shape index: {2}]
  %5 = xla_tuple %s2, %s3, %s4
  %s6 = sld [smem:[#allocation0]]
  $region42: #{encoder_forward.2} parent=0
    _
  %s8 = ssub.s32 1, %s6
  %s9 = scalar_select 0, %s8, %s6
  // Predicated region
  $region2: #{encoder_forward.2} parent=0 // pred_check
    _
  $region3: #{encoder_forward.2} parent=0 // pred_check_branch
    %11 = sbr.rel (0) target = $region5
  $region4: #{encoder_forward.2} parent=0 // pred_region
    _
  $region5: #{encoder_forward.2} parent=0 // pred_fallthru
    _
  // Predicated region
  $region6: #{encoder_forward.2} parent=0 // pred_check
    _
  $region7: #{encoder_forward.2} parent=0 // pred_check_branch
    %13 = sbr.rel (0) target = $region9
  $region8: #{encoder_forward.2} parent=0 // pred_region
    _
  $region9: #{encoder_forward.2} parent=0 // pred_fallthru
    _
  %p14 = scmp.eq.s32.totalorder 0, 0
  // Predicated region
  $region10: #{encoder_forward.2} parent=0 // pred_check
    %p15 = pneg %p14
  $region11: #{encoder_forward.2} parent=0 // pred_check_branch
    %17 = sbr.rel (%p15) target = $region13
  $region12: #{encoder_forward.2} parent=0 // pred_region
    %18 = vst [vmem:[#allocation2] sm:$0xff] 0.0
    %19 = vst [vmem:[#allocation3] sm:$0xff] 0.0
  $region13: #{encoder_forward.2} parent=0 // pred_fallthru
    _
  %v20 = vld [vmem:[%s1] sm:$0xff]
  %v21 = vld [vmem:[%s1 + $0x8] sm:$0xff]
  %v22 = vld [vmem:[%s1 + $0x10] sm:$0xff]
  %v23 = vld [vmem:[%s1 + $0x18] sm:$0xff]
  %v24 = vld [vmem:[%s1 + $0x20] sm:$0xff]
  %v25 = vld [vmem:[%s1 + $0x28] sm:$0xff]
  %v26 = vld [vmem:[%s1 + $0x30] sm:$0xff]
  %v27 = vld [vmem:[%s1 + $0x38] sm:$0xff]
  %v28 = vld [vmem:[%s1 + $0x40] sm:$0xff]
  %v29 = vld [vmem:[%s1 + $0x48] sm:$0xff]
  %v30 = vld [vmem:[%s1 + $0x50] sm:$0xff]
  %v31 = vld [vmem:[%s1 + $0x58] sm:$0xff]
  %v32 = vld [vmem:[%s1 + $0x60] sm:$0xff]
  %v33 = vld [vmem:[%s1 + $0x68] sm:$0xff]
  %v34 = vld [vmem:[%s1 + $0x70] sm:$0xff]
  %v35 = vld [vmem:[%s1 + $0x78] sm:$0xff]
  %v36 = vld [vmem:[%s1 + $0x80] sm:$0xff]
  %v37 = vld [vmem:[%s1 + $0x88] sm:$0xff]
  %v38 = vld [vmem:[%s1 + $0x90] sm:$0xff]
  %v39 = vld [vmem:[%s1 + $0x98] sm:$0xff]
  %v40 = vld [vmem:[%s1 + $0xa0] sm:$0xff]
  %v41 = vld [vmem:[%s1 + $0xa8] sm:$0xff]
  %v42 = vld [vmem:[%s1 + $0xb0] sm:$0xff]
  %v43 = vld [vmem:[%s1 + $0xb8] sm:$0xff]
  %v44 = vld [vmem:[%s1 + $0xc0] sm:$0xff]
  %v45 = vld [vmem:[%s1 + $0xc8] sm:$0xff]
  %v46 = vld [vmem:[%s1 + $0xd0] sm:$0xff]
  %v47 = vld [vmem:[%s1 + $0xd8] sm:$0xff]
  %v48 = vld [vmem:[%s1 + $0xe0] sm:$0xff]
  %v49 = vld [vmem:[%s1 + $0xe8] sm:$0xff]
  %v50 = vld [vmem:[%s1 + $0xf0] sm:$0xff]
  %v51 = vld [vmem:[%s1 + $0xf8] sm:$0xff]
  %v52 = vld [vmem:[%s1 + $0x100] sm:$0xff]
  %v53 = vld [vmem:[%s1 + $0x108] sm:$0xff]
  %v54 = vld [vmem:[%s1 + $0x110] sm:$0xff]
  %v55 = vld [vmem:[%s1 + $0x118] sm:$0xff]
  %v56 = vld [vmem:[%s1 + $0x120] sm:$0xff]
  %v57 = vld [vmem:[%s1 + $0x128] sm:$0xff]
  %v58 = vld [vmem:[%s1 + $0x130] sm:$0xff]
  %v59 = vld [vmem:[%s1 + $0x138] sm:$0xff]
  %v60 = vld [vmem:[%s1 + $0x140] sm:$0xff]
  %v61 = vld [vmem:[%s1 + $0x148] sm:$0xff]
  %v62 = vld [vmem:[%s1 + $0x150] sm:$0xff]
  %v63 = vld [vmem:[%s1 + $0x158] sm:$0xff]
  %v64 = vld [vmem:[%s1 + $0x160] sm:$0xff]
  %v65 = vld [vmem:[%s1 + $0x168] sm:$0xff]
  %v66 = vld [vmem:[%s1 + $0x170] sm:$0xff]
  %v67 = vld [vmem:[%s1 + $0x178] sm:$0xff]
  %v68 = vld [vmem:[%s1 + $0x180] sm:$0xff]
  %v69 = vld [vmem:[%s1 + $0x188] sm:$0xff]
  %v70 = vld [vmem:[%s1 + $0x190] sm:$0xff]
  %v71 = vld [vmem:[%s1 + $0x198] sm:$0xff]
  %v72 = vld [vmem:[%s1 + $0x1a0] sm:$0xff]
  %v73 = vld [vmem:[%s1 + $0x1a8] sm:$0xff]
  %v74 = vld [vmem:[%s1 + $0x1b0] sm:$0xff]
  %v75 = vld [vmem:[%s1 + $0x1b8] sm:$0xff]
  %v76 = vld [vmem:[%s1 + $0x1c0] sm:$0xff]
  %v77 = vld [vmem:[%s1 + $0x1c8] sm:$0xff]
  %v78 = vld [vmem:[%s1 + $0x1d0] sm:$0xff]
  %v79 = vld [vmem:[%s1 + $0x1d8] sm:$0xff]
  %v80 = vld [vmem:[%s1 + $0x1e0] sm:$0xff]
  %v81 = vld [vmem:[%s1 + $0x1e8] sm:$0xff]
  %v82 = vld [vmem:[%s1 + $0x1f0] sm:$0xff]
  %v83 = vld [vmem:[%s1 + $0x1f8] sm:$0xff]
  %v84 = vld [vmem:[#allocation2] sm:$0xff]
  %v85 = vld [vmem:[#allocation3] sm:$0xff]
  %v86 = vld [vmem:[%s0] sm:$0xff]
  %v87 = vld [vmem:[%s0 + $0x8] sm:$0xff]
  %v88 = vld [vmem:[%s0 + $0x10] sm:$0xff]
  %v89 = vld [vmem:[%s0 + $0x18] sm:$0xff]
  %90 = vmatprep.subr.mxu0 %v81
  %91 = vmatpush1.msra.mxu0 %v80
  %92 = vmatprep.subr.mxu0 %v77
  %93 = vmatpush1.msra.mxu0 %v76
  %94 = vmatprep.subr.mxu0 %v73
  %95 = vmatpush1.msra.mxu0 %v72
  %96 = vmatprep.subr.mxu0 %v69
  %97 = vmatpush1.msra.mxu0 %v68
  %98 = vmatprep.subr.mxu0 %v65
  %99 = vmatpush1.msra.mxu0 %v64
  %100 = vmatprep.subr.mxu0 %v61
  %101 = vmatpush1.msra.mxu0 %v60
  %102 = vmatprep.subr.mxu0 %v57
  %103 = vmatpush1.msra.mxu0 %v56
  %104 = vmatprep.subr.mxu0 %v53
  %105 = vmatpush1.msra.mxu0 %v52
  %106 = vmatprep.subr.mxu0 %v49
  %107 = vmatpush1.msra.mxu0 %v48
  %108 = vmatprep.subr.mxu0 %v45
  %109 = vmatpush1.msra.mxu0 %v44
  %110 = vmatprep.subr.mxu0 %v41
  %111 = vmatpush1.msra.mxu0 %v40
  %112 = vmatprep.subr.mxu0 %v37
  %113 = vmatpush1.msra.mxu0 %v36
  %114 = vmatprep.subr.mxu0 %v33
  %115 = vmatpush1.msra.mxu0 %v32
  %116 = vmatprep.subr.mxu0 %v29
  %117 = vmatpush1.msra.mxu0 %v28
  %118 = vmatprep.subr.mxu0 %v25
  %119 = vmatpush1.msra.mxu0 %v24
  %120 = vmatprep.subr.mxu0 %v21
  %121 = vmatpush1.msra.mxu0 %v20
  %122 = vmatprep.subr.mxu0 0.0
  %123 = vmatpush2.msra.mxu0 0.0
  %124 = vmatprep.subr.mxu0 0.0
  %125 = vmatpush2.msra.mxu0 0.0
  %126 = vmatprep.subr.mxu0 0.0
  %127 = vmatpush2.msra.mxu0 0.0
  %128 = vmatprep.subr.mxu0 0.0
  %129 = vmatpush2.msra.mxu0 0.0
  %130 = vmatprep.subr.mxu0 0.0
  %131 = vmatpush2.msra.mxu0 0.0
  %132 = vmatprep.subr.mxu0 0.0
  %133 = vmatpush2.msra.mxu0 0.0
  %134 = vmatprep.subr.mxu0 0.0
  %135 = vmatpush2.msra.mxu0 0.0
  %136 = vmatprep.subr.mxu0 0.0
  %137 = vmatpush2.msra.mxu0 0.0
  %138 = vmatprep.subr.mxu0 0.0
  %139 = vmatpush2.msra.mxu0 0.0
  %140 = vmatprep.subr.mxu0 0.0
  %141 = vmatpush2.msra.mxu0 0.0
  %142 = vmatprep.subr.mxu0 0.0
  %143 = vmatpush2.msra.mxu0 0.0
  %144 = vmatprep.subr.mxu0 0.0
  %145 = vmatpush2.msra.mxu0 0.0
  %146 = vmatprep.subr.mxu0 0.0
  %147 = vmatpush2.msra.mxu0 0.0
  %148 = vmatprep.subr.mxu0 0.0
  %149 = vmatpush2.msra.mxu0 0.0
  %150 = vmatprep.subr.mxu0 0.0
  %151 = vmatpush2.msra.mxu0 0.0
  %152 = vmatprep.subr.mxu0 0.0
  %153 = vmatpush2.msra.mxu0 0.0
  %154 = vmatprep.mubr.f32.mxu0 0.0
  %155 = vmatmul.mubr.f32.gmra.mxu0 %v84
  %v156 = vpop.f32.mrf.mxu0
  %v157 = vadd.f32 0.0, %v156
  %v158 = vpop.f32.mrf.mxu0
  %v159 = vadd.f32 0.0, %v158
  %160 = vdwg.mxu0
  %161 = vmatprep.subr.mxu0 %v83
  %162 = vmatpush1.msra.mxu0 %v82
  %163 = vmatprep.subr.mxu0 %v79
  %164 = vmatpush1.msra.mxu0 %v78
  %165 = vmatprep.subr.mxu0 %v75
  %166 = vmatpush1.msra.mxu0 %v74
  %167 = vmatprep.subr.mxu0 %v71
  %168 = vmatpush1.msra.mxu0 %v70
  %169 = vmatprep.subr.mxu0 %v67
  %170 = vmatpush1.msra.mxu0 %v66
  %171 = vmatprep.subr.mxu0 %v63
  %172 = vmatpush1.msra.mxu0 %v62
  %173 = vmatprep.subr.mxu0 %v59
  %174 = vmatpush1.msra.mxu0 %v58
  %175 = vmatprep.subr.mxu0 %v55
  %176 = vmatpush1.msra.mxu0 %v54
  %177 = vmatprep.subr.mxu0 %v51
  %178 = vmatpush1.msra.mxu0 %v50
  %179 = vmatprep.subr.mxu0 %v47
  %180 = vmatpush1.msra.mxu0 %v46
  %181 = vmatprep.subr.mxu0 %v43
  %182 = vmatpush1.msra.mxu0 %v42
  %183 = vmatprep.subr.mxu0 %v39
  %184 = vmatpush1.msra.mxu0 %v38
  %185 = vmatprep.subr.mxu0 %v35
  %186 = vmatpush1.msra.mxu0 %v34
  %187 = vmatprep.subr.mxu0 %v31
  %188 = vmatpush1.msra.mxu0 %v30
  %189 = vmatprep.subr.mxu0 %v27
  %190 = vmatpush1.msra.mxu0 %v26
  %191 = vmatprep.subr.mxu0 %v23
  %192 = vmatpush1.msra.mxu0 %v22
  %193 = vmatprep.subr.mxu0 0.0
  %194 = vmatpush2.msra.mxu0 0.0
  %195 = vmatprep.subr.mxu0 0.0
  %196 = vmatpush2.msra.mxu0 0.0
  %197 = vmatprep.subr.mxu0 0.0
  %198 = vmatpush2.msra.mxu0 0.0
  %199 = vmatprep.subr.mxu0 0.0
  %200 = vmatpush2.msra.mxu0 0.0
  %201 = vmatprep.subr.mxu0 0.0
  %202 = vmatpush2.msra.mxu0 0.0
  %203 = vmatprep.subr.mxu0 0.0
  %204 = vmatpush2.msra.mxu0 0.0
  %205 = vmatprep.subr.mxu0 0.0
  %206 = vmatpush2.msra.mxu0 0.0
  %207 = vmatprep.subr.mxu0 0.0
  %208 = vmatpush2.msra.mxu0 0.0
  %209 = vmatprep.subr.mxu0 0.0
  %210 = vmatpush2.msra.mxu0 0.0
  %211 = vmatprep.subr.mxu0 0.0
  %212 = vmatpush2.msra.mxu0 0.0
  %213 = vmatprep.subr.mxu0 0.0
  %214 = vmatpush2.msra.mxu0 0.0
  %215 = vmatprep.subr.mxu0 0.0
  %216 = vmatpush2.msra.mxu0 0.0
  %217 = vmatprep.subr.mxu0 0.0
  %218 = vmatpush2.msra.mxu0 0.0
  %219 = vmatprep.subr.mxu0 0.0
  %220 = vmatpush2.msra.mxu0 0.0
  %221 = vmatprep.subr.mxu0 0.0
  %222 = vmatpush2.msra.mxu0 0.0
  %223 = vmatprep.subr.mxu0 0.0
  %224 = vmatpush2.msra.mxu0 0.0
  %225 = vmatprep.mubr.f32.mxu0 0.0
  %226 = vmatmul.mubr.f32.gmra.mxu0 %v84
  %v227 = vpop.f32.mrf.mxu0
  %v228 = vadd.f32 0.0, %v227
  %v229 = vpop.f32.mrf.mxu0
  %v230 = vadd.f32 0.0, %v229
  %231 = vdwg.mxu0
  %v232 = vadd.f32 %v86, %v157
  %v233 = vadd.f32 %v87, %v159
  %v234 = vadd.f32 %v88, %v228
  %v235 = vadd.f32 %v89, %v230
  %v236 = vxor.u32 %v232, 2147483648
  %v237 = vmul.f32 %v236, 1.442695
  %v238 = vpow.pop %v237
  %v239 = vadd.f32 %v238, 1.0
  %v240 = vrcp.pop %v239
  %v241 = vmul.f32 1.0, %v240
  %v242 = vxor.u32 %v233, 2147483648
  %v243 = vmul.f32 %v242, 1.442695
  %v244 = vpow.pop %v243
  %v245 = vadd.f32 %v244, 1.0
  %v246 = vrcp.pop %v245
  %v247 = vmul.f32 1.0, %v246
  %v248 = vtanh.pop %v234
  %v249 = vxor.u32 %v235, 2147483648
  %v250 = vmul.f32 %v249, 1.442695
  %v251 = vpow.pop %v250
  %v252 = vadd.f32 %v251, 1.0
  %v253 = vrcp.pop %v252
  %v254 = vmul.f32 1.0, %v253
  %v255 = vmul.f32 %v247, %v85
  %v256 = vmul.f32 %v241, %v248
  %v257 = vadd.f32 %v255, %v256
  %v258 = vtanh.pop %v257
  %v259 = vmul.f32 %v254, %v258
  %260 = vst [vmem:[%s2] sm:$0xff] %v259
  %s261 = scalar_lea.vmem %s0, 32
  %v262 = vld [vmem:[%s261] sm:$0xff]
  %v263 = vld [vmem:[%s261 + $0x8] sm:$0xff]
  %v264 = vld [vmem:[%s261 + $0x10] sm:$0xff]
  %v265 = vld [vmem:[%s261 + $0x18] sm:$0xff]
  %266 = vmatprep.subr.mxu0 %v81
  %267 = vmatpush1.msra.mxu0 %v80
  %268 = vmatprep.subr.mxu0 %v77
  %269 = vmatpush1.msra.mxu0 %v76
  %270 = vmatprep.subr.mxu0 %v73
  %271 = vmatpush1.msra.mxu0 %v72
  %272 = vmatprep.subr.mxu0 %v69
  %273 = vmatpush1.msra.mxu0 %v68
  %274 = vmatprep.subr.mxu0 %v65
  %275 = vmatpush1.msra.mxu0 %v64
  %276 = vmatprep.subr.mxu0 %v61
  %277 = vmatpush1.msra.mxu0 %v60
  %278 = vmatprep.subr.mxu0 %v57
  %279 = vmatpush1.msra.mxu0 %v56
  %280 = vmatprep.subr.mxu0 %v53
  %281 = vmatpush1.msra.mxu0 %v52
  %282 = vmatprep.subr.mxu0 %v49
  %283 = vmatpush1.msra.mxu0 %v48
  %284 = vmatprep.subr.mxu0 %v45
  %285 = vmatpush1.msra.mxu0 %v44
  %286 = vmatprep.subr.mxu0 %v41
  %287 = vmatpush1.msra.mxu0 %v40
  %288 = vmatprep.subr.mxu0 %v37
  %289 = vmatpush1.msra.mxu0 %v36
  %290 = vmatprep.subr.mxu0 %v33
  %291 = vmatpush1.msra.mxu0 %v32
  %292 = vmatprep.subr.mxu0 %v29
  %293 = vmatpush1.msra.mxu0 %v28
  %294 = vmatprep.subr.mxu0 %v25
  %295 = vmatpush1.msra.mxu0 %v24
  %296 = vmatprep.subr.mxu0 %v21
  %297 = vmatpush1.msra.mxu0 %v20
  %298 = vmatprep.subr.mxu0 0.0
  %299 = vmatpush2.msra.mxu0 0.0
  %300 = vmatprep.subr.mxu0 0.0
  %301 = vmatpush2.msra.mxu0 0.0
  %302 = vmatprep.subr.mxu0 0.0
  %303 = vmatpush2.msra.mxu0 0.0
  %304 = vmatprep.subr.mxu0 0.0
  %305 = vmatpush2.msra.mxu0 0.0
  %306 = vmatprep.subr.mxu0 0.0
  %307 = vmatpush2.msra.mxu0 0.0
  %308 = vmatprep.subr.mxu0 0.0
  %309 = vmatpush2.msra.mxu0 0.0
  %310 = vmatprep.subr.mxu0 0.0
  %311 = vmatpush2.msra.mxu0 0.0
  %312 = vmatprep.subr.mxu0 0.0
  %313 = vmatpush2.msra.mxu0 0.0
  %314 = vmatprep.subr.mxu0 0.0
  %315 = vmatpush2.msra.mxu0 0.0
  %316 = vmatprep.subr.mxu0 0.0
  %317 = vmatpush2.msra.mxu0 0.0
  %318 = vmatprep.subr.mxu0 0.0
  %319 = vmatpush2.msra.mxu0 0.0
  %320 = vmatprep.subr.mxu0 0.0
  %321 = vmatpush2.msra.mxu0 0.0
  %322 = vmatprep.subr.mxu0 0.0
  %323 = vmatpush2.msra.mxu0 0.0
  %324 = vmatprep.subr.mxu0 0.0
  %325 = vmatpush2.msra.mxu0 0.0
  %326 = vmatprep.subr.mxu0 0.0
  %327 = vmatpush2.msra.mxu0 0.0
  %328 = vmatprep.subr.mxu0 0.0
  %329 = vmatpush2.msra.mxu0 0.0
  %330 = vmatprep.mubr.f32.mxu0 0.0
  %331 = vmatmul.mubr.f32.gmra.mxu0 %v259
  %v332 = vpop.f32.mrf.mxu0
  %v333 = vadd.f32 0.0, %v332
  %v334 = vpop.f32.mrf.mxu0
  %v335 = vadd.f32 0.0, %v334
  %336 = vdwg.mxu0
  %337 = vmatprep.subr.mxu0 %v83
  %338 = vmatpush1.msra.mxu0 %v82
  %339 = vmatprep.subr.mxu0 %v79
  %340 = vmatpush1.msra.mxu0 %v78
  %341 = vmatprep.subr.mxu0 %v75
  %342 = vmatpush1.msra.mxu0 %v74
  %343 = vmatprep.subr.mxu0 %v71
  %344 = vmatpush1.msra.mxu0 %v70
  %345 = vmatprep.subr.mxu0 %v67
  %346 = vmatpush1.msra.mxu0 %v66
  %347 = vmatprep.subr.mxu0 %v63
  %348 = vmatpush1.msra.mxu0 %v62
  %349 = vmatprep.subr.mxu0 %v59
  %350 = vmatpush1.msra.mxu0 %v58
  %351 = vmatprep.subr.mxu0 %v55
  %352 = vmatpush1.msra.mxu0 %v54
  %353 = vmatprep.subr.mxu0 %v51
  %354 = vmatpush1.msra.mxu0 %v50
  %355 = vmatprep.subr.mxu0 %v47
  %356 = vmatpush1.msra.mxu0 %v46
  %357 = vmatprep.subr.mxu0 %v43
  %358 = vmatpush1.msra.mxu0 %v42
  %359 = vmatprep.subr.mxu0 %v39
  %360 = vmatpush1.msra.mxu0 %v38
  %361 = vmatprep.subr.mxu0 %v35
  %362 = vmatpush1.msra.mxu0 %v34
  %363 = vmatprep.subr.mxu0 %v31
  %364 = vmatpush1.msra.mxu0 %v30
  %365 = vmatprep.subr.mxu0 %v27
  %366 = vmatpush1.msra.mxu0 %v26
  %367 = vmatprep.subr.mxu0 %v23
  %368 = vmatpush1.msra.mxu0 %v22
  %369 = vmatprep.subr.mxu0 0.0
  %370 = vmatpush2.msra.mxu0 0.0
  %371 = vmatprep.subr.mxu0 0.0
  %372 = vmatpush2.msra.mxu0 0.0
  %373 = vmatprep.subr.mxu0 0.0
  %374 = vmatpush2.msra.mxu0 0.0
  %375 = vmatprep.subr.mxu0 0.0
  %376 = vmatpush2.msra.mxu0 0.0
  %377 = vmatprep.subr.mxu0 0.0
  %378 = vmatpush2.msra.mxu0 0.0
  %379 = vmatprep.subr.mxu0 0.0
  %380 = vmatpush2.msra.mxu0 0.0
  %381 = vmatprep.subr.mxu0 0.0
  %382 = vmatpush2.msra.mxu0 0.0
  %383 = vmatprep.subr.mxu0 0.0
  %384 = vmatpush2.msra.mxu0 0.0
  %385 = vmatprep.subr.mxu0 0.0
  %386 = vmatpush2.msra.mxu0 0.0
  %387 = vmatprep.subr.mxu0 0.0
  %388 = vmatpush2.msra.mxu0 0.0
  %389 = vmatprep.subr.mxu0 0.0
  %390 = vmatpush2.msra.mxu0 0.0
  %391 = vmatprep.subr.mxu0 0.0
  %392 = vmatpush2.msra.mxu0 0.0
  %393 = vmatprep.subr.mxu0 0.0
  %394 = vmatpush2.msra.mxu0 0.0
  %395 = vmatprep.subr.mxu0 0.0
  %396 = vmatpush2.msra.mxu0 0.0
  %397 = vmatprep.subr.mxu0 0.0
  %398 = vmatpush2.msra.mxu0 0.0
  %399 = vmatprep.subr.mxu0 0.0
  %400 = vmatpush2.msra.mxu0 0.0
  %401 = vmatprep.mubr.f32.mxu0 0.0
  %402 = vmatmul.mubr.f32.gmra.mxu0 %v259
  %v403 = vpop.f32.mrf.mxu0
  %v404 = vadd.f32 0.0, %v403
  %v405 = vpop.f32.mrf.mxu0
  %v406 = vadd.f32 0.0, %v405
  %407 = vdwg.mxu0
  %v408 = vadd.f32 %v262, %v333
  %v409 = vadd.f32 %v263, %v335
  %v410 = vadd.f32 %v264, %v404
  %v411 = vadd.f32 %v265, %v406
  %v412 = vxor.u32 %v408, 2147483648
  %v413 = vmul.f32 %v412, 1.442695
  %v414 = vpow.pop %v413
  %v415 = vadd.f32 %v414, 1.0
  %v416 = vrcp.pop %v415
  %v417 = vmul.f32 1.0, %v416
  %v418 = vxor.u32 %v409, 2147483648
  %v419 = vmul.f32 %v418, 1.442695
  %v420 = vpow.pop %v419
  %v421 = vadd.f32 %v420, 1.0
  %v422 = vrcp.pop %v421
  %v423 = vmul.f32 1.0, %v422
  %v424 = vtanh.pop %v410
  %v425 = vxor.u32 %v411, 2147483648
  %v426 = vmul.f32 %v425, 1.442695
  %v427 = vpow.pop %v426
  %v428 = vadd.f32 %v427, 1.0
  %v429 = vrcp.pop %v428
  %v430 = vmul.f32 1.0, %v429
  %v431 = vmul.f32 %v423, %v257
  %v432 = vmul.f32 %v417, %v424
  %v433 = vadd.f32 %v431, %v432
  %v434 = vtanh.pop %v433
  %v435 = vmul.f32 %v430, %v434
  %s436 = scalar_lea.vmem %s2, 8
  %437 = vst [vmem:[%s436] sm:$0xff] %v435
  %s438 = scalar_lea.vmem %s0, 64
  %v439 = vld [vmem:[%s438] sm:$0xff]
  %v440 = vld [vmem:[%s438 + $0x8] sm:$0xff]
  %v441 = vld [vmem:[%s438 + $0x10] sm:$0xff]
  %v442 = vld [vmem:[%s438 + $0x18] sm:$0xff]
  %443 = vmatprep.subr.mxu0 %v81
  %444 = vmatpush1.msra.mxu0 %v80
  %445 = vmatprep.subr.mxu0 %v77
  %446 = vmatpush1.msra.mxu0 %v76
  %447 = vmatprep.subr.mxu0 %v73
  %448 = vmatpush1.msra.mxu0 %v72
  %449 = vmatprep.subr.mxu0 %v69
  %450 = vmatpush1.msra.mxu0 %v68
  %451 = vmatprep.subr.mxu0 %v65
  %452 = vmatpush1.msra.mxu0 %v64
  %453 = vmatprep.subr.mxu0 %v61
  %454 = vmatpush1.msra.mxu0 %v60
  %455 = vmatprep.subr.mxu0 %v57
  %456 = vmatpush1.msra.mxu0 %v56
  %457 = vmatprep.subr.mxu0 %v53
  %458 = vmatpush1.msra.mxu0 %v52
  %459 = vmatprep.subr.mxu0 %v49
  %460 = vmatpush1.msra.mxu0 %v48
  %461 = vmatprep.subr.mxu0 %v45
  %462 = vmatpush1.msra.mxu0 %v44
  %463 = vmatprep.subr.mxu0 %v41
  %464 = vmatpush1.msra.mxu0 %v40
  %465 = vmatprep.subr.mxu0 %v37
  %466 = vmatpush1.msra.mxu0 %v36
  %467 = vmatprep.subr.mxu0 %v33
  %468 = vmatpush1.msra.mxu0 %v32
  %469 = vmatprep.subr.mxu0 %v29
  %470 = vmatpush1.msra.mxu0 %v28
  %471 = vmatprep.subr.mxu0 %v25
  %472 = vmatpush1.msra.mxu0 %v24
  %473 = vmatprep.subr.mxu0 %v21
  %474 = vmatpush1.msra.mxu0 %v20
  %475 = vmatprep.subr.mxu0 0.0
  %476 = vmatpush2.msra.mxu0 0.0
  %477 = vmatprep.subr.mxu0 0.0
  %478 = vmatpush2.msra.mxu0 0.0
  %479 = vmatprep.subr.mxu0 0.0
  %480 = vmatpush2.msra.mxu0 0.0
  %481 = vmatprep.subr.mxu0 0.0
  %482 = vmatpush2.msra.mxu0 0.0
  %483 = vmatprep.subr.mxu0 0.0
  %484 = vmatpush2.msra.mxu0 0.0
  %485 = vmatprep.subr.mxu0 0.0
  %486 = vmatpush2.msra.mxu0 0.0
  %487 = vmatprep.subr.mxu0 0.0
  %488 = vmatpush2.msra.mxu0 0.0
  %489 = vmatprep.subr.mxu0 0.0
  %490 = vmatpush2.msra.mxu0 0.0
  %491 = vmatprep.subr.mxu0 0.0
  %492 = vmatpush2.msra.mxu0 0.0
  %493 = vmatprep.subr.mxu0 0.0
  %494 = vmatpush2.msra.mxu0 0.0
  %495 = vmatprep.subr.mxu0 0.0
  %496 = vmatpush2.msra.mxu0 0.0
  %497 = vmatprep.subr.mxu0 0.0
  %498 = vmatpush2.msra.mxu0 0.0
  %499 = vmatprep.subr.mxu0 0.0
  %500 = vmatpush2.msra.mxu0 0.0
  %501 = vmatprep.subr.mxu0 0.0
  %502 = vmatpush2.msra.mxu0 0.0
  %503 = vmatprep.subr.mxu0 0.0
  %504 = vmatpush2.msra.mxu0 0.0
  %505 = vmatprep.subr.mxu0 0.0
  %506 = vmatpush2.msra.mxu0 0.0
  %507 = vmatprep.mubr.f32.mxu0 0.0
  %508 = vmatmul.mubr.f32.gmra.mxu0 %v435
  %v509 = vpop.f32.mrf.mxu0
  %v510 = vadd.f32 0.0, %v509
  %v511 = vpop.f32.mrf.mxu0
  %v512 = vadd.f32 0.0, %v511
  %513 = vdwg.mxu0
  %514 = vmatprep.subr.mxu0 %v83
  %515 = vmatpush1.msra.mxu0 %v82
  %516 = vmatprep.subr.mxu0 %v79
  %517 = vmatpush1.msra.mxu0 %v78
  %518 = vmatprep.subr.mxu0 %v75
  %519 = vmatpush1.msra.mxu0 %v74
  %520 = vmatprep.subr.mxu0 %v71
  %521 = vmatpush1.msra.mxu0 %v70
  %522 = vmatprep.subr.mxu0 %v67
  %523 = vmatpush1.msra.mxu0 %v66
  %524 = vmatprep.subr.mxu0 %v63
  %525 = vmatpush1.msra.mxu0 %v62
  %526 = vmatprep.subr.mxu0 %v59
  %527 = vmatpush1.msra.mxu0 %v58
  %528 = vmatprep.subr.mxu0 %v55
  %529 = vmatpush1.msra.mxu0 %v54
  %530 = vmatprep.subr.mxu0 %v51
  %531 = vmatpush1.msra.mxu0 %v50
  %532 = vmatprep.subr.mxu0 %v47
  %533 = vmatpush1.msra.mxu0 %v46
  %534 = vmatprep.subr.mxu0 %v43
  %535 = vmatpush1.msra.mxu0 %v42
  %536 = vmatprep.subr.mxu0 %v39
  %537 = vmatpush1.msra.mxu0 %v38
  %538 = vmatprep.subr.mxu0 %v35
  %539 = vmatpush1.msra.mxu0 %v34
  %540 = vmatprep.subr.mxu0 %v31
  %541 = vmatpush1.msra.mxu0 %v30
  %542 = vmatprep.subr.mxu0 %v27
  %543 = vmatpush1.msra.mxu0 %v26
  %544 = vmatprep.subr.mxu0 %v23
  %545 = vmatpush1.msra.mxu0 %v22
  %546 = vmatprep.subr.mxu0 0.0
  %547 = vmatpush2.msra.mxu0 0.0
  %548 = vmatprep.subr.mxu0 0.0
  %549 = vmatpush2.msra.mxu0 0.0
  %550 = vmatprep.subr.mxu0 0.0
  %551 = vmatpush2.msra.mxu0 0.0
  %552 = vmatprep.subr.mxu0 0.0
  %553 = vmatpush2.msra.mxu0 0.0
  %554 = vmatprep.subr.mxu0 0.0
  %555 = vmatpush2.msra.mxu0 0.0
  %556 = vmatprep.subr.mxu0 0.0
  %557 = vmatpush2.msra.mxu0 0.0
  %558 = vmatprep.subr.mxu0 0.0
  %559 = vmatpush2.msra.mxu0 0.0
  %560 = vmatprep.subr.mxu0 0.0
  %561 = vmatpush2.msra.mxu0 0.0
  %562 = vmatprep.subr.mxu0 0.0
  %563 = vmatpush2.msra.mxu0 0.0
  %564 = vmatprep.subr.mxu0 0.0
  %565 = vmatpush2.msra.mxu0 0.0
  %566 = vmatprep.subr.mxu0 0.0
  %567 = vmatpush2.msra.mxu0 0.0
  %568 = vmatprep.subr.mxu0 0.0
  %569 = vmatpush2.msra.mxu0 0.0
  %570 = vmatprep.subr.mxu0 0.0
  %571 = vmatpush2.msra.mxu0 0.0
  %572 = vmatprep.subr.mxu0 0.0
  %573 = vmatpush2.msra.mxu0 0.0
  %574 = vmatprep.subr.mxu0 0.0
  %575 = vmatpush2.msra.mxu0 0.0
  %576 = vmatprep.subr.mxu0 0.0
  %577 = vmatpush2.msra.mxu0 0.0
  %578 = vmatprep.mubr.f32.mxu0 0.0
  %579 = vmatmul.mubr.f32.gmra.mxu0 %v435
  %v580 = vpop.f32.mrf.mxu0
  %v581 = vadd.f32 0.0, %v580
  %v582 = vpop.f32.mrf.mxu0
  %v583 = vadd.f32 0.0, %v582
  %584 = vdwg.mxu0
  %v585 = vadd.f32 %v439, %v510
  %v586 = vadd.f32 %v440, %v512
  %v587 = vadd.f32 %v441, %v581
  %v588 = vadd.f32 %v442, %v583
  %v589 = vxor.u32 %v585, 2147483648
  %v590 = vmul.f32 %v589, 1.442695
  %v591 = vpow.pop %v590
  %v592 = vadd.f32 %v591, 1.0
  %v593 = vrcp.pop %v592
  %v594 = vmul.f32 1.0, %v593
  %v595 = vxor.u32 %v586, 2147483648
  %v596 = vmul.f32 %v595, 1.442695
  %v597 = vpow.pop %v596
  %v598 = vadd.f32 %v597, 1.0
  %v599 = vrcp.pop %v598
  %v600 = vmul.f32 1.0, %v599
  %v601 = vtanh.pop %v587
  %v602 = vxor.u32 %v588, 2147483648
  %v603 = vmul.f32 %v602, 1.442695
  %v604 = vpow.pop %v603
  %v605 = vadd.f32 %v604, 1.0
  %v606 = vrcp.pop %v605
  %v607 = vmul.f32 1.0, %v606
  %v608 = vmul.f32 %v600, %v433
  %v609 = vmul.f32 %v594, %v601
  %v610 = vadd.f32 %v608, %v609
  %v611 = vtanh.pop %v610
  %v612 = vmul.f32 %v607, %v611
  %s613 = scalar_lea.vmem %s2, 16
  %614 = vst [vmem:[%s613] sm:$0xff] %v612
  %s615 = scalar_lea.vmem %s0, 96
  %v616 = vld [vmem:[%s615] sm:$0xff]
  %v617 = vld [vmem:[%s615 + $0x8] sm:$0xff]
  %v618 = vld [vmem:[%s615 + $0x10] sm:$0xff]
  %v619 = vld [vmem:[%s615 + $0x18] sm:$0xff]
  %620 = vmatprep.subr.mxu0 %v81
  %621 = vmatpush1.msra.mxu0 %v80
  %622 = vmatprep.subr.mxu0 %v77
  %623 = vmatpush1.msra.mxu0 %v76
  %624 = vmatprep.subr.mxu0 %v73
  %625 = vmatpush1.msra.mxu0 %v72
  %626 = vmatprep.subr.mxu0 %v69
  %627 = vmatpush1.msra.mxu0 %v68
  %628 = vmatprep.subr.mxu0 %v65
  %629 = vmatpush1.msra.mxu0 %v64
  %630 = vmatprep.subr.mxu0 %v61
  %631 = vmatpush1.msra.mxu0 %v60
  %632 = vmatprep.subr.mxu0 %v57
  %633 = vmatpush1.msra.mxu0 %v56
  %634 = vmatprep.subr.mxu0 %v53
  %635 = vmatpush1.msra.mxu0 %v52
  %636 = vmatprep.subr.mxu0 %v49
  %637 = vmatpush1.msra.mxu0 %v48
  %638 = vmatprep.subr.mxu0 %v45
  %639 = vmatpush1.msra.mxu0 %v44
  %640 = vmatprep.subr.mxu0 %v41
  %641 = vmatpush1.msra.mxu0 %v40
  %642 = vmatprep.subr.mxu0 %v37
  %643 = vmatpush1.msra.mxu0 %v36
  %644 = vmatprep.subr.mxu0 %v33
  %645 = vmatpush1.msra.mxu0 %v32
  %646 = vmatprep.subr.mxu0 %v29
  %647 = vmatpush1.msra.mxu0 %v28
  %648 = vmatprep.subr.mxu0 %v25
  %649 = vmatpush1.msra.mxu0 %v24
  %650 = vmatprep.subr.mxu0 %v21
  %651 = vmatpush1.msra.mxu0 %v20
  %652 = vmatprep.subr.mxu0 0.0
  %653 = vmatpush2.msra.mxu0 0.0
  %654 = vmatprep.subr.mxu0 0.0
  %655 = vmatpush2.msra.mxu0 0.0
  %656 = vmatprep.subr.mxu0 0.0
  %657 = vmatpush2.msra.mxu0 0.0
  %658 = vmatprep.subr.mxu0 0.0
  %659 = vmatpush2.msra.mxu0 0.0
  %660 = vmatprep.subr.mxu0 0.0
  %661 = vmatpush2.msra.mxu0 0.0
  %662 = vmatprep.subr.mxu0 0.0
  %663 = vmatpush2.msra.mxu0 0.0
  %664 = vmatprep.subr.mxu0 0.0
  %665 = vmatpush2.msra.mxu0 0.0
  %666 = vmatprep.subr.mxu0 0.0
  %667 = vmatpush2.msra.mxu0 0.0
  %668 = vmatprep.subr.mxu0 0.0
  %669 = vmatpush2.msra.mxu0 0.0
  %670 = vmatprep.subr.mxu0 0.0
  %671 = vmatpush2.msra.mxu0 0.0
  %672 = vmatprep.subr.mxu0 0.0
  %673 = vmatpush2.msra.mxu0 0.0
  %674 = vmatprep.subr.mxu0 0.0
  %675 = vmatpush2.msra.mxu0 0.0
  %676 = vmatprep.subr.mxu0 0.0
  %677 = vmatpush2.msra.mxu0 0.0
  %678 = vmatprep.subr.mxu0 0.0
  %679 = vmatpush2.msra.mxu0 0.0
  %680 = vmatprep.subr.mxu0 0.0
  %681 = vmatpush2.msra.mxu0 0.0
  %682 = vmatprep.subr.mxu0 0.0
  %683 = vmatpush2.msra.mxu0 0.0
  %684 = vmatprep.mubr.f32.mxu0 0.0
  %685 = vmatmul.mubr.f32.gmra.mxu0 %v612
  %v686 = vpop.f32.mrf.mxu0
  %v687 = vadd.f32 0.0, %v686
  %v688 = vpop.f32.mrf.mxu0
  %v689 = vadd.f32 0.0, %v688
  %690 = vdwg.mxu0
  %691 = vmatprep.subr.mxu0 %v83
  %692 = vmatpush1.msra.mxu0 %v82
  %693 = vmatprep.subr.mxu0 %v79
  %694 = vmatpush1.msra.mxu0 %v78
  %695 = vmatprep.subr.mxu0 %v75
  %696 = vmatpush1.msra.mxu0 %v74
  %697 = vmatprep.subr.mxu0 %v71
  %698 = vmatpush1.msra.mxu0 %v70
  %699 = vmatprep.subr.mxu0 %v67
  %700 = vmatpush1.msra.mxu0 %v66
  %701 = vmatprep.subr.mxu0 %v63
  %702 = vmatpush1.msra.mxu0 %v62
  %703 = vmatprep.subr.mxu0 %v59
  %704 = vmatpush1.msra.mxu0 %v58
  %705 = vmatprep.subr.mxu0 %v55
  %706 = vmatpush1.msra.mxu0 %v54
  %707 = vmatprep.subr.mxu0 %v51
  %708 = vmatpush1.msra.mxu0 %v50
  %709 = vmatprep.subr.mxu0 %v47
  %710 = vmatpush1.msra.mxu0 %v46
  %711 = vmatprep.subr.mxu0 %v43
  %712 = vmatpush1.msra.mxu0 %v42
  %713 = vmatprep.subr.mxu0 %v39
  %714 = vmatpush1.msra.mxu0 %v38
  %715 = vmatprep.subr.mxu0 %v35
  %716 = vmatpush1.msra.mxu0 %v34
  %717 = vmatprep.subr.mxu0 %v31
  %718 = vmatpush1.msra.mxu0 %v30
  %719 = vmatprep.subr.mxu0 %v27
  %720 = vmatpush1.msra.mxu0 %v26
  %721 = vmatprep.subr.mxu0 %v23
  %722 = vmatpush1.msra.mxu0 %v22
  %723 = vmatprep.subr.mxu0 0.0
  %724 = vmatpush2.msra.mxu0 0.0
  %725 = vmatprep.subr.mxu0 0.0
  %726 = vmatpush2.msra.mxu0 0.0
  %727 = vmatprep.subr.mxu0 0.0
  %728 = vmatpush2.msra.mxu0 0.0
  %729 = vmatprep.subr.mxu0 0.0
  %730 = vmatpush2.msra.mxu0 0.0
  %731 = vmatprep.subr.mxu0 0.0
  %732 = vmatpush2.msra.mxu0 0.0
  %733 = vmatprep.subr.mxu0 0.0
  %734 = vmatpush2.msra.mxu0 0.0
  %735 = vmatprep.subr.mxu0 0.0
  %736 = vmatpush2.msra.mxu0 0.0
  %737 = vmatprep.subr.mxu0 0.0
  %738 = vmatpush2.msra.mxu0 0.0
  %739 = vmatprep.subr.mxu0 0.0
  %740 = vmatpush2.msra.mxu0 0.0
  %741 = vmatprep.subr.mxu0 0.0
  %742 = vmatpush2.msra.mxu0 0.0
  %743 = vmatprep.subr.mxu0 0.0
  %744 = vmatpush2.msra.mxu0 0.0
  %745 = vmatprep.subr.mxu0 0.0
  %746 = vmatpush2.msra.mxu0 0.0
  %747 = vmatprep.subr.mxu0 0.0
  %748 = vmatpush2.msra.mxu0 0.0
  %749 = vmatprep.subr.mxu0 0.0
  %750 = vmatpush2.msra.mxu0 0.0
  %751 = vmatprep.subr.mxu0 0.0
  %752 = vmatpush2.msra.mxu0 0.0
  %753 = vmatprep.subr.mxu0 0.0
  %754 = vmatpush2.msra.mxu0 0.0
  %755 = vmatprep.mubr.f32.mxu0 0.0
  %756 = vmatmul.mubr.f32.gmra.mxu0 %v612
  %v757 = vpop.f32.mrf.mxu0
  %v758 = vadd.f32 0.0, %v757
  %v759 = vpop.f32.mrf.mxu0
  %v760 = vadd.f32 0.0, %v759
  %761 = vdwg.mxu0
  %v762 = vadd.f32 %v616, %v687
  %v763 = vadd.f32 %v617, %v689
  %v764 = vadd.f32 %v618, %v758
  %v765 = vadd.f32 %v619, %v760
  %v766 = vxor.u32 %v762, 2147483648
  %v767 = vmul.f32 %v766, 1.442695
  %v768 = vpow.pop %v767
  %v769 = vadd.f32 %v768, 1.0
  %v770 = vrcp.pop %v769
  %v771 = vmul.f32 1.0, %v770
  %v772 = vxor.u32 %v763, 2147483648
  %v773 = vmul.f32 %v772, 1.442695
  %v774 = vpow.pop %v773
  %v775 = vadd.f32 %v774, 1.0
  %v776 = vrcp.pop %v775
  %v777 = vmul.f32 1.0, %v776
  %v778 = vtanh.pop %v764
  %v779 = vxor.u32 %v765, 2147483648
  %v780 = vmul.f32 %v779, 1.442695
  %v781 = vpow.pop %v780
  %v782 = vadd.f32 %v781, 1.0
  %v783 = vrcp.pop %v782
  %v784 = vmul.f32 1.0, %v783
  %v785 = vmul.f32 %v777, %v610
  %v786 = vmul.f32 %v771, %v778
  %v787 = vadd.f32 %v785, %v786
  %v788 = vtanh.pop %v787
  %v789 = vmul.f32 %v784, %v788
  %s790 = scalar_lea.vmem %s2, 24
  %791 = vst [vmem:[%s790] sm:$0xff] %v789
  %s792 = scalar_lea.vmem %s0, 128
  %v793 = vld [vmem:[%s792] sm:$0xff]
  %v794 = vld [vmem:[%s792 + $0x8] sm:$0xff]
  %v795 = vld [vmem:[%s792 + $0x10] sm:$0xff]
  %v796 = vld [vmem:[%s792 + $0x18] sm:$0xff]
  %797 = vmatprep.subr.mxu0 %v81
  %798 = vmatpush1.msra.mxu0 %v80
  %799 = vmatprep.subr.mxu0 %v77
  %800 = vmatpush1.msra.mxu0 %v76
  %801 = vmatprep.subr.mxu0 %v73
  %802 = vmatpush1.msra.mxu0 %v72
  %803 = vmatprep.subr.mxu0 %v69
  %804 = vmatpush1.msra.mxu0 %v68
  %805 = vmatprep.subr.mxu0 %v65
  %806 = vmatpush1.msra.mxu0 %v64
  %807 = vmatprep.subr.mxu0 %v61
  %808 = vmatpush1.msra.mxu0 %v60
  %809 = vmatprep.subr.mxu0 %v57
  %810 = vmatpush1.msra.mxu0 %v56
  %811 = vmatprep.subr.mxu0 %v53
  %812 = vmatpush1.msra.mxu0 %v52
  %813 = vmatprep.subr.mxu0 %v49
  %814 = vmatpush1.msra.mxu0 %v48
  %815 = vmatprep.subr.mxu0 %v45
  %816 = vmatpush1.msra.mxu0 %v44
  %817 = vmatprep.subr.mxu0 %v41
  %818 = vmatpush1.msra.mxu0 %v40
  %819 = vmatprep.subr.mxu0 %v37
  %820 = vmatpush1.msra.mxu0 %v36
  %821 = vmatprep.subr.mxu0 %v33
  %822 = vmatpush1.msra.mxu0 %v32
  %823 = vmatprep.subr.mxu0 %v29
  %824 = vmatpush1.msra.mxu0 %v28
  %825 = vmatprep.subr.mxu0 %v25
  %826 = vmatpush1.msra.mxu0 %v24
  %827 = vmatprep.subr.mxu0 %v21
  %828 = vmatpush1.msra.mxu0 %v20
  %829 = vmatprep.subr.mxu0 0.0
  %830 = vmatpush2.msra.mxu0 0.0
  %831 = vmatprep.subr.mxu0 0.0
  %832 = vmatpush2.msra.mxu0 0.0
  %833 = vmatprep.subr.mxu0 0.0
  %834 = vmatpush2.msra.mxu0 0.0
  %835 = vmatprep.subr.mxu0 0.0
  %836 = vmatpush2.msra.mxu0 0.0
  %837 = vmatprep.subr.mxu0 0.0
  %838 = vmatpush2.msra.mxu0 0.0
  %839 = vmatprep.subr.mxu0 0.0
  %840 = vmatpush2.msra.mxu0 0.0
  %841 = vmatprep.subr.mxu0 0.0
  %842 = vmatpush2.msra.mxu0 0.0
  %843 = vmatprep.subr.mxu0 0.0
  %844 = vmatpush2.msra.mxu0 0.0
  %845 = vmatprep.subr.mxu0 0.0
  %846 = vmatpush2.msra.mxu0 0.0
  %847 = vmatprep.subr.mxu0 0.0
  %848 = vmatpush2.msra.mxu0 0.0
  %849 = vmatprep.subr.mxu0 0.0
  %850 = vmatpush2.msra.mxu0 0.0
  %851 = vmatprep.subr.mxu0 0.0
  %852 = vmatpush2.msra.mxu0 0.0
  %853 = vmatprep.subr.mxu0 0.0
  %854 = vmatpush2.msra.mxu0 0.0
  %855 = vmatprep.subr.mxu0 0.0
  %856 = vmatpush2.msra.mxu0 0.0
  %857 = vmatprep.subr.mxu0 0.0
  %858 = vmatpush2.msra.mxu0 0.0
  %859 = vmatprep.subr.mxu0 0.0
  %860 = vmatpush2.msra.mxu0 0.0
  %861 = vmatprep.mubr.f32.mxu0 0.0
  %862 = vmatmul.mubr.f32.gmra.mxu0 %v789
  %v863 = vpop.f32.mrf.mxu0
  %v864 = vadd.f32 0.0, %v863
  %v865 = vpop.f32.mrf.mxu0
  %v866 = vadd.f32 0.0, %v865
  %867 = vdwg.mxu0
  %868 = vmatprep.subr.mxu0 %v83
  %869 = vmatpush1.msra.mxu0 %v82
  %870 = vmatprep.subr.mxu0 %v79
  %871 = vmatpush1.msra.mxu0 %v78
  %872 = vmatprep.subr.mxu0 %v75
  %873 = vmatpush1.msra.mxu0 %v74
  %874 = vmatprep.subr.mxu0 %v71
  %875 = vmatpush1.msra.mxu0 %v70
  %876 = vmatprep.subr.mxu0 %v67
  %877 = vmatpush1.msra.mxu0 %v66
  %878 = vmatprep.subr.mxu0 %v63
  %879 = vmatpush1.msra.mxu0 %v62
  %880 = vmatprep.subr.mxu0 %v59
  %881 = vmatpush1.msra.mxu0 %v58
  %882 = vmatprep.subr.mxu0 %v55
  %883 = vmatpush1.msra.mxu0 %v54
  %884 = vmatprep.subr.mxu0 %v51
  %885 = vmatpush1.msra.mxu0 %v50
  %886 = vmatprep.subr.mxu0 %v47
  %887 = vmatpush1.msra.mxu0 %v46
  %888 = vmatprep.subr.mxu0 %v43
  %889 = vmatpush1.msra.mxu0 %v42
  %890 = vmatprep.subr.mxu0 %v39
  %891 = vmatpush1.msra.mxu0 %v38
  %892 = vmatprep.subr.mxu0 %v35
  %893 = vmatpush1.msra.mxu0 %v34
  %894 = vmatprep.subr.mxu0 %v31
  %895 = vmatpush1.msra.mxu0 %v30
  %896 = vmatprep.subr.mxu0 %v27
  %897 = vmatpush1.msra.mxu0 %v26
  %898 = vmatprep.subr.mxu0 %v23
  %899 = vmatpush1.msra.mxu0 %v22
  %900 = vmatprep.subr.mxu0 0.0
  %901 = vmatpush2.msra.mxu0 0.0
  %902 = vmatprep.subr.mxu0 0.0
  %903 = vmatpush2.msra.mxu0 0.0
  %904 = vmatprep.subr.mxu0 0.0
  %905 = vmatpush2.msra.mxu0 0.0
  %906 = vmatprep.subr.mxu0 0.0
  %907 = vmatpush2.msra.mxu0 0.0
  %908 = vmatprep.subr.mxu0 0.0
  %909 = vmatpush2.msra.mxu0 0.0
  %910 = vmatprep.subr.mxu0 0.0
  %911 = vmatpush2.msra.mxu0 0.0
  %912 = vmatprep.subr.mxu0 0.0
  %913 = vmatpush2.msra.mxu0 0.0
  %914 = vmatprep.subr.mxu0 0.0
  %915 = vmatpush2.msra.mxu0 0.0
  %916 = vmatprep.subr.mxu0 0.0
  %917 = vmatpush2.msra.mxu0 0.0
  %918 = vmatprep.subr.mxu0 0.0
  %919 = vmatpush2.msra.mxu0 0.0
  %920 = vmatprep.subr.mxu0 0.0
  %921 = vmatpush2.msra.mxu0 0.0
  %922 = vmatprep.subr.mxu0 0.0
  %923 = vmatpush2.msra.mxu0 0.0
  %924 = vmatprep.subr.mxu0 0.0
  %925 = vmatpush2.msra.mxu0 0.0
  %926 = vmatprep.subr.mxu0 0.0
  %927 = vmatpush2.msra.mxu0 0.0
  %928 = vmatprep.subr.mxu0 0.0
  %929 = vmatpush2.msra.mxu0 0.0
  %930 = vmatprep.subr.mxu0 0.0
  %931 = vmatpush2.msra.mxu0 0.0
  %932 = vmatprep.mubr.f32.mxu0 0.0
  %933 = vmatmul.mubr.f32.gmra.mxu0 %v789
  %v934 = vpop.f32.mrf.mxu0
  %v935 = vadd.f32 0.0, %v934
  %v936 = vpop.f32.mrf.mxu0
  %v937 = vadd.f32 0.0, %v936
  %938 = vdwg.mxu0
  %v939 = vadd.f32 %v793, %v864
  %v940 = vadd.f32 %v794, %v866
  %v941 = vadd.f32 %v795, %v935
  %v942 = vadd.f32 %v796, %v937
  %v943 = vxor.u32 %v939, 2147483648
  %v944 = vmul.f32 %v943, 1.442695
  %v945 = vpow.pop %v944
  %v946 = vadd.f32 %v945, 1.0
  %v947 = vrcp.pop %v946
  %v948 = vmul.f32 1.0, %v947
  %v949 = vxor.u32 %v940, 2147483648
  %v950 = vmul.f32 %v949, 1.442695
  %v951 = vpow.pop %v950
  %v952 = vadd.f32 %v951, 1.0
  %v953 = vrcp.pop %v952
  %v954 = vmul.f32 1.0, %v953
  %v955 = vtanh.pop %v941
  %v956 = vxor.u32 %v942, 2147483648
  %v957 = vmul.f32 %v956, 1.442695
  %v958 = vpow.pop %v957
  %v959 = vadd.f32 %v958, 1.0
  %v960 = vrcp.pop %v959
  %v961 = vmul.f32 1.0, %v960
  %v962 = vmul.f32 %v954, %v787
  %v963 = vmul.f32 %v948, %v955
  %v964 = vadd.f32 %v962, %v963
  %v965 = vtanh.pop %v964
  %v966 = vmul.f32 %v961, %v965
  %s967 = scalar_lea.vmem %s2, 32
  %968 = vst [vmem:[%s967] sm:$0xff] %v966
  %s969 = scalar_lea.vmem %s0, 160
  %v970 = vld [vmem:[%s969] sm:$0xff]
  %v971 = vld [vmem:[%s969 + $0x8] sm:$0xff]
  %v972 = vld [vmem:[%s969 + $0x10] sm:$0xff]
  %v973 = vld [vmem:[%s969 + $0x18] sm:$0xff]
  %974 = vmatprep.subr.mxu0 %v81
  %975 = vmatpush1.msra.mxu0 %v80
  %976 = vmatprep.subr.mxu0 %v77
  %977 = vmatpush1.msra.mxu0 %v76
  %978 = vmatprep.subr.mxu0 %v73
  %979 = vmatpush1.msra.mxu0 %v72
  %980 = vmatprep.subr.mxu0 %v69
  %981 = vmatpush1.msra.mxu0 %v68
  %982 = vmatprep.subr.mxu0 %v65
  %983 = vmatpush1.msra.mxu0 %v64
  %984 = vmatprep.subr.mxu0 %v61
  %985 = vmatpush1.msra.mxu0 %v60
  %986 = vmatprep.subr.mxu0 %v57
  %987 = vmatpush1.msra.mxu0 %v56
  %988 = vmatprep.subr.mxu0 %v53
  %989 = vmatpush1.msra.mxu0 %v52
  %990 = vmatprep.subr.mxu0 %v49
  %991 = vmatpush1.msra.mxu0 %v48
  %992 = vmatprep.subr.mxu0 %v45
  %993 = vmatpush1.msra.mxu0 %v44
  %994 = vmatprep.subr.mxu0 %v41
  %995 = vmatpush1.msra.mxu0 %v40
  %996 = vmatprep.subr.mxu0 %v37
  %997 = vmatpush1.msra.mxu0 %v36
  %998 = vmatprep.subr.mxu0 %v33
  %999 = vmatpush1.msra.mxu0 %v32
  %1000 = vmatprep.subr.mxu0 %v29
  %1001 = vmatpush1.msra.mxu0 %v28
  %1002 = vmatprep.subr.mxu0 %v25
  %1003 = vmatpush1.msra.mxu0 %v24
  %1004 = vmatprep.subr.mxu0 %v21
  %1005 = vmatpush1.msra.mxu0 %v20
  %1006 = vmatprep.subr.mxu0 0.0
  %1007 = vmatpush2.msra.mxu0 0.0
  %1008 = vmatprep.subr.mxu0 0.0
  %1009 = vmatpush2.msra.mxu0 0.0
  %1010 = vmatprep.subr.mxu0 0.0
  %1011 = vmatpush2.msra.mxu0 0.0
  %1012 = vmatprep.subr.mxu0 0.0
  %1013 = vmatpush2.msra.mxu0 0.0
  %1014 = vmatprep.subr.mxu0 0.0
  %1015 = vmatpush2.msra.mxu0 0.0
  %1016 = vmatprep.subr.mxu0 0.0
  %1017 = vmatpush2.msra.mxu0 0.0
  %1018 = vmatprep.subr.mxu0 0.0
  %1019 = vmatpush2.msra.mxu0 0.0
  %1020 = vmatprep.subr.mxu0 0.0
  %1021 = vmatpush2.msra.mxu0 0.0
  %1022 = vmatprep.subr.mxu0 0.0
  %1023 = vmatpush2.msra.mxu0 0.0
  %1024 = vmatprep.subr.mxu0 0.0
  %1025 = vmatpush2.msra.mxu0 0.0
  %1026 = vmatprep.subr.mxu0 0.0
  %1027 = vmatpush2.msra.mxu0 0.0
  %1028 = vmatprep.subr.mxu0 0.0
  %1029 = vmatpush2.msra.mxu0 0.0
  %1030 = vmatprep.subr.mxu0 0.0
  %1031 = vmatpush2.msra.mxu0 0.0
  %1032 = vmatprep.subr.mxu0 0.0
  %1033 = vmatpush2.msra.mxu0 0.0
  %1034 = vmatprep.subr.mxu0 0.0
  %1035 = vmatpush2.msra.mxu0 0.0
  %1036 = vmatprep.subr.mxu0 0.0
  %1037 = vmatpush2.msra.mxu0 0.0
  %1038 = vmatprep.mubr.f32.mxu0 0.0
  %1039 = vmatmul.mubr.f32.gmra.mxu0 %v966
  %v1040 = vpop.f32.mrf.mxu0
  %v1041 = vadd.f32 0.0, %v1040
  %v1042 = vpop.f32.mrf.mxu0
  %v1043 = vadd.f32 0.0, %v1042
  %1044 = vdwg.mxu0
  %1045 = vmatprep.subr.mxu0 %v83
  %1046 = vmatpush1.msra.mxu0 %v82
  %1047 = vmatprep.subr.mxu0 %v79
  %1048 = vmatpush1.msra.mxu0 %v78
  %1049 = vmatprep.subr.mxu0 %v75
  %1050 = vmatpush1.msra.mxu0 %v74
  %1051 = vmatprep.subr.mxu0 %v71
  %1052 = vmatpush1.msra.mxu0 %v70
  %1053 = vmatprep.subr.mxu0 %v67
  %1054 = vmatpush1.msra.mxu0 %v66
  %1055 = vmatprep.subr.mxu0 %v63
  %1056 = vmatpush1.msra.mxu0 %v62
  %1057 = vmatprep.subr.mxu0 %v59
  %1058 = vmatpush1.msra.mxu0 %v58
  %1059 = vmatprep.subr.mxu0 %v55
  %1060 = vmatpush1.msra.mxu0 %v54
  %1061 = vmatprep.subr.mxu0 %v51
  %1062 = vmatpush1.msra.mxu0 %v50
  %1063 = vmatprep.subr.mxu0 %v47
  %1064 = vmatpush1.msra.mxu0 %v46
  %1065 = vmatprep.subr.mxu0 %v43
  %1066 = vmatpush1.msra.mxu0 %v42
  %1067 = vmatprep.subr.mxu0 %v39
  %1068 = vmatpush1.msra.mxu0 %v38
  %1069 = vmatprep.subr.mxu0 %v35
  %1070 = vmatpush1.msra.mxu0 %v34
  %1071 = vmatprep.subr.mxu0 %v31
  %1072 = vmatpush1.msra.mxu0 %v30
  %1073 = vmatprep.subr.mxu0 %v27
  %1074 = vmatpush1.msra.mxu0 %v26
  %1075 = vmatprep.subr.mxu0 %v23
  %1076 = vmatpush1.msra.mxu0 %v22
  %1077 = vmatprep.subr.mxu0 0.0
  %1078 = vmatpush2.msra.mxu0 0.0
  %1079 = vmatprep.subr.mxu0 0.0
  %1080 = vmatpush2.msra.mxu0 0.0
  %1081 = vmatprep.subr.mxu0 0.0
  %1082 = vmatpush2.msra.mxu0 0.0
  %1083 = vmatprep.subr.mxu0 0.0
  %1084 = vmatpush2.msra.mxu0 0.0
  %1085 = vmatprep.subr.mxu0 0.0
  %1086 = vmatpush2.msra.mxu0 0.0
  %1087 = vmatprep.subr.mxu0 0.0
  %1088 = vmatpush2.msra.mxu0 0.0
  %1089 = vmatprep.subr.mxu0 0.0
  %1090 = vmatpush2.msra.mxu0 0.0
  %1091 = vmatprep.subr.mxu0 0.0
  %1092 = vmatpush2.msra.mxu0 0.0
  %1093 = vmatprep.subr.mxu0 0.0
  %1094 = vmatpush2.msra.mxu0 0.0
  %1095 = vmatprep.subr.mxu0 0.0
  %1096 = vmatpush2.msra.mxu0 0.0
  %1097 = vmatprep.subr.mxu0 0.0
  %1098 = vmatpush2.msra.mxu0 0.0
  %1099 = vmatprep.subr.mxu0 0.0
  %1100 = vmatpush2.msra.mxu0 0.0
  %1101 = vmatprep.subr.mxu0 0.0
  %1102 = vmatpush2.msra.mxu0 0.0
  %1103 = vmatprep.subr.mxu0 0.0
  %1104 = vmatpush2.msra.mxu0 0.0
  %1105 = vmatprep.subr.mxu0 0.0
  %1106 = vmatpush2.msra.mxu0 0.0
  %1107 = vmatprep.subr.mxu0 0.0
  %1108 = vmatpush2.msra.mxu0 0.0
  %1109 = vmatprep.mubr.f32.mxu0 0.0
  %1110 = vmatmul.mubr.f32.gmra.mxu0 %v966
  %v1111 = vpop.f32.mrf.mxu0
  %v1112 = vadd.f32 0.0, %v1111
  %v1113 = vpop.f32.mrf.mxu0
  %v1114 = vadd.f32 0.0, %v1113
  %1115 = vdwg.mxu0
  %v1116 = vadd.f32 %v970, %v1041
  %v1117 = vadd.f32 %v971, %v1043
  %v1118 = vadd.f32 %v972, %v1112
  %v1119 = vadd.f32 %v973, %v1114
  %v1120 = vxor.u32 %v1116, 2147483648
  %v1121 = vmul.f32 %v1120, 1.442695
  %v1122 = vpow.pop %v1121
  %v1123 = vadd.f32 %v1122, 1.0
  %v1124 = vrcp.pop %v1123
  %v1125 = vmul.f32 1.0, %v1124
  %v1126 = vxor.u32 %v1117, 2147483648
  %v1127 = vmul.f32 %v1126, 1.442695
  %v1128 = vpow.pop %v1127
  %v1129 = vadd.f32 %v1128, 1.0
  %v1130 = vrcp.pop %v1129
  %v1131 = vmul.f32 1.0, %v1130
  %v1132 = vtanh.pop %v1118
  %v1133 = vxor.u32 %v1119, 2147483648
  %v1134 = vmul.f32 %v1133, 1.442695
  %v1135 = vpow.pop %v1134
  %v1136 = vadd.f32 %v1135, 1.0
  %v1137 = vrcp.pop %v1136
  %v1138 = vmul.f32 1.0, %v1137
  %v1139 = vmul.f32 %v1131, %v964
  %v1140 = vmul.f32 %v1125, %v1132
  %v1141 = vadd.f32 %v1139, %v1140
  %v1142 = vtanh.pop %v1141
  %v1143 = vmul.f32 %v1138, %v1142
  %s1144 = scalar_lea.vmem %s2, 40
  %1145 = vst [vmem:[%s1144] sm:$0xff] %v1143
  %s1146 = scalar_lea.vmem %s0, 192
  %v1147 = vld [vmem:[%s1146] sm:$0xff]
  %v1148 = vld [vmem:[%s1146 + $0x8] sm:$0xff]
  %v1149 = vld [vmem:[%s1146 + $0x10] sm:$0xff]
  %v1150 = vld [vmem:[%s1146 + $0x18] sm:$0xff]
  %1151 = vmatprep.subr.mxu0 %v81
  %1152 = vmatpush1.msra.mxu0 %v80
  %1153 = vmatprep.subr.mxu0 %v77
  %1154 = vmatpush1.msra.mxu0 %v76
  %1155 = vmatprep.subr.mxu0 %v73
  %1156 = vmatpush1.msra.mxu0 %v72
  %1157 = vmatprep.subr.mxu0 %v69
  %1158 = vmatpush1.msra.mxu0 %v68
  %1159 = vmatprep.subr.mxu0 %v65
  %1160 = vmatpush1.msra.mxu0 %v64
  %1161 = vmatprep.subr.mxu0 %v61
  %1162 = vmatpush1.msra.mxu0 %v60
  %1163 = vmatprep.subr.mxu0 %v57
  %1164 = vmatpush1.msra.mxu0 %v56
  %1165 = vmatprep.subr.mxu0 %v53
  %1166 = vmatpush1.msra.mxu0 %v52
  %1167 = vmatprep.subr.mxu0 %v49
  %1168 = vmatpush1.msra.mxu0 %v48
  %1169 = vmatprep.subr.mxu0 %v45
  %1170 = vmatpush1.msra.mxu0 %v44
  %1171 = vmatprep.subr.mxu0 %v41
  %1172 = vmatpush1.msra.mxu0 %v40
  %1173 = vmatprep.subr.mxu0 %v37
  %1174 = vmatpush1.msra.mxu0 %v36
  %1175 = vmatprep.subr.mxu0 %v33
  %1176 = vmatpush1.msra.mxu0 %v32
  %1177 = vmatprep.subr.mxu0 %v29
  %1178 = vmatpush1.msra.mxu0 %v28
  %1179 = vmatprep.subr.mxu0 %v25
  %1180 = vmatpush1.msra.mxu0 %v24
  %1181 = vmatprep.subr.mxu0 %v21
  %1182 = vmatpush1.msra.mxu0 %v20
  %1183 = vmatprep.subr.mxu0 0.0
  %1184 = vmatpush2.msra.mxu0 0.0
  %1185 = vmatprep.subr.mxu0 0.0
  %1186 = vmatpush2.msra.mxu0 0.0
  %1187 = vmatprep.subr.mxu0 0.0
  %1188 = vmatpush2.msra.mxu0 0.0
  %1189 = vmatprep.subr.mxu0 0.0
  %1190 = vmatpush2.msra.mxu0 0.0
  %1191 = vmatprep.subr.mxu0 0.0
  %1192 = vmatpush2.msra.mxu0 0.0
  %1193 = vmatprep.subr.mxu0 0.0
  %1194 = vmatpush2.msra.mxu0 0.0
  %1195 = vmatprep.subr.mxu0 0.0
  %1196 = vmatpush2.msra.mxu0 0.0
  %1197 = vmatprep.subr.mxu0 0.0
  %1198 = vmatpush2.msra.mxu0 0.0
  %1199 = vmatprep.subr.mxu0 0.0
  %1200 = vmatpush2.msra.mxu0 0.0
  %1201 = vmatprep.subr.mxu0 0.0
  %1202 = vmatpush2.msra.mxu0 0.0
  %1203 = vmatprep.subr.mxu0 0.0
  %1204 = vmatpush2.msra.mxu0 0.0
  %1205 = vmatprep.subr.mxu0 0.0
  %1206 = vmatpush2.msra.mxu0 0.0
  %1207 = vmatprep.subr.mxu0 0.0
  %1208 = vmatpush2.msra.mxu0 0.0
  %1209 = vmatprep.subr.mxu0 0.0
  %1210 = vmatpush2.msra.mxu0 0.0
  %1211 = vmatprep.subr.mxu0 0.0
  %1212 = vmatpush2.msra.mxu0 0.0
  %1213 = vmatprep.subr.mxu0 0.0
  %1214 = vmatpush2.msra.mxu0 0.0
  %1215 = vmatprep.mubr.f32.mxu0 0.0
  %1216 = vmatmul.mubr.f32.gmra.mxu0 %v1143
  %v1217 = vpop.f32.mrf.mxu0
  %v1218 = vadd.f32 0.0, %v1217
  %v1219 = vpop.f32.mrf.mxu0
  %v1220 = vadd.f32 0.0, %v1219
  %1221 = vdwg.mxu0
  %1222 = vmatprep.subr.mxu0 %v83
  %1223 = vmatpush1.msra.mxu0 %v82
  %1224 = vmatprep.subr.mxu0 %v79
  %1225 = vmatpush1.msra.mxu0 %v78
  %1226 = vmatprep.subr.mxu0 %v75
  %1227 = vmatpush1.msra.mxu0 %v74
  %1228 = vmatprep.subr.mxu0 %v71
  %1229 = vmatpush1.msra.mxu0 %v70
  %1230 = vmatprep.subr.mxu0 %v67
  %1231 = vmatpush1.msra.mxu0 %v66
  %1232 = vmatprep.subr.mxu0 %v63
  %1233 = vmatpush1.msra.mxu0 %v62
  %1234 = vmatprep.subr.mxu0 %v59
  %1235 = vmatpush1.msra.mxu0 %v58
  %1236 = vmatprep.subr.mxu0 %v55
  %1237 = vmatpush1.msra.mxu0 %v54
  %1238 = vmatprep.subr.mxu0 %v51
  %1239 = vmatpush1.msra.mxu0 %v50
  %1240 = vmatprep.subr.mxu0 %v47
  %1241 = vmatpush1.msra.mxu0 %v46
  %1242 = vmatprep.subr.mxu0 %v43
  %1243 = vmatpush1.msra.mxu0 %v42
  %1244 = vmatprep.subr.mxu0 %v39
  %1245 = vmatpush1.msra.mxu0 %v38
  %1246 = vmatprep.subr.mxu0 %v35
  %1247 = vmatpush1.msra.mxu0 %v34
  %1248 = vmatprep.subr.mxu0 %v31
  %1249 = vmatpush1.msra.mxu0 %v30
  %1250 = vmatprep.subr.mxu0 %v27
  %1251 = vmatpush1.msra.mxu0 %v26
  %1252 = vmatprep.subr.mxu0 %v23
  %1253 = vmatpush1.msra.mxu0 %v22
  %1254 = vmatprep.subr.mxu0 0.0
  %1255 = vmatpush2.msra.mxu0 0.0
  %1256 = vmatprep.subr.mxu0 0.0
  %1257 = vmatpush2.msra.mxu0 0.0
  %1258 = vmatprep.subr.mxu0 0.0
  %1259 = vmatpush2.msra.mxu0 0.0
  %1260 = vmatprep.subr.mxu0 0.0
  %1261 = vmatpush2.msra.mxu0 0.0
  %1262 = vmatprep.subr.mxu0 0.0
  %1263 = vmatpush2.msra.mxu0 0.0
  %1264 = vmatprep.subr.mxu0 0.0
  %1265 = vmatpush2.msra.mxu0 0.0
  %1266 = vmatprep.subr.mxu0 0.0
  %1267 = vmatpush2.msra.mxu0 0.0
  %1268 = vmatprep.subr.mxu0 0.0
  %1269 = vmatpush2.msra.mxu0 0.0
  %1270 = vmatprep.subr.mxu0 0.0
  %1271 = vmatpush2.msra.mxu0 0.0
  %1272 = vmatprep.subr.mxu0 0.0
  %1273 = vmatpush2.msra.mxu0 0.0
  %1274 = vmatprep.subr.mxu0 0.0
  %1275 = vmatpush2.msra.mxu0 0.0
  %1276 = vmatprep.subr.mxu0 0.0
  %1277 = vmatpush2.msra.mxu0 0.0
  %1278 = vmatprep.subr.mxu0 0.0
  %1279 = vmatpush2.msra.mxu0 0.0
  %1280 = vmatprep.subr.mxu0 0.0
  %1281 = vmatpush2.msra.mxu0 0.0
  %1282 = vmatprep.subr.mxu0 0.0
  %1283 = vmatpush2.msra.mxu0 0.0
  %1284 = vmatprep.subr.mxu0 0.0
  %1285 = vmatpush2.msra.mxu0 0.0
  %1286 = vmatprep.mubr.f32.mxu0 0.0
  %1287 = vmatmul.mubr.f32.gmra.mxu0 %v1143
  %v1288 = vpop.f32.mrf.mxu0
  %v1289 = vadd.f32 0.0, %v1288
  %v1290 = vpop.f32.mrf.mxu0
  %v1291 = vadd.f32 0.0, %v1290
  %1292 = vdwg.mxu0
  %v1293 = vadd.f32 %v1147, %v1218
  %v1294 = vadd.f32 %v1148, %v1220
  %v1295 = vadd.f32 %v1149, %v1289
  %v1296 = vadd.f32 %v1150, %v1291
  %v1297 = vxor.u32 %v1293, 2147483648
  %v1298 = vmul.f32 %v1297, 1.442695
  %v1299 = vpow.pop %v1298
  %v1300 = vadd.f32 %v1299, 1.0
  %v1301 = vrcp.pop %v1300
  %v1302 = vmul.f32 1.0, %v1301
  %v1303 = vxor.u32 %v1294, 2147483648
  %v1304 = vmul.f32 %v1303, 1.442695
  %v1305 = vpow.pop %v1304
  %v1306 = vadd.f32 %v1305, 1.0
  %v1307 = vrcp.pop %v1306
  %v1308 = vmul.f32 1.0, %v1307
  %v1309 = vtanh.pop %v1295
  %v1310 = vxor.u32 %v1296, 2147483648
  %v1311 = vmul.f32 %v1310, 1.442695
  %v1312 = vpow.pop %v1311
  %v1313 = vadd.f32 %v1312, 1.0
  %v1314 = vrcp.pop %v1313
  %v1315 = vmul.f32 1.0, %v1314
  %v1316 = vmul.f32 %v1308, %v1141
  %v1317 = vmul.f32 %v1302, %v1309
  %v1318 = vadd.f32 %v1316, %v1317
  %v1319 = vtanh.pop %v1318
  %v1320 = vmul.f32 %v1315, %v1319
  %s1321 = scalar_lea.vmem %s2, 48
  %1322 = vst [vmem:[%s1321] sm:$0xff] %v1320
  %s1323 = scalar_lea.vmem %s0, 224
  %v1324 = vld [vmem:[%s1323] sm:$0xff]
  %v1325 = vld [vmem:[%s1323 + $0x8] sm:$0xff]
  %v1326 = vld [vmem:[%s1323 + $0x10] sm:$0xff]
  %v1327 = vld [vmem:[%s1323 + $0x18] sm:$0xff]
  %1328 = vmatprep.subr.mxu0 %v81
  %1329 = vmatpush1.msra.mxu0 %v80
  %1330 = vmatprep.subr.mxu0 %v77
  %1331 = vmatpush1.msra.mxu0 %v76
  %1332 = vmatprep.subr.mxu0 %v73
  %1333 = vmatpush1.msra.mxu0 %v72
  %1334 = vmatprep.subr.mxu0 %v69
  %1335 = vmatpush1.msra.mxu0 %v68
  %1336 = vmatprep.subr.mxu0 %v65
  %1337 = vmatpush1.msra.mxu0 %v64
  %1338 = vmatprep.subr.mxu0 %v61
  %1339 = vmatpush1.msra.mxu0 %v60
  %1340 = vmatprep.subr.mxu0 %v57
  %1341 = vmatpush1.msra.mxu0 %v56
  %1342 = vmatprep.subr.mxu0 %v53
  %1343 = vmatpush1.msra.mxu0 %v52
  %1344 = vmatprep.subr.mxu0 %v49
  %1345 = vmatpush1.msra.mxu0 %v48
  %1346 = vmatprep.subr.mxu0 %v45
  %1347 = vmatpush1.msra.mxu0 %v44
  %1348 = vmatprep.subr.mxu0 %v41
  %1349 = vmatpush1.msra.mxu0 %v40
  %1350 = vmatprep.subr.mxu0 %v37
  %1351 = vmatpush1.msra.mxu0 %v36
  %1352 = vmatprep.subr.mxu0 %v33
  %1353 = vmatpush1.msra.mxu0 %v32
  %1354 = vmatprep.subr.mxu0 %v29
  %1355 = vmatpush1.msra.mxu0 %v28
  %1356 = vmatprep.subr.mxu0 %v25
  %1357 = vmatpush1.msra.mxu0 %v24
  %1358 = vmatprep.subr.mxu0 %v21
  %1359 = vmatpush1.msra.mxu0 %v20
  %1360 = vmatprep.subr.mxu0 0.0
  %1361 = vmatpush2.msra.mxu0 0.0
  %1362 = vmatprep.subr.mxu0 0.0
  %1363 = vmatpush2.msra.mxu0 0.0
  %1364 = vmatprep.subr.mxu0 0.0
  %1365 = vmatpush2.msra.mxu0 0.0
  %1366 = vmatprep.subr.mxu0 0.0
  %1367 = vmatpush2.msra.mxu0 0.0
  %1368 = vmatprep.subr.mxu0 0.0
  %1369 = vmatpush2.msra.mxu0 0.0
  %1370 = vmatprep.subr.mxu0 0.0
  %1371 = vmatpush2.msra.mxu0 0.0
  %1372 = vmatprep.subr.mxu0 0.0
  %1373 = vmatpush2.msra.mxu0 0.0
  %1374 = vmatprep.subr.mxu0 0.0
  %1375 = vmatpush2.msra.mxu0 0.0
  %1376 = vmatprep.subr.mxu0 0.0
  %1377 = vmatpush2.msra.mxu0 0.0
  %1378 = vmatprep.subr.mxu0 0.0
  %1379 = vmatpush2.msra.mxu0 0.0
  %1380 = vmatprep.subr.mxu0 0.0
  %1381 = vmatpush2.msra.mxu0 0.0
  %1382 = vmatprep.subr.mxu0 0.0
  %1383 = vmatpush2.msra.mxu0 0.0
  %1384 = vmatprep.subr.mxu0 0.0
  %1385 = vmatpush2.msra.mxu0 0.0
  %1386 = vmatprep.subr.mxu0 0.0
  %1387 = vmatpush2.msra.mxu0 0.0
  %1388 = vmatprep.subr.mxu0 0.0
  %1389 = vmatpush2.msra.mxu0 0.0
  %1390 = vmatprep.subr.mxu0 0.0
  %1391 = vmatpush2.msra.mxu0 0.0
  %1392 = vmatprep.mubr.f32.mxu0 0.0
  %1393 = vmatmul.mubr.f32.gmra.mxu0 %v1320
  %v1394 = vpop.f32.mrf.mxu0
  %v1395 = vadd.f32 0.0, %v1394
  %v1396 = vpop.f32.mrf.mxu0
  %v1397 = vadd.f32 0.0, %v1396
  %1398 = vdwg.mxu0
  %1399 = vmatprep.subr.mxu0 %v83
  %1400 = vmatpush1.msra.mxu0 %v82
  %1401 = vmatprep.subr.mxu0 %v79
  %1402 = vmatpush1.msra.mxu0 %v78
  %1403 = vmatprep.subr.mxu0 %v75
  %1404 = vmatpush1.msra.mxu0 %v74
  %1405 = vmatprep.subr.mxu0 %v71
  %1406 = vmatpush1.msra.mxu0 %v70
  %1407 = vmatprep.subr.mxu0 %v67
  %1408 = vmatpush1.msra.mxu0 %v66
  %1409 = vmatprep.subr.mxu0 %v63
  %1410 = vmatpush1.msra.mxu0 %v62
  %1411 = vmatprep.subr.mxu0 %v59
  %1412 = vmatpush1.msra.mxu0 %v58
  %1413 = vmatprep.subr.mxu0 %v55
  %1414 = vmatpush1.msra.mxu0 %v54
  %1415 = vmatprep.subr.mxu0 %v51
  %1416 = vmatpush1.msra.mxu0 %v50
  %1417 = vmatprep.subr.mxu0 %v47
  %1418 = vmatpush1.msra.mxu0 %v46
  %1419 = vmatprep.subr.mxu0 %v43
  %1420 = vmatpush1.msra.mxu0 %v42
  %1421 = vmatprep.subr.mxu0 %v39
  %1422 = vmatpush1.msra.mxu0 %v38
  %1423 = vmatprep.subr.mxu0 %v35
  %1424 = vmatpush1.msra.mxu0 %v34
  %1425 = vmatprep.subr.mxu0 %v31
  %1426 = vmatpush1.msra.mxu0 %v30
  %1427 = vmatprep.subr.mxu0 %v27
  %1428 = vmatpush1.msra.mxu0 %v26
  %1429 = vmatprep.subr.mxu0 %v23
  %1430 = vmatpush1.msra.mxu0 %v22
  %1431 = vmatprep.subr.mxu0 0.0
  %1432 = vmatpush2.msra.mxu0 0.0
  %1433 = vmatprep.subr.mxu0 0.0
  %1434 = vmatpush2.msra.mxu0 0.0
  %1435 = vmatprep.subr.mxu0 0.0
  %1436 = vmatpush2.msra.mxu0 0.0
  %1437 = vmatprep.subr.mxu0 0.0
  %1438 = vmatpush2.msra.mxu0 0.0
  %1439 = vmatprep.subr.mxu0 0.0
  %1440 = vmatpush2.msra.mxu0 0.0
  %1441 = vmatprep.subr.mxu0 0.0
  %1442 = vmatpush2.msra.mxu0 0.0
  %1443 = vmatprep.subr.mxu0 0.0
  %1444 = vmatpush2.msra.mxu0 0.0
  %1445 = vmatprep.subr.mxu0 0.0
  %1446 = vmatpush2.msra.mxu0 0.0
  %1447 = vmatprep.subr.mxu0 0.0
  %1448 = vmatpush2.msra.mxu0 0.0
  %1449 = vmatprep.subr.mxu0 0.0
  %1450 = vmatpush2.msra.mxu0 0.0
  %1451 = vmatprep.subr.mxu0 0.0
  %1452 = vmatpush2.msra.mxu0 0.0
  %1453 = vmatprep.subr.mxu0 0.0
  %1454 = vmatpush2.msra.mxu0 0.0
  %1455 = vmatprep.subr.mxu0 0.0
  %1456 = vmatpush2.msra.mxu0 0.0
  %1457 = vmatprep.subr.mxu0 0.0
  %1458 = vmatpush2.msra.mxu0 0.0
  %1459 = vmatprep.subr.mxu0 0.0
  %1460 = vmatpush2.msra.mxu0 0.0
  %1461 = vmatprep.subr.mxu0 0.0
  %1462 = vmatpush2.msra.mxu0 0.0
  %1463 = vmatprep.mubr.f32.mxu0 0.0
  %1464 = vmatmul.mubr.f32.gmra.mxu0 %v1320
  %v1465 = vpop.f32.mrf.mxu0
  %v1466 = vadd.f32 0.0, %v1465
  %v1467 = vpop.f32.mrf.mxu0
  %v1468 = vadd.f32 0.0, %v1467
  %1469 = vdwg.mxu0
  %v1470 = vadd.f32 %v1324, %v1395
  %v1471 = vadd.f32 %v1325, %v1397
  %v1472 = vadd.f32 %v1326, %v1466
  %v1473 = vadd.f32 %v1327, %v1468
  %v1474 = vxor.u32 %v1470, 2147483648
  %v1475 = vmul.f32 %v1474, 1.442695
  %v1476 = vpow.pop %v1475
  %v1477 = vadd.f32 %v1476, 1.0
  %v1478 = vrcp.pop %v1477
  %v1479 = vmul.f32 1.0, %v1478
  %v1480 = vxor.u32 %v1471, 2147483648
  %v1481 = vmul.f32 %v1480, 1.442695
  %v1482 = vpow.pop %v1481
  %v1483 = vadd.f32 %v1482, 1.0
  %v1484 = vrcp.pop %v1483
  %v1485 = vmul.f32 1.0, %v1484
  %v1486 = vtanh.pop %v1472
  %v1487 = vxor.u32 %v1473, 2147483648
  %v1488 = vmul.f32 %v1487, 1.442695
  %v1489 = vpow.pop %v1488
  %v1490 = vadd.f32 %v1489, 1.0
  %v1491 = vrcp.pop %v1490
  %v1492 = vmul.f32 1.0, %v1491
  %v1493 = vmul.f32 %v1485, %v1318
  %v1494 = vmul.f32 %v1479, %v1486
  %v1495 = vadd.f32 %v1493, %v1494
  %v1496 = vtanh.pop %v1495
  %v1497 = vmul.f32 %v1492, %v1496
  %s1498 = scalar_lea.vmem %s2, 56
  %1499 = vst [vmem:[%s1498] sm:$0xff] %v1497
  %1500 = vst [vmem:[#allocation2] sm:$0xff] %v1497
  %1501 = vst [vmem:[#allocation3] sm:$0xff] %v1495
  // Predicated region
  $region14: #{encoder_forward.2} parent=0 // pred_check
    %p1502 = pneg %p14
  $region15: #{encoder_forward.2} parent=0 // pred_check_branch
    %1504 = sbr.rel (%p1502) target = $region17
  $region16: #{encoder_forward.2} parent=0 // pred_region
    %1505 = vst [vmem:[%s3] sm:$0xff] %v1497
    %1506 = vst [vmem:[%s4] sm:$0xff] %v1495
  $region17: #{encoder_forward.2} parent=0 // pred_fallthru
    _
  // Predicated region
  $region18: #{encoder_forward.2} parent=0 // pred_check
    _
  $region19: #{encoder_forward.2} parent=0 // pred_check_branch
    %1508 = sbr.rel (0) target = $region21
  $region20: #{encoder_forward.2} parent=0 // pred_region
    _
  $region21: #{encoder_forward.2} parent=0 // pred_fallthru
    _
  // Predicated region
  $region22: #{encoder_forward.2} parent=0 // pred_check
    _
  $region23: #{encoder_forward.2} parent=0 // pred_check_branch
    %1510 = sbr.rel (0) target = $region25
  $region24: #{encoder_forward.2} parent=0 // pred_region
    _
  $region25: #{encoder_forward.2} parent=0 // pred_fallthru
    _
  // Predicated region
  $region26: #{encoder_forward.2} parent=0 // pred_check
    _
  $region27: #{encoder_forward.2} parent=0 // pred_check_branch
    %1512 = sbr.rel (0) target = $region29
  $region28: #{encoder_forward.2} parent=0 // pred_region
    _
  $region29: #{encoder_forward.2} parent=0 // pred_fallthru
    _
  // Predicated region
  $region30: #{encoder_forward.2} parent=0 // pred_check
    _
  $region31: #{encoder_forward.2} parent=0 // pred_check_branch
    %1514 = sbr.rel (0) target = $region33
  $region32: #{encoder_forward.2} parent=0 // pred_region
    _
  $region33: #{encoder_forward.2} parent=0 // pred_fallthru
    _
  // Predicated region
  $region34: #{encoder_forward.2} parent=0 // pred_check
    _
  $region35: #{encoder_forward.2} parent=0 // pred_check_branch
    %1516 = sbr.rel (0) target = $region37
  $region36: #{encoder_forward.2} parent=0 // pred_region
    _
  $region37: #{encoder_forward.2} parent=0 // pred_fallthru
    _
  // Predicated region
  $region38: #{encoder_forward.2} parent=0 // pred_check
    _
  $region39: #{encoder_forward.2} parent=0 // pred_check_branch
    %1518 = sbr.rel (0) target = $region41
  $region40: #{encoder_forward.2} parent=0 // pred_region
    _
  $region41: #{encoder_forward.2} parent=0 // pred_fallthru
    _

// kernel: encoder_forward.3
$region0: #{encoder_forward.3}
  #allocation0 [shape = 'u32[]', space=smem, size = 0x4, offset = 0x4, fixed_abs, tag = 'smem constant byte address 0x4 - core index']
  #allocation1 [shape = 'u32[144,128]{1,0:T(1,128)}', space=vmem, size = 0x12000, scoped, tag = 'internal scratch']
  #allocation2 [shape = 'f32[8,128]{1,0:T(8,128)}', space=vmem, size = 0x1000, scoped, tag = 'scratch operand']
  #allocation3 [shape = 'f32[8,128]{1,0:T(8,128)}', space=vmem, size = 0x1000, scoped, tag = 'scratch operand']
  %s0 = inlined_call_operand.vmem [shape: f32[8,8,512], index: 0, kind: input, shape index: {}]
  %s1 = inlined_call_operand.vmem [shape: f32[128,512], index: 1, kind: input, shape index: {}]
  %s2 = inlined_call_operand.hbm [shape: f32[8,8,128], index: 2, kind: output, shape index: {0}]
  %s3 = inlined_call_operand.vmem [shape: f32[8,128], index: 3, kind: output, shape index: {1}]
  %s4 = inlined_call_operand.vmem [shape: f32[8,128], index: 4, kind: output, shape index: {2}]
  %5 = xla_tuple %s2, %s3, %s4
  %s6 = sld [smem:[#allocation0]]
  $region42: #{encoder_forward.3} parent=0
    _
  %s8 = ssub.s32 1, %s6
  %s9 = scalar_select 0, %s8, %s6
  $region1: #{encoder_forward.3} parent=0
    #allocation4 [shape = 'u8[32768]{0}', space=vmem, size = 0x8000, scoped, tag = 'output window, operand 0, single buffered']
    #allocation5 [shape = 's32[1]{0}', space=sflag, size = 0x4, scoped, tag = 'scoped memory for encoder_forward.3']
    %10 = vsyncpa [#allocation5], 0
    // Predicated region
    $region2: #{encoder_forward.3} parent=1 // pred_check
      _
    $region3: #{encoder_forward.3} parent=1 // pred_check_branch
      %12 = sbr.rel (0) target = $region5
    $region4: #{encoder_forward.3} parent=1 // pred_region
      _
    $region5: #{encoder_forward.3} parent=1 // pred_fallthru
      _
    // Predicated region
    $region6: #{encoder_forward.3} parent=1 // pred_check
      _
    $region7: #{encoder_forward.3} parent=1 // pred_check_branch
      %14 = sbr.rel (0) target = $region9
    $region8: #{encoder_forward.3} parent=1 // pred_region
      _
    $region9: #{encoder_forward.3} parent=1 // pred_fallthru
      _
    %p15 = scmp.eq.s32.totalorder 0, 0
    // Predicated region
    $region10: #{encoder_forward.3} parent=1 // pred_check
      %p16 = pneg %p15
    $region11: #{encoder_forward.3} parent=1 // pred_check_branch
      %18 = sbr.rel (%p16) target = $region13
    $region12: #{encoder_forward.3} parent=1 // pred_region
      %19 = vst [vmem:[#allocation2] sm:$0xff] 0.0
      %20 = vst [vmem:[#allocation3] sm:$0xff] 0.0
    $region13: #{encoder_forward.3} parent=1 // pred_fallthru
      _
    %v21 = vld [vmem:[%s1] sm:$0xff]
    %v22 = vld [vmem:[%s1 + $0x8] sm:$0xff]
    %v23 = vld [vmem:[%s1 + $0x10] sm:$0xff]
    %v24 = vld [vmem:[%s1 + $0x18] sm:$0xff]
    %v25 = vld [vmem:[%s1 + $0x20] sm:$0xff]
    %v26 = vld [vmem:[%s1 + $0x28] sm:$0xff]
    %v27 = vld [vmem:[%s1 + $0x30] sm:$0xff]
    %v28 = vld [vmem:[%s1 + $0x38] sm:$0xff]
    %v29 = vld [vmem:[%s1 + $0x40] sm:$0xff]
    %v30 = vld [vmem:[%s1 + $0x48] sm:$0xff]
    %v31 = vld [vmem:[%s1 + $0x50] sm:$0xff]
    %v32 = vld [vmem:[%s1 + $0x58] sm:$0xff]
    %v33 = vld [vmem:[%s1 + $0x60] sm:$0xff]
    %v34 = vld [vmem:[%s1 + $0x68] sm:$0xff]
    %v35 = vld [vmem:[%s1 + $0x70] sm:$0xff]
    %v36 = vld [vmem:[%s1 + $0x78] sm:$0xff]
    %v37 = vld [vmem:[%s1 + $0x80] sm:$0xff]
    %v38 = vld [vmem:[%s1 + $0x88] sm:$0xff]
    %v39 = vld [vmem:[%s1 + $0x90] sm:$0xff]
    %v40 = vld [vmem:[%s1 + $0x98] sm:$0xff]
    %v41 = vld [vmem:[%s1 + $0xa0] sm:$0xff]
    %v42 = vld [vmem:[%s1 + $0xa8] sm:$0xff]
    %v43 = vld [vmem:[%s1 + $0xb0] sm:$0xff]
    %v44 = vld [vmem:[%s1 + $0xb8] sm:$0xff]
    %v45 = vld [vmem:[%s1 + $0xc0] sm:$0xff]
    %v46 = vld [vmem:[%s1 + $0xc8] sm:$0xff]
    %v47 = vld [vmem:[%s1 + $0xd0] sm:$0xff]
    %v48 = vld [vmem:[%s1 + $0xd8] sm:$0xff]
    %v49 = vld [vmem:[%s1 + $0xe0] sm:$0xff]
    %v50 = vld [vmem:[%s1 + $0xe8] sm:$0xff]
    %v51 = vld [vmem:[%s1 + $0xf0] sm:$0xff]
    %v52 = vld [vmem:[%s1 + $0xf8] sm:$0xff]
    %v53 = vld [vmem:[%s1 + $0x100] sm:$0xff]
    %v54 = vld [vmem:[%s1 + $0x108] sm:$0xff]
    %v55 = vld [vmem:[%s1 + $0x110] sm:$0xff]
    %v56 = vld [vmem:[%s1 + $0x118] sm:$0xff]
    %v57 = vld [vmem:[%s1 + $0x120] sm:$0xff]
    %v58 = vld [vmem:[%s1 + $0x128] sm:$0xff]
    %v59 = vld [vmem:[%s1 + $0x130] sm:$0xff]
    %v60 = vld [vmem:[%s1 + $0x138] sm:$0xff]
    %v61 = vld [vmem:[%s1 + $0x140] sm:$0xff]
    %v62 = vld [vmem:[%s1 + $0x148] sm:$0xff]
    %v63 = vld [vmem:[%s1 + $0x150] sm:$0xff]
    %v64 = vld [vmem:[%s1 + $0x158] sm:$0xff]
    %v65 = vld [vmem:[%s1 + $0x160] sm:$0xff]
    %v66 = vld [vmem:[%s1 + $0x168] sm:$0xff]
    %v67 = vld [vmem:[%s1 + $0x170] sm:$0xff]
    %v68 = vld [vmem:[%s1 + $0x178] sm:$0xff]
    %v69 = vld [vmem:[%s1 + $0x180] sm:$0xff]
    %v70 = vld [vmem:[%s1 + $0x188] sm:$0xff]
    %v71 = vld [vmem:[%s1 + $0x190] sm:$0xff]
    %v72 = vld [vmem:[%s1 + $0x198] sm:$0xff]
    %v73 = vld [vmem:[%s1 + $0x1a0] sm:$0xff]
    %v74 = vld [vmem:[%s1 + $0x1a8] sm:$0xff]
    %v75 = vld [vmem:[%s1 + $0x1b0] sm:$0xff]
    %v76 = vld [vmem:[%s1 + $0x1b8] sm:$0xff]
    %v77 = vld [vmem:[%s1 + $0x1c0] sm:$0xff]
    %v78 = vld [vmem:[%s1 + $0x1c8] sm:$0xff]
    %v79 = vld [vmem:[%s1 + $0x1d0] sm:$0xff]
    %v80 = vld [vmem:[%s1 + $0x1d8] sm:$0xff]
    %v81 = vld [vmem:[%s1 + $0x1e0] sm:$0xff]
    %v82 = vld [vmem:[%s1 + $0x1e8] sm:$0xff]
    %v83 = vld [vmem:[%s1 + $0x1f0] sm:$0xff]
    %v84 = vld [vmem:[%s1 + $0x1f8] sm:$0xff]
    %v85 = vld [vmem:[#allocation2] sm:$0xff]
    %v86 = vld [vmem:[#allocation3] sm:$0xff]
    %v87 = vld [vmem:[%s0] sm:$0xff]
    %v88 = vld [vmem:[%s0 + $0x8] sm:$0xff]
    %v89 = vld [vmem:[%s0 + $0x10] sm:$0xff]
    %v90 = vld [vmem:[%s0 + $0x18] sm:$0xff]
    %91 = vmatprep.subr.mxu0 %v82
    %92 = vmatpush1.msra.mxu0 %v81
    %93 = vmatprep.subr.mxu0 %v78
    %94 = vmatpush1.msra.mxu0 %v77
    %95 = vmatprep.subr.mxu0 %v74
    %96 = vmatpush1.msra.mxu0 %v73
    %97 = vmatprep.subr.mxu0 %v70
    %98 = vmatpush1.msra.mxu0 %v69
    %99 = vmatprep.subr.mxu0 %v66
    %100 = vmatpush1.msra.mxu0 %v65
    %101 = vmatprep.subr.mxu0 %v62
    %102 = vmatpush1.msra.mxu0 %v61
    %103 = vmatprep.subr.mxu0 %v58
    %104 = vmatpush1.msra.mxu0 %v57
    %105 = vmatprep.subr.mxu0 %v54
    %106 = vmatpush1.msra.mxu0 %v53
    %107 = vmatprep.subr.mxu0 %v50
    %108 = vmatpush1.msra.mxu0 %v49
    %109 = vmatprep.subr.mxu0 %v46
    %110 = vmatpush1.msra.mxu0 %v45
    %111 = vmatprep.subr.mxu0 %v42
    %112 = vmatpush1.msra.mxu0 %v41
    %113 = vmatprep.subr.mxu0 %v38
    %114 = vmatpush1.msra.mxu0 %v37
    %115 = vmatprep.subr.mxu0 %v34
    %116 = vmatpush1.msra.mxu0 %v33
    %117 = vmatprep.subr.mxu0 %v30
    %118 = vmatpush1.msra.mxu0 %v29
    %119 = vmatprep.subr.mxu0 %v26
    %120 = vmatpush1.msra.mxu0 %v25
    %121 = vmatprep.subr.mxu0 %v22
    %122 = vmatpush1.msra.mxu0 %v21
    %123 = vmatprep.subr.mxu0 0.0
    %124 = vmatpush2.msra.mxu0 0.0
    %125 = vmatprep.subr.mxu0 0.0
    %126 = vmatpush2.msra.mxu0 0.0
    %127 = vmatprep.subr.mxu0 0.0
    %128 = vmatpush2.msra.mxu0 0.0
    %129 = vmatprep.subr.mxu0 0.0
    %130 = vmatpush2.msra.mxu0 0.0
    %131 = vmatprep.subr.mxu0 0.0
    %132 = vmatpush2.msra.mxu0 0.0
    %133 = vmatprep.subr.mxu0 0.0
    %134 = vmatpush2.msra.mxu0 0.0
    %135 = vmatprep.subr.mxu0 0.0
    %136 = vmatpush2.msra.mxu0 0.0
    %137 = vmatprep.subr.mxu0 0.0
    %138 = vmatpush2.msra.mxu0 0.0
    %139 = vmatprep.subr.mxu0 0.0
    %140 = vmatpush2.msra.mxu0 0.0
    %141 = vmatprep.subr.mxu0 0.0
    %142 = vmatpush2.msra.mxu0 0.0
    %143 = vmatprep.subr.mxu0 0.0
    %144 = vmatpush2.msra.mxu0 0.0
    %145 = vmatprep.subr.mxu0 0.0
    %146 = vmatpush2.msra.mxu0 0.0
    %147 = vmatprep.subr.mxu0 0.0
    %148 = vmatpush2.msra.mxu0 0.0
    %149 = vmatprep.subr.mxu0 0.0
    %150 = vmatpush2.msra.mxu0 0.0
    %151 = vmatprep.subr.mxu0 0.0
    %152 = vmatpush2.msra.mxu0 0.0
    %153 = vmatprep.subr.mxu0 0.0
    %154 = vmatpush2.msra.mxu0 0.0
    %155 = vmatprep.mubr.f32.mxu0 0.0
    %156 = vmatmul.mubr.f32.gmra.mxu0 %v85
    %v157 = vpop.f32.mrf.mxu0
    %v158 = vadd.f32 0.0, %v157
    %v159 = vpop.f32.mrf.mxu0
    %v160 = vadd.f32 0.0, %v159
    %161 = vdwg.mxu0
    %162 = vmatprep.subr.mxu0 %v84
    %163 = vmatpush1.msra.mxu0 %v83
    %164 = vmatprep.subr.mxu0 %v80
    %165 = vmatpush1.msra.mxu0 %v79
    %166 = vmatprep.subr.mxu0 %v76
    %167 = vmatpush1.msra.mxu0 %v75
    %168 = vmatprep.subr.mxu0 %v72
    %169 = vmatpush1.msra.mxu0 %v71
    %170 = vmatprep.subr.mxu0 %v68
    %171 = vmatpush1.msra.mxu0 %v67
    %172 = vmatprep.subr.mxu0 %v64
    %173 = vmatpush1.msra.mxu0 %v63
    %174 = vmatprep.subr.mxu0 %v60
    %175 = vmatpush1.msra.mxu0 %v59
    %176 = vmatprep.subr.mxu0 %v56
    %177 = vmatpush1.msra.mxu0 %v55
    %178 = vmatprep.subr.mxu0 %v52
    %179 = vmatpush1.msra.mxu0 %v51
    %180 = vmatprep.subr.mxu0 %v48
    %181 = vmatpush1.msra.mxu0 %v47
    %182 = vmatprep.subr.mxu0 %v44
    %183 = vmatpush1.msra.mxu0 %v43
    %184 = vmatprep.subr.mxu0 %v40
    %185 = vmatpush1.msra.mxu0 %v39
    %186 = vmatprep.subr.mxu0 %v36
    %187 = vmatpush1.msra.mxu0 %v35
    %188 = vmatprep.subr.mxu0 %v32
    %189 = vmatpush1.msra.mxu0 %v31
    %190 = vmatprep.subr.mxu0 %v28
    %191 = vmatpush1.msra.mxu0 %v27
    %192 = vmatprep.subr.mxu0 %v24
    %193 = vmatpush1.msra.mxu0 %v23
    %194 = vmatprep.subr.mxu0 0.0
    %195 = vmatpush2.msra.mxu0 0.0
    %196 = vmatprep.subr.mxu0 0.0
    %197 = vmatpush2.msra.mxu0 0.0
    %198 = vmatprep.subr.mxu0 0.0
    %199 = vmatpush2.msra.mxu0 0.0
    %200 = vmatprep.subr.mxu0 0.0
    %201 = vmatpush2.msra.mxu0 0.0
    %202 = vmatprep.subr.mxu0 0.0
    %203 = vmatpush2.msra.mxu0 0.0
    %204 = vmatprep.subr.mxu0 0.0
    %205 = vmatpush2.msra.mxu0 0.0
    %206 = vmatprep.subr.mxu0 0.0
    %207 = vmatpush2.msra.mxu0 0.0
    %208 = vmatprep.subr.mxu0 0.0
    %209 = vmatpush2.msra.mxu0 0.0
    %210 = vmatprep.subr.mxu0 0.0
    %211 = vmatpush2.msra.mxu0 0.0
    %212 = vmatprep.subr.mxu0 0.0
    %213 = vmatpush2.msra.mxu0 0.0
    %214 = vmatprep.subr.mxu0 0.0
    %215 = vmatpush2.msra.mxu0 0.0
    %216 = vmatprep.subr.mxu0 0.0
    %217 = vmatpush2.msra.mxu0 0.0
    %218 = vmatprep.subr.mxu0 0.0
    %219 = vmatpush2.msra.mxu0 0.0
    %220 = vmatprep.subr.mxu0 0.0
    %221 = vmatpush2.msra.mxu0 0.0
    %222 = vmatprep.subr.mxu0 0.0
    %223 = vmatpush2.msra.mxu0 0.0
    %224 = vmatprep.subr.mxu0 0.0
    %225 = vmatpush2.msra.mxu0 0.0
    %226 = vmatprep.mubr.f32.mxu0 0.0
    %227 = vmatmul.mubr.f32.gmra.mxu0 %v85
    %v228 = vpop.f32.mrf.mxu0
    %v229 = vadd.f32 0.0, %v228
    %v230 = vpop.f32.mrf.mxu0
    %v231 = vadd.f32 0.0, %v230
    %232 = vdwg.mxu0
    %v233 = vadd.f32 %v87, %v158
    %v234 = vadd.f32 %v88, %v160
    %v235 = vadd.f32 %v89, %v229
    %v236 = vadd.f32 %v90, %v231
    %v237 = vxor.u32 %v233, 2147483648
    %v238 = vmul.f32 %v237, 1.442695
    %v239 = vpow.pop %v238
    %v240 = vadd.f32 %v239, 1.0
    %v241 = vrcp.pop %v240
    %v242 = vmul.f32 1.0, %v241
    %v243 = vxor.u32 %v234, 2147483648
    %v244 = vmul.f32 %v243, 1.442695
    %v245 = vpow.pop %v244
    %v246 = vadd.f32 %v245, 1.0
    %v247 = vrcp.pop %v246
    %v248 = vmul.f32 1.0, %v247
    %v249 = vtanh.pop %v235
    %v250 = vxor.u32 %v236, 2147483648
    %v251 = vmul.f32 %v250, 1.442695
    %v252 = vpow.pop %v251
    %v253 = vadd.f32 %v252, 1.0
    %v254 = vrcp.pop %v253
    %v255 = vmul.f32 1.0, %v254
    %v256 = vmul.f32 %v248, %v86
    %v257 = vmul.f32 %v242, %v249
    %v258 = vadd.f32 %v256, %v257
    %v259 = vtanh.pop %v258
    %v260 = vmul.f32 %v255, %v259
    %261 = vst [vmem:[#allocation4] sm:$0xff] %v260
    %s262 = scalar_lea.vmem %s0, 32
    %v263 = vld [vmem:[%s262] sm:$0xff]
    %v264 = vld [vmem:[%s262 + $0x8] sm:$0xff]
    %v265 = vld [vmem:[%s262 + $0x10] sm:$0xff]
    %v266 = vld [vmem:[%s262 + $0x18] sm:$0xff]
    %267 = vmatprep.subr.mxu0 %v82
    %268 = vmatpush1.msra.mxu0 %v81
    %269 = vmatprep.subr.mxu0 %v78
    %270 = vmatpush1.msra.mxu0 %v77
    %271 = vmatprep.subr.mxu0 %v74
    %272 = vmatpush1.msra.mxu0 %v73
    %273 = vmatprep.subr.mxu0 %v70
    %274 = vmatpush1.msra.mxu0 %v69
    %275 = vmatprep.subr.mxu0 %v66
    %276 = vmatpush1.msra.mxu0 %v65
    %277 = vmatprep.subr.mxu0 %v62
    %278 = vmatpush1.msra.mxu0 %v61
    %279 = vmatprep.subr.mxu0 %v58
    %280 = vmatpush1.msra.mxu0 %v57
    %281 = vmatprep.subr.mxu0 %v54
    %282 = vmatpush1.msra.mxu0 %v53
    %283 = vmatprep.subr.mxu0 %v50
    %284 = vmatpush1.msra.mxu0 %v49
    %285 = vmatprep.subr.mxu0 %v46
    %286 = vmatpush1.msra.mxu0 %v45
    %287 = vmatprep.subr.mxu0 %v42
    %288 = vmatpush1.msra.mxu0 %v41
    %289 = vmatprep.subr.mxu0 %v38
    %290 = vmatpush1.msra.mxu0 %v37
    %291 = vmatprep.subr.mxu0 %v34
    %292 = vmatpush1.msra.mxu0 %v33
    %293 = vmatprep.subr.mxu0 %v30
    %294 = vmatpush1.msra.mxu0 %v29
    %295 = vmatprep.subr.mxu0 %v26
    %296 = vmatpush1.msra.mxu0 %v25
    %297 = vmatprep.subr.mxu0 %v22
    %298 = vmatpush1.msra.mxu0 %v21
    %299 = vmatprep.subr.mxu0 0.0
    %300 = vmatpush2.msra.mxu0 0.0
    %301 = vmatprep.subr.mxu0 0.0
    %302 = vmatpush2.msra.mxu0 0.0
    %303 = vmatprep.subr.mxu0 0.0
    %304 = vmatpush2.msra.mxu0 0.0
    %305 = vmatprep.subr.mxu0 0.0
    %306 = vmatpush2.msra.mxu0 0.0
    %307 = vmatprep.subr.mxu0 0.0
    %308 = vmatpush2.msra.mxu0 0.0
    %309 = vmatprep.subr.mxu0 0.0
    %310 = vmatpush2.msra.mxu0 0.0
    %311 = vmatprep.subr.mxu0 0.0
    %312 = vmatpush2.msra.mxu0 0.0
    %313 = vmatprep.subr.mxu0 0.0
    %314 = vmatpush2.msra.mxu0 0.0
    %315 = vmatprep.subr.mxu0 0.0
    %316 = vmatpush2.msra.mxu0 0.0
    %317 = vmatprep.subr.mxu0 0.0
    %318 = vmatpush2.msra.mxu0 0.0
    %319 = vmatprep.subr.mxu0 0.0
    %320 = vmatpush2.msra.mxu0 0.0
    %321 = vmatprep.subr.mxu0 0.0
    %322 = vmatpush2.msra.mxu0 0.0
    %323 = vmatprep.subr.mxu0 0.0
    %324 = vmatpush2.msra.mxu0 0.0
    %325 = vmatprep.subr.mxu0 0.0
    %326 = vmatpush2.msra.mxu0 0.0
    %327 = vmatprep.subr.mxu0 0.0
    %328 = vmatpush2.msra.mxu0 0.0
    %329 = vmatprep.subr.mxu0 0.0
    %330 = vmatpush2.msra.mxu0 0.0
    %331 = vmatprep.mubr.f32.mxu0 0.0
    %332 = vmatmul.mubr.f32.gmra.mxu0 %v260
    %v333 = vpop.f32.mrf.mxu0
    %v334 = vadd.f32 0.0, %v333
    %v335 = vpop.f32.mrf.mxu0
    %v336 = vadd.f32 0.0, %v335
    %337 = vdwg.mxu0
    %338 = vmatprep.subr.mxu0 %v84
    %339 = vmatpush1.msra.mxu0 %v83
    %340 = vmatprep.subr.mxu0 %v80
    %341 = vmatpush1.msra.mxu0 %v79
    %342 = vmatprep.subr.mxu0 %v76
    %343 = vmatpush1.msra.mxu0 %v75
    %344 = vmatprep.subr.mxu0 %v72
    %345 = vmatpush1.msra.mxu0 %v71
    %346 = vmatprep.subr.mxu0 %v68
    %347 = vmatpush1.msra.mxu0 %v67
    %348 = vmatprep.subr.mxu0 %v64
    %349 = vmatpush1.msra.mxu0 %v63
    %350 = vmatprep.subr.mxu0 %v60
    %351 = vmatpush1.msra.mxu0 %v59
    %352 = vmatprep.subr.mxu0 %v56
    %353 = vmatpush1.msra.mxu0 %v55
    %354 = vmatprep.subr.mxu0 %v52
    %355 = vmatpush1.msra.mxu0 %v51
    %356 = vmatprep.subr.mxu0 %v48
    %357 = vmatpush1.msra.mxu0 %v47
    %358 = vmatprep.subr.mxu0 %v44
    %359 = vmatpush1.msra.mxu0 %v43
    %360 = vmatprep.subr.mxu0 %v40
    %361 = vmatpush1.msra.mxu0 %v39
    %362 = vmatprep.subr.mxu0 %v36
    %363 = vmatpush1.msra.mxu0 %v35
    %364 = vmatprep.subr.mxu0 %v32
    %365 = vmatpush1.msra.mxu0 %v31
    %366 = vmatprep.subr.mxu0 %v28
    %367 = vmatpush1.msra.mxu0 %v27
    %368 = vmatprep.subr.mxu0 %v24
    %369 = vmatpush1.msra.mxu0 %v23
    %370 = vmatprep.subr.mxu0 0.0
    %371 = vmatpush2.msra.mxu0 0.0
    %372 = vmatprep.subr.mxu0 0.0
    %373 = vmatpush2.msra.mxu0 0.0
    %374 = vmatprep.subr.mxu0 0.0
    %375 = vmatpush2.msra.mxu0 0.0
    %376 = vmatprep.subr.mxu0 0.0
    %377 = vmatpush2.msra.mxu0 0.0
    %378 = vmatprep.subr.mxu0 0.0
    %379 = vmatpush2.msra.mxu0 0.0
    %380 = vmatprep.subr.mxu0 0.0
    %381 = vmatpush2.msra.mxu0 0.0
    %382 = vmatprep.subr.mxu0 0.0
    %383 = vmatpush2.msra.mxu0 0.0
    %384 = vmatprep.subr.mxu0 0.0
    %385 = vmatpush2.msra.mxu0 0.0
    %386 = vmatprep.subr.mxu0 0.0
    %387 = vmatpush2.msra.mxu0 0.0
    %388 = vmatprep.subr.mxu0 0.0
    %389 = vmatpush2.msra.mxu0 0.0
    %390 = vmatprep.subr.mxu0 0.0
    %391 = vmatpush2.msra.mxu0 0.0
    %392 = vmatprep.subr.mxu0 0.0
    %393 = vmatpush2.msra.mxu0 0.0
    %394 = vmatprep.subr.mxu0 0.0
    %395 = vmatpush2.msra.mxu0 0.0
    %396 = vmatprep.subr.mxu0 0.0
    %397 = vmatpush2.msra.mxu0 0.0
    %398 = vmatprep.subr.mxu0 0.0
    %399 = vmatpush2.msra.mxu0 0.0
    %400 = vmatprep.subr.mxu0 0.0
    %401 = vmatpush2.msra.mxu0 0.0
    %402 = vmatprep.mubr.f32.mxu0 0.0
    %403 = vmatmul.mubr.f32.gmra.mxu0 %v260
    %v404 = vpop.f32.mrf.mxu0
    %v405 = vadd.f32 0.0, %v404
    %v406 = vpop.f32.mrf.mxu0
    %v407 = vadd.f32 0.0, %v406
    %408 = vdwg.mxu0
    %v409 = vadd.f32 %v263, %v334
    %v410 = vadd.f32 %v264, %v336
    %v411 = vadd.f32 %v265, %v405
    %v412 = vadd.f32 %v266, %v407
    %v413 = vxor.u32 %v409, 2147483648
    %v414 = vmul.f32 %v413, 1.442695
    %v415 = vpow.pop %v414
    %v416 = vadd.f32 %v415, 1.0
    %v417 = vrcp.pop %v416
    %v418 = vmul.f32 1.0, %v417
    %v419 = vxor.u32 %v410, 2147483648
    %v420 = vmul.f32 %v419, 1.442695
    %v421 = vpow.pop %v420
    %v422 = vadd.f32 %v421, 1.0
    %v423 = vrcp.pop %v422
    %v424 = vmul.f32 1.0, %v423
    %v425 = vtanh.pop %v411
    %v426 = vxor.u32 %v412, 2147483648
    %v427 = vmul.f32 %v426, 1.442695
    %v428 = vpow.pop %v427
    %v429 = vadd.f32 %v428, 1.0
    %v430 = vrcp.pop %v429
    %v431 = vmul.f32 1.0, %v430
    %v432 = vmul.f32 %v424, %v258
    %v433 = vmul.f32 %v418, %v425
    %v434 = vadd.f32 %v432, %v433
    %v435 = vtanh.pop %v434
    %v436 = vmul.f32 %v431, %v435
    %s437 = scalar_lea.vmem [#allocation4], 8
    %438 = vst [vmem:[%s437] sm:$0xff] %v436
    %s439 = scalar_lea.vmem %s0, 64
    %v440 = vld [vmem:[%s439] sm:$0xff]
    %v441 = vld [vmem:[%s439 + $0x8] sm:$0xff]
    %v442 = vld [vmem:[%s439 + $0x10] sm:$0xff]
    %v443 = vld [vmem:[%s439 + $0x18] sm:$0xff]
    %444 = vmatprep.subr.mxu0 %v82
    %445 = vmatpush1.msra.mxu0 %v81
    %446 = vmatprep.subr.mxu0 %v78
    %447 = vmatpush1.msra.mxu0 %v77
    %448 = vmatprep.subr.mxu0 %v74
    %449 = vmatpush1.msra.mxu0 %v73
    %450 = vmatprep.subr.mxu0 %v70
    %451 = vmatpush1.msra.mxu0 %v69
    %452 = vmatprep.subr.mxu0 %v66
    %453 = vmatpush1.msra.mxu0 %v65
    %454 = vmatprep.subr.mxu0 %v62
    %455 = vmatpush1.msra.mxu0 %v61
    %456 = vmatprep.subr.mxu0 %v58
    %457 = vmatpush1.msra.mxu0 %v57
    %458 = vmatprep.subr.mxu0 %v54
    %459 = vmatpush1.msra.mxu0 %v53
    %460 = vmatprep.subr.mxu0 %v50
    %461 = vmatpush1.msra.mxu0 %v49
    %462 = vmatprep.subr.mxu0 %v46
    %463 = vmatpush1.msra.mxu0 %v45
    %464 = vmatprep.subr.mxu0 %v42
    %465 = vmatpush1.msra.mxu0 %v41
    %466 = vmatprep.subr.mxu0 %v38
    %467 = vmatpush1.msra.mxu0 %v37
    %468 = vmatprep.subr.mxu0 %v34
    %469 = vmatpush1.msra.mxu0 %v33
    %470 = vmatprep.subr.mxu0 %v30
    %471 = vmatpush1.msra.mxu0 %v29
    %472 = vmatprep.subr.mxu0 %v26
    %473 = vmatpush1.msra.mxu0 %v25
    %474 = vmatprep.subr.mxu0 %v22
    %475 = vmatpush1.msra.mxu0 %v21
    %476 = vmatprep.subr.mxu0 0.0
    %477 = vmatpush2.msra.mxu0 0.0
    %478 = vmatprep.subr.mxu0 0.0
    %479 = vmatpush2.msra.mxu0 0.0
    %480 = vmatprep.subr.mxu0 0.0
    %481 = vmatpush2.msra.mxu0 0.0
    %482 = vmatprep.subr.mxu0 0.0
    %483 = vmatpush2.msra.mxu0 0.0
    %484 = vmatprep.subr.mxu0 0.0
    %485 = vmatpush2.msra.mxu0 0.0
    %486 = vmatprep.subr.mxu0 0.0
    %487 = vmatpush2.msra.mxu0 0.0
    %488 = vmatprep.subr.mxu0 0.0
    %489 = vmatpush2.msra.mxu0 0.0
    %490 = vmatprep.subr.mxu0 0.0
    %491 = vmatpush2.msra.mxu0 0.0
    %492 = vmatprep.subr.mxu0 0.0
    %493 = vmatpush2.msra.mxu0 0.0
    %494 = vmatprep.subr.mxu0 0.0
    %495 = vmatpush2.msra.mxu0 0.0
    %496 = vmatprep.subr.mxu0 0.0
    %497 = vmatpush2.msra.mxu0 0.0
    %498 = vmatprep.subr.mxu0 0.0
    %499 = vmatpush2.msra.mxu0 0.0
    %500 = vmatprep.subr.mxu0 0.0
    %501 = vmatpush2.msra.mxu0 0.0
    %502 = vmatprep.subr.mxu0 0.0
    %503 = vmatpush2.msra.mxu0 0.0
    %504 = vmatprep.subr.mxu0 0.0
    %505 = vmatpush2.msra.mxu0 0.0
    %506 = vmatprep.subr.mxu0 0.0
    %507 = vmatpush2.msra.mxu0 0.0
    %508 = vmatprep.mubr.f32.mxu0 0.0
    %509 = vmatmul.mubr.f32.gmra.mxu0 %v436
    %v510 = vpop.f32.mrf.mxu0
    %v511 = vadd.f32 0.0, %v510
    %v512 = vpop.f32.mrf.mxu0
    %v513 = vadd.f32 0.0, %v512
    %514 = vdwg.mxu0
    %515 = vmatprep.subr.mxu0 %v84
    %516 = vmatpush1.msra.mxu0 %v83
    %517 = vmatprep.subr.mxu0 %v80
    %518 = vmatpush1.msra.mxu0 %v79
    %519 = vmatprep.subr.mxu0 %v76
    %520 = vmatpush1.msra.mxu0 %v75
    %521 = vmatprep.subr.mxu0 %v72
    %522 = vmatpush1.msra.mxu0 %v71
    %523 = vmatprep.subr.mxu0 %v68
    %524 = vmatpush1.msra.mxu0 %v67
    %525 = vmatprep.subr.mxu0 %v64
    %526 = vmatpush1.msra.mxu0 %v63
    %527 = vmatprep.subr.mxu0 %v60
    %528 = vmatpush1.msra.mxu0 %v59
    %529 = vmatprep.subr.mxu0 %v56
    %530 = vmatpush1.msra.mxu0 %v55
    %531 = vmatprep.subr.mxu0 %v52
    %532 = vmatpush1.msra.mxu0 %v51
    %533 = vmatprep.subr.mxu0 %v48
    %534 = vmatpush1.msra.mxu0 %v47
    %535 = vmatprep.subr.mxu0 %v44
    %536 = vmatpush1.msra.mxu0 %v43
    %537 = vmatprep.subr.mxu0 %v40
    %538 = vmatpush1.msra.mxu0 %v39
    %539 = vmatprep.subr.mxu0 %v36
    %540 = vmatpush1.msra.mxu0 %v35
    %541 = vmatprep.subr.mxu0 %v32
    %542 = vmatpush1.msra.mxu0 %v31
    %543 = vmatprep.subr.mxu0 %v28
    %544 = vmatpush1.msra.mxu0 %v27
    %545 = vmatprep.subr.mxu0 %v24
    %546 = vmatpush1.msra.mxu0 %v23
    %547 = vmatprep.subr.mxu0 0.0
    %548 = vmatpush2.msra.mxu0 0.0
    %549 = vmatprep.subr.mxu0 0.0
    %550 = vmatpush2.msra.mxu0 0.0
    %551 = vmatprep.subr.mxu0 0.0
    %552 = vmatpush2.msra.mxu0 0.0
    %553 = vmatprep.subr.mxu0 0.0
    %554 = vmatpush2.msra.mxu0 0.0
    %555 = vmatprep.subr.mxu0 0.0
    %556 = vmatpush2.msra.mxu0 0.0
    %557 = vmatprep.subr.mxu0 0.0
    %558 = vmatpush2.msra.mxu0 0.0
    %559 = vmatprep.subr.mxu0 0.0
    %560 = vmatpush2.msra.mxu0 0.0
    %561 = vmatprep.subr.mxu0 0.0
    %562 = vmatpush2.msra.mxu0 0.0
    %563 = vmatprep.subr.mxu0 0.0
    %564 = vmatpush2.msra.mxu0 0.0
    %565 = vmatprep.subr.mxu0 0.0
    %566 = vmatpush2.msra.mxu0 0.0
    %567 = vmatprep.subr.mxu0 0.0
    %568 = vmatpush2.msra.mxu0 0.0
    %569 = vmatprep.subr.mxu0 0.0
    %570 = vmatpush2.msra.mxu0 0.0
    %571 = vmatprep.subr.mxu0 0.0
    %572 = vmatpush2.msra.mxu0 0.0
    %573 = vmatprep.subr.mxu0 0.0
    %574 = vmatpush2.msra.mxu0 0.0
    %575 = vmatprep.subr.mxu0 0.0
    %576 = vmatpush2.msra.mxu0 0.0
    %577 = vmatprep.subr.mxu0 0.0
    %578 = vmatpush2.msra.mxu0 0.0
    %579 = vmatprep.mubr.f32.mxu0 0.0
    %580 = vmatmul.mubr.f32.gmra.mxu0 %v436
    %v581 = vpop.f32.mrf.mxu0
    %v582 = vadd.f32 0.0, %v581
    %v583 = vpop.f32.mrf.mxu0
    %v584 = vadd.f32 0.0, %v583
    %585 = vdwg.mxu0
    %v586 = vadd.f32 %v440, %v511
    %v587 = vadd.f32 %v441, %v513
    %v588 = vadd.f32 %v442, %v582
    %v589 = vadd.f32 %v443, %v584
    %v590 = vxor.u32 %v586, 2147483648
    %v591 = vmul.f32 %v590, 1.442695
    %v592 = vpow.pop %v591
    %v593 = vadd.f32 %v592, 1.0
    %v594 = vrcp.pop %v593
    %v595 = vmul.f32 1.0, %v594
    %v596 = vxor.u32 %v587, 2147483648
    %v597 = vmul.f32 %v596, 1.442695
    %v598 = vpow.pop %v597
    %v599 = vadd.f32 %v598, 1.0
    %v600 = vrcp.pop %v599
    %v601 = vmul.f32 1.0, %v600
    %v602 = vtanh.pop %v588
    %v603 = vxor.u32 %v589, 2147483648
    %v604 = vmul.f32 %v603, 1.442695
    %v605 = vpow.pop %v604
    %v606 = vadd.f32 %v605, 1.0
    %v607 = vrcp.pop %v606
    %v608 = vmul.f32 1.0, %v607
    %v609 = vmul.f32 %v601, %v434
    %v610 = vmul.f32 %v595, %v602
    %v611 = vadd.f32 %v609, %v610
    %v612 = vtanh.pop %v611
    %v613 = vmul.f32 %v608, %v612
    %s614 = scalar_lea.vmem [#allocation4], 16
    %615 = vst [vmem:[%s614] sm:$0xff] %v613
    %s616 = scalar_lea.vmem %s0, 96
    %v617 = vld [vmem:[%s616] sm:$0xff]
    %v618 = vld [vmem:[%s616 + $0x8] sm:$0xff]
    %v619 = vld [vmem:[%s616 + $0x10] sm:$0xff]
    %v620 = vld [vmem:[%s616 + $0x18] sm:$0xff]
    %621 = vmatprep.subr.mxu0 %v82
    %622 = vmatpush1.msra.mxu0 %v81
    %623 = vmatprep.subr.mxu0 %v78
    %624 = vmatpush1.msra.mxu0 %v77
    %625 = vmatprep.subr.mxu0 %v74
    %626 = vmatpush1.msra.mxu0 %v73
    %627 = vmatprep.subr.mxu0 %v70
    %628 = vmatpush1.msra.mxu0 %v69
    %629 = vmatprep.subr.mxu0 %v66
    %630 = vmatpush1.msra.mxu0 %v65
    %631 = vmatprep.subr.mxu0 %v62
    %632 = vmatpush1.msra.mxu0 %v61
    %633 = vmatprep.subr.mxu0 %v58
    %634 = vmatpush1.msra.mxu0 %v57
    %635 = vmatprep.subr.mxu0 %v54
    %636 = vmatpush1.msra.mxu0 %v53
    %637 = vmatprep.subr.mxu0 %v50
    %638 = vmatpush1.msra.mxu0 %v49
    %639 = vmatprep.subr.mxu0 %v46
    %640 = vmatpush1.msra.mxu0 %v45
    %641 = vmatprep.subr.mxu0 %v42
    %642 = vmatpush1.msra.mxu0 %v41
    %643 = vmatprep.subr.mxu0 %v38
    %644 = vmatpush1.msra.mxu0 %v37
    %645 = vmatprep.subr.mxu0 %v34
    %646 = vmatpush1.msra.mxu0 %v33
    %647 = vmatprep.subr.mxu0 %v30
    %648 = vmatpush1.msra.mxu0 %v29
    %649 = vmatprep.subr.mxu0 %v26
    %650 = vmatpush1.msra.mxu0 %v25
    %651 = vmatprep.subr.mxu0 %v22
    %652 = vmatpush1.msra.mxu0 %v21
    %653 = vmatprep.subr.mxu0 0.0
    %654 = vmatpush2.msra.mxu0 0.0
    %655 = vmatprep.subr.mxu0 0.0
    %656 = vmatpush2.msra.mxu0 0.0
    %657 = vmatprep.subr.mxu0 0.0
    %658 = vmatpush2.msra.mxu0 0.0
    %659 = vmatprep.subr.mxu0 0.0
    %660 = vmatpush2.msra.mxu0 0.0
    %661 = vmatprep.subr.mxu0 0.0
    %662 = vmatpush2.msra.mxu0 0.0
    %663 = vmatprep.subr.mxu0 0.0
    %664 = vmatpush2.msra.mxu0 0.0
    %665 = vmatprep.subr.mxu0 0.0
    %666 = vmatpush2.msra.mxu0 0.0
    %667 = vmatprep.subr.mxu0 0.0
    %668 = vmatpush2.msra.mxu0 0.0
    %669 = vmatprep.subr.mxu0 0.0
    %670 = vmatpush2.msra.mxu0 0.0
    %671 = vmatprep.subr.mxu0 0.0
    %672 = vmatpush2.msra.mxu0 0.0
    %673 = vmatprep.subr.mxu0 0.0
    %674 = vmatpush2.msra.mxu0 0.0
    %675 = vmatprep.subr.mxu0 0.0
    %676 = vmatpush2.msra.mxu0 0.0
    %677 = vmatprep.subr.mxu0 0.0
    %678 = vmatpush2.msra.mxu0 0.0
    %679 = vmatprep.subr.mxu0 0.0
    %680 = vmatpush2.msra.mxu0 0.0
    %681 = vmatprep.subr.mxu0 0.0
    %682 = vmatpush2.msra.mxu0 0.0
    %683 = vmatprep.subr.mxu0 0.0
    %684 = vmatpush2.msra.mxu0 0.0
    %685 = vmatprep.mubr.f32.mxu0 0.0
    %686 = vmatmul.mubr.f32.gmra.mxu0 %v613
    %v687 = vpop.f32.mrf.mxu0
    %v688 = vadd.f32 0.0, %v687
    %v689 = vpop.f32.mrf.mxu0
    %v690 = vadd.f32 0.0, %v689
    %691 = vdwg.mxu0
    %692 = vmatprep.subr.mxu0 %v84
    %693 = vmatpush1.msra.mxu0 %v83
    %694 = vmatprep.subr.mxu0 %v80
    %695 = vmatpush1.msra.mxu0 %v79
    %696 = vmatprep.subr.mxu0 %v76
    %697 = vmatpush1.msra.mxu0 %v75
    %698 = vmatprep.subr.mxu0 %v72
    %699 = vmatpush1.msra.mxu0 %v71
    %700 = vmatprep.subr.mxu0 %v68
    %701 = vmatpush1.msra.mxu0 %v67
    %702 = vmatprep.subr.mxu0 %v64
    %703 = vmatpush1.msra.mxu0 %v63
    %704 = vmatprep.subr.mxu0 %v60
    %705 = vmatpush1.msra.mxu0 %v59
    %706 = vmatprep.subr.mxu0 %v56
    %707 = vmatpush1.msra.mxu0 %v55
    %708 = vmatprep.subr.mxu0 %v52
    %709 = vmatpush1.msra.mxu0 %v51
    %710 = vmatprep.subr.mxu0 %v48
    %711 = vmatpush1.msra.mxu0 %v47
    %712 = vmatprep.subr.mxu0 %v44
    %713 = vmatpush1.msra.mxu0 %v43
    %714 = vmatprep.subr.mxu0 %v40
    %715 = vmatpush1.msra.mxu0 %v39
    %716 = vmatprep.subr.mxu0 %v36
    %717 = vmatpush1.msra.mxu0 %v35
    %718 = vmatprep.subr.mxu0 %v32
    %719 = vmatpush1.msra.mxu0 %v31
    %720 = vmatprep.subr.mxu0 %v28
    %721 = vmatpush1.msra.mxu0 %v27
    %722 = vmatprep.subr.mxu0 %v24
    %723 = vmatpush1.msra.mxu0 %v23
    %724 = vmatprep.subr.mxu0 0.0
    %725 = vmatpush2.msra.mxu0 0.0
    %726 = vmatprep.subr.mxu0 0.0
    %727 = vmatpush2.msra.mxu0 0.0
    %728 = vmatprep.subr.mxu0 0.0
    %729 = vmatpush2.msra.mxu0 0.0
    %730 = vmatprep.subr.mxu0 0.0
    %731 = vmatpush2.msra.mxu0 0.0
    %732 = vmatprep.subr.mxu0 0.0
    %733 = vmatpush2.msra.mxu0 0.0
    %734 = vmatprep.subr.mxu0 0.0
    %735 = vmatpush2.msra.mxu0 0.0
    %736 = vmatprep.subr.mxu0 0.0
    %737 = vmatpush2.msra.mxu0 0.0
    %738 = vmatprep.subr.mxu0 0.0
    %739 = vmatpush2.msra.mxu0 0.0
    %740 = vmatprep.subr.mxu0 0.0
    %741 = vmatpush2.msra.mxu0 0.0
    %742 = vmatprep.subr.mxu0 0.0
    %743 = vmatpush2.msra.mxu0 0.0
    %744 = vmatprep.subr.mxu0 0.0
    %745 = vmatpush2.msra.mxu0 0.0
    %746 = vmatprep.subr.mxu0 0.0
    %747 = vmatpush2.msra.mxu0 0.0
    %748 = vmatprep.subr.mxu0 0.0
    %749 = vmatpush2.msra.mxu0 0.0
    %750 = vmatprep.subr.mxu0 0.0
    %751 = vmatpush2.msra.mxu0 0.0
    %752 = vmatprep.subr.mxu0 0.0
    %753 = vmatpush2.msra.mxu0 0.0
    %754 = vmatprep.subr.mxu0 0.0
    %755 = vmatpush2.msra.mxu0 0.0
    %756 = vmatprep.mubr.f32.mxu0 0.0
    %757 = vmatmul.mubr.f32.gmra.mxu0 %v613
    %v758 = vpop.f32.mrf.mxu0
    %v759 = vadd.f32 0.0, %v758
    %v760 = vpop.f32.mrf.mxu0
    %v761 = vadd.f32 0.0, %v760
    %762 = vdwg.mxu0
    %v763 = vadd.f32 %v617, %v688
    %v764 = vadd.f32 %v618, %v690
    %v765 = vadd.f32 %v619, %v759
    %v766 = vadd.f32 %v620, %v761
    %v767 = vxor.u32 %v763, 2147483648
    %v768 = vmul.f32 %v767, 1.442695
    %v769 = vpow.pop %v768
    %v770 = vadd.f32 %v769, 1.0
    %v771 = vrcp.pop %v770
    %v772 = vmul.f32 1.0, %v771
    %v773 = vxor.u32 %v764, 2147483648
    %v774 = vmul.f32 %v773, 1.442695
    %v775 = vpow.pop %v774
    %v776 = vadd.f32 %v775, 1.0
    %v777 = vrcp.pop %v776
    %v778 = vmul.f32 1.0, %v777
    %v779 = vtanh.pop %v765
    %v780 = vxor.u32 %v766, 2147483648
    %v781 = vmul.f32 %v780, 1.442695
    %v782 = vpow.pop %v781
    %v783 = vadd.f32 %v782, 1.0
    %v784 = vrcp.pop %v783
    %v785 = vmul.f32 1.0, %v784
    %v786 = vmul.f32 %v778, %v611
    %v787 = vmul.f32 %v772, %v779
    %v788 = vadd.f32 %v786, %v787
    %v789 = vtanh.pop %v788
    %v790 = vmul.f32 %v785, %v789
    %s791 = scalar_lea.vmem [#allocation4], 24
    %792 = vst [vmem:[%s791] sm:$0xff] %v790
    %s793 = scalar_lea.vmem %s0, 128
    %v794 = vld [vmem:[%s793] sm:$0xff]
    %v795 = vld [vmem:[%s793 + $0x8] sm:$0xff]
    %v796 = vld [vmem:[%s793 + $0x10] sm:$0xff]
    %v797 = vld [vmem:[%s793 + $0x18] sm:$0xff]
    %798 = vmatprep.subr.mxu0 %v82
    %799 = vmatpush1.msra.mxu0 %v81
    %800 = vmatprep.subr.mxu0 %v78
    %801 = vmatpush1.msra.mxu0 %v77
    %802 = vmatprep.subr.mxu0 %v74
    %803 = vmatpush1.msra.mxu0 %v73
    %804 = vmatprep.subr.mxu0 %v70
    %805 = vmatpush1.msra.mxu0 %v69
    %806 = vmatprep.subr.mxu0 %v66
    %807 = vmatpush1.msra.mxu0 %v65
    %808 = vmatprep.subr.mxu0 %v62
    %809 = vmatpush1.msra.mxu0 %v61
    %810 = vmatprep.subr.mxu0 %v58
    %811 = vmatpush1.msra.mxu0 %v57
    %812 = vmatprep.subr.mxu0 %v54
    %813 = vmatpush1.msra.mxu0 %v53
    %814 = vmatprep.subr.mxu0 %v50
    %815 = vmatpush1.msra.mxu0 %v49
    %816 = vmatprep.subr.mxu0 %v46
    %817 = vmatpush1.msra.mxu0 %v45
    %818 = vmatprep.subr.mxu0 %v42
    %819 = vmatpush1.msra.mxu0 %v41
    %820 = vmatprep.subr.mxu0 %v38
    %821 = vmatpush1.msra.mxu0 %v37
    %822 = vmatprep.subr.mxu0 %v34
    %823 = vmatpush1.msra.mxu0 %v33
    %824 = vmatprep.subr.mxu0 %v30
    %825 = vmatpush1.msra.mxu0 %v29
    %826 = vmatprep.subr.mxu0 %v26
    %827 = vmatpush1.msra.mxu0 %v25
    %828 = vmatprep.subr.mxu0 %v22
    %829 = vmatpush1.msra.mxu0 %v21
    %830 = vmatprep.subr.mxu0 0.0
    %831 = vmatpush2.msra.mxu0 0.0
    %832 = vmatprep.subr.mxu0 0.0
    %833 = vmatpush2.msra.mxu0 0.0
    %834 = vmatprep.subr.mxu0 0.0
    %835 = vmatpush2.msra.mxu0 0.0
    %836 = vmatprep.subr.mxu0 0.0
    %837 = vmatpush2.msra.mxu0 0.0
    %838 = vmatprep.subr.mxu0 0.0
    %839 = vmatpush2.msra.mxu0 0.0
    %840 = vmatprep.subr.mxu0 0.0
    %841 = vmatpush2.msra.mxu0 0.0
    %842 = vmatprep.subr.mxu0 0.0
    %843 = vmatpush2.msra.mxu0 0.0
    %844 = vmatprep.subr.mxu0 0.0
    %845 = vmatpush2.msra.mxu0 0.0
    %846 = vmatprep.subr.mxu0 0.0
    %847 = vmatpush2.msra.mxu0 0.0
    %848 = vmatprep.subr.mxu0 0.0
    %849 = vmatpush2.msra.mxu0 0.0
    %850 = vmatprep.subr.mxu0 0.0
    %851 = vmatpush2.msra.mxu0 0.0
    %852 = vmatprep.subr.mxu0 0.0
    %853 = vmatpush2.msra.mxu0 0.0
    %854 = vmatprep.subr.mxu0 0.0
    %855 = vmatpush2.msra.mxu0 0.0
    %856 = vmatprep.subr.mxu0 0.0
    %857 = vmatpush2.msra.mxu0 0.0
    %858 = vmatprep.subr.mxu0 0.0
    %859 = vmatpush2.msra.mxu0 0.0
    %860 = vmatprep.subr.mxu0 0.0
    %861 = vmatpush2.msra.mxu0 0.0
    %862 = vmatprep.mubr.f32.mxu0 0.0
    %863 = vmatmul.mubr.f32.gmra.mxu0 %v790
    %v864 = vpop.f32.mrf.mxu0
    %v865 = vadd.f32 0.0, %v864
    %v866 = vpop.f32.mrf.mxu0
    %v867 = vadd.f32 0.0, %v866
    %868 = vdwg.mxu0
    %869 = vmatprep.subr.mxu0 %v84
    %870 = vmatpush1.msra.mxu0 %v83
    %871 = vmatprep.subr.mxu0 %v80
    %872 = vmatpush1.msra.mxu0 %v79
    %873 = vmatprep.subr.mxu0 %v76
    %874 = vmatpush1.msra.mxu0 %v75
    %875 = vmatprep.subr.mxu0 %v72
    %876 = vmatpush1.msra.mxu0 %v71
    %877 = vmatprep.subr.mxu0 %v68
    %878 = vmatpush1.msra.mxu0 %v67
    %879 = vmatprep.subr.mxu0 %v64
    %880 = vmatpush1.msra.mxu0 %v63
    %881 = vmatprep.subr.mxu0 %v60
    %882 = vmatpush1.msra.mxu0 %v59
    %883 = vmatprep.subr.mxu0 %v56
    %884 = vmatpush1.msra.mxu0 %v55
    %885 = vmatprep.subr.mxu0 %v52
    %886 = vmatpush1.msra.mxu0 %v51
    %887 = vmatprep.subr.mxu0 %v48
    %888 = vmatpush1.msra.mxu0 %v47
    %889 = vmatprep.subr.mxu0 %v44
    %890 = vmatpush1.msra.mxu0 %v43
    %891 = vmatprep.subr.mxu0 %v40
    %892 = vmatpush1.msra.mxu0 %v39
    %893 = vmatprep.subr.mxu0 %v36
    %894 = vmatpush1.msra.mxu0 %v35
    %895 = vmatprep.subr.mxu0 %v32
    %896 = vmatpush1.msra.mxu0 %v31
    %897 = vmatprep.subr.mxu0 %v28
    %898 = vmatpush1.msra.mxu0 %v27
    %899 = vmatprep.subr.mxu0 %v24
    %900 = vmatpush1.msra.mxu0 %v23
    %901 = vmatprep.subr.mxu0 0.0
    %902 = vmatpush2.msra.mxu0 0.0
    %903 = vmatprep.subr.mxu0 0.0
    %904 = vmatpush2.msra.mxu0 0.0
    %905 = vmatprep.subr.mxu0 0.0
    %906 = vmatpush2.msra.mxu0 0.0
    %907 = vmatprep.subr.mxu0 0.0
    %908 = vmatpush2.msra.mxu0 0.0
    %909 = vmatprep.subr.mxu0 0.0
    %910 = vmatpush2.msra.mxu0 0.0
    %911 = vmatprep.subr.mxu0 0.0
    %912 = vmatpush2.msra.mxu0 0.0
    %913 = vmatprep.subr.mxu0 0.0
    %914 = vmatpush2.msra.mxu0 0.0
    %915 = vmatprep.subr.mxu0 0.0
    %916 = vmatpush2.msra.mxu0 0.0
    %917 = vmatprep.subr.mxu0 0.0
    %918 = vmatpush2.msra.mxu0 0.0
    %919 = vmatprep.subr.mxu0 0.0
    %920 = vmatpush2.msra.mxu0 0.0
    %921 = vmatprep.subr.mxu0 0.0
    %922 = vmatpush2.msra.mxu0 0.0
    %923 = vmatprep.subr.mxu0 0.0
    %924 = vmatpush2.msra.mxu0 0.0
    %925 = vmatprep.subr.mxu0 0.0
    %926 = vmatpush2.msra.mxu0 0.0
    %927 = vmatprep.subr.mxu0 0.0
    %928 = vmatpush2.msra.mxu0 0.0
    %929 = vmatprep.subr.mxu0 0.0
    %930 = vmatpush2.msra.mxu0 0.0
    %931 = vmatprep.subr.mxu0 0.0
    %932 = vmatpush2.msra.mxu0 0.0
    %933 = vmatprep.mubr.f32.mxu0 0.0
    %934 = vmatmul.mubr.f32.gmra.mxu0 %v790
    %v935 = vpop.f32.mrf.mxu0
    %v936 = vadd.f32 0.0, %v935
    %v937 = vpop.f32.mrf.mxu0
    %v938 = vadd.f32 0.0, %v937
    %939 = vdwg.mxu0
    %v940 = vadd.f32 %v794, %v865
    %v941 = vadd.f32 %v795, %v867
    %v942 = vadd.f32 %v796, %v936
    %v943 = vadd.f32 %v797, %v938
    %v944 = vxor.u32 %v940, 2147483648
    %v945 = vmul.f32 %v944, 1.442695
    %v946 = vpow.pop %v945
    %v947 = vadd.f32 %v946, 1.0
    %v948 = vrcp.pop %v947
    %v949 = vmul.f32 1.0, %v948
    %v950 = vxor.u32 %v941, 2147483648
    %v951 = vmul.f32 %v950, 1.442695
    %v952 = vpow.pop %v951
    %v953 = vadd.f32 %v952, 1.0
    %v954 = vrcp.pop %v953
    %v955 = vmul.f32 1.0, %v954
    %v956 = vtanh.pop %v942
    %v957 = vxor.u32 %v943, 2147483648
    %v958 = vmul.f32 %v957, 1.442695
    %v959 = vpow.pop %v958
    %v960 = vadd.f32 %v959, 1.0
    %v961 = vrcp.pop %v960
    %v962 = vmul.f32 1.0, %v961
    %v963 = vmul.f32 %v955, %v788
    %v964 = vmul.f32 %v949, %v956
    %v965 = vadd.f32 %v963, %v964
    %v966 = vtanh.pop %v965
    %v967 = vmul.f32 %v962, %v966
    %s968 = scalar_lea.vmem [#allocation4], 32
    %969 = vst [vmem:[%s968] sm:$0xff] %v967
    %s970 = scalar_lea.vmem %s0, 160
    %v971 = vld [vmem:[%s970] sm:$0xff]
    %v972 = vld [vmem:[%s970 + $0x8] sm:$0xff]
    %v973 = vld [vmem:[%s970 + $0x10] sm:$0xff]
    %v974 = vld [vmem:[%s970 + $0x18] sm:$0xff]
    %975 = vmatprep.subr.mxu0 %v82
    %976 = vmatpush1.msra.mxu0 %v81
    %977 = vmatprep.subr.mxu0 %v78
    %978 = vmatpush1.msra.mxu0 %v77
    %979 = vmatprep.subr.mxu0 %v74
    %980 = vmatpush1.msra.mxu0 %v73
    %981 = vmatprep.subr.mxu0 %v70
    %982 = vmatpush1.msra.mxu0 %v69
    %983 = vmatprep.subr.mxu0 %v66
    %984 = vmatpush1.msra.mxu0 %v65
    %985 = vmatprep.subr.mxu0 %v62
    %986 = vmatpush1.msra.mxu0 %v61
    %987 = vmatprep.subr.mxu0 %v58
    %988 = vmatpush1.msra.mxu0 %v57
    %989 = vmatprep.subr.mxu0 %v54
    %990 = vmatpush1.msra.mxu0 %v53
    %991 = vmatprep.subr.mxu0 %v50
    %992 = vmatpush1.msra.mxu0 %v49
    %993 = vmatprep.subr.mxu0 %v46
    %994 = vmatpush1.msra.mxu0 %v45
    %995 = vmatprep.subr.mxu0 %v42
    %996 = vmatpush1.msra.mxu0 %v41
    %997 = vmatprep.subr.mxu0 %v38
    %998 = vmatpush1.msra.mxu0 %v37
    %999 = vmatprep.subr.mxu0 %v34
    %1000 = vmatpush1.msra.mxu0 %v33
    %1001 = vmatprep.subr.mxu0 %v30
    %1002 = vmatpush1.msra.mxu0 %v29
    %1003 = vmatprep.subr.mxu0 %v26
    %1004 = vmatpush1.msra.mxu0 %v25
    %1005 = vmatprep.subr.mxu0 %v22
    %1006 = vmatpush1.msra.mxu0 %v21
    %1007 = vmatprep.subr.mxu0 0.0
    %1008 = vmatpush2.msra.mxu0 0.0
    %1009 = vmatprep.subr.mxu0 0.0
    %1010 = vmatpush2.msra.mxu0 0.0
    %1011 = vmatprep.subr.mxu0 0.0
    %1012 = vmatpush2.msra.mxu0 0.0
    %1013 = vmatprep.subr.mxu0 0.0
    %1014 = vmatpush2.msra.mxu0 0.0
    %1015 = vmatprep.subr.mxu0 0.0
    %1016 = vmatpush2.msra.mxu0 0.0
    %1017 = vmatprep.subr.mxu0 0.0
    %1018 = vmatpush2.msra.mxu0 0.0
    %1019 = vmatprep.subr.mxu0 0.0
    %1020 = vmatpush2.msra.mxu0 0.0
    %1021 = vmatprep.subr.mxu0 0.0
    %1022 = vmatpush2.msra.mxu0 0.0
    %1023 = vmatprep.subr.mxu0 0.0
    %1024 = vmatpush2.msra.mxu0 0.0
    %1025 = vmatprep.subr.mxu0 0.0
    %1026 = vmatpush2.msra.mxu0 0.0
    %1027 = vmatprep.subr.mxu0 0.0
    %1028 = vmatpush2.msra.mxu0 0.0
    %1029 = vmatprep.subr.mxu0 0.0
    %1030 = vmatpush2.msra.mxu0 0.0
    %1031 = vmatprep.subr.mxu0 0.0
    %1032 = vmatpush2.msra.mxu0 0.0
    %1033 = vmatprep.subr.mxu0 0.0
    %1034 = vmatpush2.msra.mxu0 0.0
    %1035 = vmatprep.subr.mxu0 0.0
    %1036 = vmatpush2.msra.mxu0 0.0
    %1037 = vmatprep.subr.mxu0 0.0
    %1038 = vmatpush2.msra.mxu0 0.0
    %1039 = vmatprep.mubr.f32.mxu0 0.0
    %1040 = vmatmul.mubr.f32.gmra.mxu0 %v967
    %v1041 = vpop.f32.mrf.mxu0
    %v1042 = vadd.f32 0.0, %v1041
    %v1043 = vpop.f32.mrf.mxu0
    %v1044 = vadd.f32 0.0, %v1043
    %1045 = vdwg.mxu0
    %1046 = vmatprep.subr.mxu0 %v84
    %1047 = vmatpush1.msra.mxu0 %v83
    %1048 = vmatprep.subr.mxu0 %v80
    %1049 = vmatpush1.msra.mxu0 %v79
    %1050 = vmatprep.subr.mxu0 %v76
    %1051 = vmatpush1.msra.mxu0 %v75
    %1052 = vmatprep.subr.mxu0 %v72
    %1053 = vmatpush1.msra.mxu0 %v71
    %1054 = vmatprep.subr.mxu0 %v68
    %1055 = vmatpush1.msra.mxu0 %v67
    %1056 = vmatprep.subr.mxu0 %v64
    %1057 = vmatpush1.msra.mxu0 %v63
    %1058 = vmatprep.subr.mxu0 %v60
    %1059 = vmatpush1.msra.mxu0 %v59
    %1060 = vmatprep.subr.mxu0 %v56
    %1061 = vmatpush1.msra.mxu0 %v55
    %1062 = vmatprep.subr.mxu0 %v52
    %1063 = vmatpush1.msra.mxu0 %v51
    %1064 = vmatprep.subr.mxu0 %v48
    %1065 = vmatpush1.msra.mxu0 %v47
    %1066 = vmatprep.subr.mxu0 %v44
    %1067 = vmatpush1.msra.mxu0 %v43
    %1068 = vmatprep.subr.mxu0 %v40
    %1069 = vmatpush1.msra.mxu0 %v39
    %1070 = vmatprep.subr.mxu0 %v36
    %1071 = vmatpush1.msra.mxu0 %v35
    %1072 = vmatprep.subr.mxu0 %v32
    %1073 = vmatpush1.msra.mxu0 %v31
    %1074 = vmatprep.subr.mxu0 %v28
    %1075 = vmatpush1.msra.mxu0 %v27
    %1076 = vmatprep.subr.mxu0 %v24
    %1077 = vmatpush1.msra.mxu0 %v23
    %1078 = vmatprep.subr.mxu0 0.0
    %1079 = vmatpush2.msra.mxu0 0.0
    %1080 = vmatprep.subr.mxu0 0.0
    %1081 = vmatpush2.msra.mxu0 0.0
    %1082 = vmatprep.subr.mxu0 0.0
    %1083 = vmatpush2.msra.mxu0 0.0
    %1084 = vmatprep.subr.mxu0 0.0
    %1085 = vmatpush2.msra.mxu0 0.0
    %1086 = vmatprep.subr.mxu0 0.0
    %1087 = vmatpush2.msra.mxu0 0.0
    %1088 = vmatprep.subr.mxu0 0.0
    %1089 = vmatpush2.msra.mxu0 0.0
    %1090 = vmatprep.subr.mxu0 0.0
    %1091 = vmatpush2.msra.mxu0 0.0
    %1092 = vmatprep.subr.mxu0 0.0
    %1093 = vmatpush2.msra.mxu0 0.0
    %1094 = vmatprep.subr.mxu0 0.0
    %1095 = vmatpush2.msra.mxu0 0.0
    %1096 = vmatprep.subr.mxu0 0.0
    %1097 = vmatpush2.msra.mxu0 0.0
    %1098 = vmatprep.subr.mxu0 0.0
    %1099 = vmatpush2.msra.mxu0 0.0
    %1100 = vmatprep.subr.mxu0 0.0
    %1101 = vmatpush2.msra.mxu0 0.0
    %1102 = vmatprep.subr.mxu0 0.0
    %1103 = vmatpush2.msra.mxu0 0.0
    %1104 = vmatprep.subr.mxu0 0.0
    %1105 = vmatpush2.msra.mxu0 0.0
    %1106 = vmatprep.subr.mxu0 0.0
    %1107 = vmatpush2.msra.mxu0 0.0
    %1108 = vmatprep.subr.mxu0 0.0
    %1109 = vmatpush2.msra.mxu0 0.0
    %1110 = vmatprep.mubr.f32.mxu0 0.0
    %1111 = vmatmul.mubr.f32.gmra.mxu0 %v967
    %v1112 = vpop.f32.mrf.mxu0
    %v1113 = vadd.f32 0.0, %v1112
    %v1114 = vpop.f32.mrf.mxu0
    %v1115 = vadd.f32 0.0, %v1114
    %1116 = vdwg.mxu0
    %v1117 = vadd.f32 %v971, %v1042
    %v1118 = vadd.f32 %v972, %v1044
    %v1119 = vadd.f32 %v973, %v1113
    %v1120 = vadd.f32 %v974, %v1115
    %v1121 = vxor.u32 %v1117, 2147483648
    %v1122 = vmul.f32 %v1121, 1.442695
    %v1123 = vpow.pop %v1122
    %v1124 = vadd.f32 %v1123, 1.0
    %v1125 = vrcp.pop %v1124
    %v1126 = vmul.f32 1.0, %v1125
    %v1127 = vxor.u32 %v1118, 2147483648
    %v1128 = vmul.f32 %v1127, 1.442695
    %v1129 = vpow.pop %v1128
    %v1130 = vadd.f32 %v1129, 1.0
    %v1131 = vrcp.pop %v1130
    %v1132 = vmul.f32 1.0, %v1131
    %v1133 = vtanh.pop %v1119
    %v1134 = vxor.u32 %v1120, 2147483648
    %v1135 = vmul.f32 %v1134, 1.442695
    %v1136 = vpow.pop %v1135
    %v1137 = vadd.f32 %v1136, 1.0
    %v1138 = vrcp.pop %v1137
    %v1139 = vmul.f32 1.0, %v1138
    %v1140 = vmul.f32 %v1132, %v965
    %v1141 = vmul.f32 %v1126, %v1133
    %v1142 = vadd.f32 %v1140, %v1141
    %v1143 = vtanh.pop %v1142
    %v1144 = vmul.f32 %v1139, %v1143
    %s1145 = scalar_lea.vmem [#allocation4], 40
    %1146 = vst [vmem:[%s1145] sm:$0xff] %v1144
    %s1147 = scalar_lea.vmem %s0, 192
    %v1148 = vld [vmem:[%s1147] sm:$0xff]
    %v1149 = vld [vmem:[%s1147 + $0x8] sm:$0xff]
    %v1150 = vld [vmem:[%s1147 + $0x10] sm:$0xff]
    %v1151 = vld [vmem:[%s1147 + $0x18] sm:$0xff]
    %1152 = vmatprep.subr.mxu0 %v82
    %1153 = vmatpush1.msra.mxu0 %v81
    %1154 = vmatprep.subr.mxu0 %v78
    %1155 = vmatpush1.msra.mxu0 %v77
    %1156 = vmatprep.subr.mxu0 %v74
    %1157 = vmatpush1.msra.mxu0 %v73
    %1158 = vmatprep.subr.mxu0 %v70
    %1159 = vmatpush1.msra.mxu0 %v69
    %1160 = vmatprep.subr.mxu0 %v66
    %1161 = vmatpush1.msra.mxu0 %v65
    %1162 = vmatprep.subr.mxu0 %v62
    %1163 = vmatpush1.msra.mxu0 %v61
    %1164 = vmatprep.subr.mxu0 %v58
    %1165 = vmatpush1.msra.mxu0 %v57
    %1166 = vmatprep.subr.mxu0 %v54
    %1167 = vmatpush1.msra.mxu0 %v53
    %1168 = vmatprep.subr.mxu0 %v50
    %1169 = vmatpush1.msra.mxu0 %v49
    %1170 = vmatprep.subr.mxu0 %v46
    %1171 = vmatpush1.msra.mxu0 %v45
    %1172 = vmatprep.subr.mxu0 %v42
    %1173 = vmatpush1.msra.mxu0 %v41
    %1174 = vmatprep.subr.mxu0 %v38
    %1175 = vmatpush1.msra.mxu0 %v37
    %1176 = vmatprep.subr.mxu0 %v34
    %1177 = vmatpush1.msra.mxu0 %v33
    %1178 = vmatprep.subr.mxu0 %v30
    %1179 = vmatpush1.msra.mxu0 %v29
    %1180 = vmatprep.subr.mxu0 %v26
    %1181 = vmatpush1.msra.mxu0 %v25
    %1182 = vmatprep.subr.mxu0 %v22
    %1183 = vmatpush1.msra.mxu0 %v21
    %1184 = vmatprep.subr.mxu0 0.0
    %1185 = vmatpush2.msra.mxu0 0.0
    %1186 = vmatprep.subr.mxu0 0.0
    %1187 = vmatpush2.msra.mxu0 0.0
    %1188 = vmatprep.subr.mxu0 0.0
    %1189 = vmatpush2.msra.mxu0 0.0
    %1190 = vmatprep.subr.mxu0 0.0
    %1191 = vmatpush2.msra.mxu0 0.0
    %1192 = vmatprep.subr.mxu0 0.0
    %1193 = vmatpush2.msra.mxu0 0.0
    %1194 = vmatprep.subr.mxu0 0.0
    %1195 = vmatpush2.msra.mxu0 0.0
    %1196 = vmatprep.subr.mxu0 0.0
    %1197 = vmatpush2.msra.mxu0 0.0
    %1198 = vmatprep.subr.mxu0 0.0
    %1199 = vmatpush2.msra.mxu0 0.0
    %1200 = vmatprep.subr.mxu0 0.0
    %1201 = vmatpush2.msra.mxu0 0.0
    %1202 = vmatprep.subr.mxu0 0.0
    %1203 = vmatpush2.msra.mxu0 0.0
    %1204 = vmatprep.subr.mxu0 0.0
    %1205 = vmatpush2.msra.mxu0 0.0
    %1206 = vmatprep.subr.mxu0 0.0
    %1207 = vmatpush2.msra.mxu0 0.0
    %1208 = vmatprep.subr.mxu0 0.0
    %1209 = vmatpush2.msra.mxu0 0.0
    %1210 = vmatprep.subr.mxu0 0.0
    %1211 = vmatpush2.msra.mxu0 0.0
    %1212 = vmatprep.subr.mxu0 0.0
    %1213 = vmatpush2.msra.mxu0 0.0
    %1214 = vmatprep.subr.mxu0 0.0
    %1215 = vmatpush2.msra.mxu0 0.0
    %1216 = vmatprep.mubr.f32.mxu0 0.0
    %1217 = vmatmul.mubr.f32.gmra.mxu0 %v1144
    %v1218 = vpop.f32.mrf.mxu0
    %v1219 = vadd.f32 0.0, %v1218
    %v1220 = vpop.f32.mrf.mxu0
    %v1221 = vadd.f32 0.0, %v1220
    %1222 = vdwg.mxu0
    %1223 = vmatprep.subr.mxu0 %v84
    %1224 = vmatpush1.msra.mxu0 %v83
    %1225 = vmatprep.subr.mxu0 %v80
    %1226 = vmatpush1.msra.mxu0 %v79
    %1227 = vmatprep.subr.mxu0 %v76
    %1228 = vmatpush1.msra.mxu0 %v75
    %1229 = vmatprep.subr.mxu0 %v72
    %1230 = vmatpush1.msra.mxu0 %v71
    %1231 = vmatprep.subr.mxu0 %v68
    %1232 = vmatpush1.msra.mxu0 %v67
    %1233 = vmatprep.subr.mxu0 %v64
    %1234 = vmatpush1.msra.mxu0 %v63
    %1235 = vmatprep.subr.mxu0 %v60
    %1236 = vmatpush1.msra.mxu0 %v59
    %1237 = vmatprep.subr.mxu0 %v56
    %1238 = vmatpush1.msra.mxu0 %v55
    %1239 = vmatprep.subr.mxu0 %v52
    %1240 = vmatpush1.msra.mxu0 %v51
    %1241 = vmatprep.subr.mxu0 %v48
    %1242 = vmatpush1.msra.mxu0 %v47
    %1243 = vmatprep.subr.mxu0 %v44
    %1244 = vmatpush1.msra.mxu0 %v43
    %1245 = vmatprep.subr.mxu0 %v40
    %1246 = vmatpush1.msra.mxu0 %v39
    %1247 = vmatprep.subr.mxu0 %v36
    %1248 = vmatpush1.msra.mxu0 %v35
    %1249 = vmatprep.subr.mxu0 %v32
    %1250 = vmatpush1.msra.mxu0 %v31
    %1251 = vmatprep.subr.mxu0 %v28
    %1252 = vmatpush1.msra.mxu0 %v27
    %1253 = vmatprep.subr.mxu0 %v24
    %1254 = vmatpush1.msra.mxu0 %v23
    %1255 = vmatprep.subr.mxu0 0.0
    %1256 = vmatpush2.msra.mxu0 0.0
    %1257 = vmatprep.subr.mxu0 0.0
    %1258 = vmatpush2.msra.mxu0 0.0
    %1259 = vmatprep.subr.mxu0 0.0
    %1260 = vmatpush2.msra.mxu0 0.0
    %1261 = vmatprep.subr.mxu0 0.0
    %1262 = vmatpush2.msra.mxu0 0.0
    %1263 = vmatprep.subr.mxu0 0.0
    %1264 = vmatpush2.msra.mxu0 0.0
    %1265 = vmatprep.subr.mxu0 0.0
    %1266 = vmatpush2.msra.mxu0 0.0
    %1267 = vmatprep.subr.mxu0 0.0
    %1268 = vmatpush2.msra.mxu0 0.0
    %1269 = vmatprep.subr.mxu0 0.0
    %1270 = vmatpush2.msra.mxu0 0.0
    %1271 = vmatprep.subr.mxu0 0.0
    %1272 = vmatpush2.msra.mxu0 0.0
    %1273 = vmatprep.subr.mxu0 0.0
    %1274 = vmatpush2.msra.mxu0 0.0
    %1275 = vmatprep.subr.mxu0 0.0
    %1276 = vmatpush2.msra.mxu0 0.0
    %1277 = vmatprep.subr.mxu0 0.0
    %1278 = vmatpush2.msra.mxu0 0.0
    %1279 = vmatprep.subr.mxu0 0.0
    %1280 = vmatpush2.msra.mxu0 0.0
    %1281 = vmatprep.subr.mxu0 0.0
    %1282 = vmatpush2.msra.mxu0 0.0
    %1283 = vmatprep.subr.mxu0 0.0
    %1284 = vmatpush2.msra.mxu0 0.0
    %1285 = vmatprep.subr.mxu0 0.0
    %1286 = vmatpush2.msra.mxu0 0.0
    %1287 = vmatprep.mubr.f32.mxu0 0.0
    %1288 = vmatmul.mubr.f32.gmra.mxu0 %v1144
    %v1289 = vpop.f32.mrf.mxu0
    %v1290 = vadd.f32 0.0, %v1289
    %v1291 = vpop.f32.mrf.mxu0
    %v1292 = vadd.f32 0.0, %v1291
    %1293 = vdwg.mxu0
    %v1294 = vadd.f32 %v1148, %v1219
    %v1295 = vadd.f32 %v1149, %v1221
    %v1296 = vadd.f32 %v1150, %v1290
    %v1297 = vadd.f32 %v1151, %v1292
    %v1298 = vxor.u32 %v1294, 2147483648
    %v1299 = vmul.f32 %v1298, 1.442695
    %v1300 = vpow.pop %v1299
    %v1301 = vadd.f32 %v1300, 1.0
    %v1302 = vrcp.pop %v1301
    %v1303 = vmul.f32 1.0, %v1302
    %v1304 = vxor.u32 %v1295, 2147483648
    %v1305 = vmul.f32 %v1304, 1.442695
    %v1306 = vpow.pop %v1305
    %v1307 = vadd.f32 %v1306, 1.0
    %v1308 = vrcp.pop %v1307
    %v1309 = vmul.f32 1.0, %v1308
    %v1310 = vtanh.pop %v1296
    %v1311 = vxor.u32 %v1297, 2147483648
    %v1312 = vmul.f32 %v1311, 1.442695
    %v1313 = vpow.pop %v1312
    %v1314 = vadd.f32 %v1313, 1.0
    %v1315 = vrcp.pop %v1314
    %v1316 = vmul.f32 1.0, %v1315
    %v1317 = vmul.f32 %v1309, %v1142
    %v1318 = vmul.f32 %v1303, %v1310
    %v1319 = vadd.f32 %v1317, %v1318
    %v1320 = vtanh.pop %v1319
    %v1321 = vmul.f32 %v1316, %v1320
    %s1322 = scalar_lea.vmem [#allocation4], 48
    %1323 = vst [vmem:[%s1322] sm:$0xff] %v1321
    %s1324 = scalar_lea.vmem %s0, 224
    %v1325 = vld [vmem:[%s1324] sm:$0xff]
    %v1326 = vld [vmem:[%s1324 + $0x8] sm:$0xff]
    %v1327 = vld [vmem:[%s1324 + $0x10] sm:$0xff]
    %v1328 = vld [vmem:[%s1324 + $0x18] sm:$0xff]
    %1329 = vmatprep.subr.mxu0 %v82
    %1330 = vmatpush1.msra.mxu0 %v81
    %1331 = vmatprep.subr.mxu0 %v78
    %1332 = vmatpush1.msra.mxu0 %v77
    %1333 = vmatprep.subr.mxu0 %v74
    %1334 = vmatpush1.msra.mxu0 %v73
    %1335 = vmatprep.subr.mxu0 %v70
    %1336 = vmatpush1.msra.mxu0 %v69
    %1337 = vmatprep.subr.mxu0 %v66
    %1338 = vmatpush1.msra.mxu0 %v65
    %1339 = vmatprep.subr.mxu0 %v62
    %1340 = vmatpush1.msra.mxu0 %v61
    %1341 = vmatprep.subr.mxu0 %v58
    %1342 = vmatpush1.msra.mxu0 %v57
    %1343 = vmatprep.subr.mxu0 %v54
    %1344 = vmatpush1.msra.mxu0 %v53
    %1345 = vmatprep.subr.mxu0 %v50
    %1346 = vmatpush1.msra.mxu0 %v49
    %1347 = vmatprep.subr.mxu0 %v46
    %1348 = vmatpush1.msra.mxu0 %v45
    %1349 = vmatprep.subr.mxu0 %v42
    %1350 = vmatpush1.msra.mxu0 %v41
    %1351 = vmatprep.subr.mxu0 %v38
    %1352 = vmatpush1.msra.mxu0 %v37
    %1353 = vmatprep.subr.mxu0 %v34
    %1354 = vmatpush1.msra.mxu0 %v33
    %1355 = vmatprep.subr.mxu0 %v30
    %1356 = vmatpush1.msra.mxu0 %v29
    %1357 = vmatprep.subr.mxu0 %v26
    %1358 = vmatpush1.msra.mxu0 %v25
    %1359 = vmatprep.subr.mxu0 %v22
    %1360 = vmatpush1.msra.mxu0 %v21
    %1361 = vmatprep.subr.mxu0 0.0
    %1362 = vmatpush2.msra.mxu0 0.0
    %1363 = vmatprep.subr.mxu0 0.0
    %1364 = vmatpush2.msra.mxu0 0.0
    %1365 = vmatprep.subr.mxu0 0.0
    %1366 = vmatpush2.msra.mxu0 0.0
    %1367 = vmatprep.subr.mxu0 0.0
    %1368 = vmatpush2.msra.mxu0 0.0
    %1369 = vmatprep.subr.mxu0 0.0
    %1370 = vmatpush2.msra.mxu0 0.0
    %1371 = vmatprep.subr.mxu0 0.0
    %1372 = vmatpush2.msra.mxu0 0.0
    %1373 = vmatprep.subr.mxu0 0.0
    %1374 = vmatpush2.msra.mxu0 0.0
    %1375 = vmatprep.subr.mxu0 0.0
    %1376 = vmatpush2.msra.mxu0 0.0
    %1377 = vmatprep.subr.mxu0 0.0
    %1378 = vmatpush2.msra.mxu0 0.0
    %1379 = vmatprep.subr.mxu0 0.0
    %1380 = vmatpush2.msra.mxu0 0.0
    %1381 = vmatprep.subr.mxu0 0.0
    %1382 = vmatpush2.msra.mxu0 0.0
    %1383 = vmatprep.subr.mxu0 0.0
    %1384 = vmatpush2.msra.mxu0 0.0
    %1385 = vmatprep.subr.mxu0 0.0
    %1386 = vmatpush2.msra.mxu0 0.0
    %1387 = vmatprep.subr.mxu0 0.0
    %1388 = vmatpush2.msra.mxu0 0.0
    %1389 = vmatprep.subr.mxu0 0.0
    %1390 = vmatpush2.msra.mxu0 0.0
    %1391 = vmatprep.subr.mxu0 0.0
    %1392 = vmatpush2.msra.mxu0 0.0
    %1393 = vmatprep.mubr.f32.mxu0 0.0
    %1394 = vmatmul.mubr.f32.gmra.mxu0 %v1321
    %v1395 = vpop.f32.mrf.mxu0
    %v1396 = vadd.f32 0.0, %v1395
    %v1397 = vpop.f32.mrf.mxu0
    %v1398 = vadd.f32 0.0, %v1397
    %1399 = vdwg.mxu0
    %1400 = vmatprep.subr.mxu0 %v84
    %1401 = vmatpush1.msra.mxu0 %v83
    %1402 = vmatprep.subr.mxu0 %v80
    %1403 = vmatpush1.msra.mxu0 %v79
    %1404 = vmatprep.subr.mxu0 %v76
    %1405 = vmatpush1.msra.mxu0 %v75
    %1406 = vmatprep.subr.mxu0 %v72
    %1407 = vmatpush1.msra.mxu0 %v71
    %1408 = vmatprep.subr.mxu0 %v68
    %1409 = vmatpush1.msra.mxu0 %v67
    %1410 = vmatprep.subr.mxu0 %v64
    %1411 = vmatpush1.msra.mxu0 %v63
    %1412 = vmatprep.subr.mxu0 %v60
    %1413 = vmatpush1.msra.mxu0 %v59
    %1414 = vmatprep.subr.mxu0 %v56
    %1415 = vmatpush1.msra.mxu0 %v55
    %1416 = vmatprep.subr.mxu0 %v52
    %1417 = vmatpush1.msra.mxu0 %v51
    %1418 = vmatprep.subr.mxu0 %v48
    %1419 = vmatpush1.msra.mxu0 %v47
    %1420 = vmatprep.subr.mxu0 %v44
    %1421 = vmatpush1.msra.mxu0 %v43
    %1422 = vmatprep.subr.mxu0 %v40
    %1423 = vmatpush1.msra.mxu0 %v39
    %1424 = vmatprep.subr.mxu0 %v36
    %1425 = vmatpush1.msra.mxu0 %v35
    %1426 = vmatprep.subr.mxu0 %v32
    %1427 = vmatpush1.msra.mxu0 %v31
    %1428 = vmatprep.subr.mxu0 %v28
    %1429 = vmatpush1.msra.mxu0 %v27
    %1430 = vmatprep.subr.mxu0 %v24
    %1431 = vmatpush1.msra.mxu0 %v23
    %1432 = vmatprep.subr.mxu0 0.0
    %1433 = vmatpush2.msra.mxu0 0.0
    %1434 = vmatprep.subr.mxu0 0.0
    %1435 = vmatpush2.msra.mxu0 0.0
    %1436 = vmatprep.subr.mxu0 0.0
    %1437 = vmatpush2.msra.mxu0 0.0
    %1438 = vmatprep.subr.mxu0 0.0
    %1439 = vmatpush2.msra.mxu0 0.0
    %1440 = vmatprep.subr.mxu0 0.0
    %1441 = vmatpush2.msra.mxu0 0.0
    %1442 = vmatprep.subr.mxu0 0.0
    %1443 = vmatpush2.msra.mxu0 0.0
    %1444 = vmatprep.subr.mxu0 0.0
    %1445 = vmatpush2.msra.mxu0 0.0
    %1446 = vmatprep.subr.mxu0 0.0
    %1447 = vmatpush2.msra.mxu0 0.0
    %1448 = vmatprep.subr.mxu0 0.0
    %1449 = vmatpush2.msra.mxu0 0.0
    %1450 = vmatprep.subr.mxu0 0.0
    %1451 = vmatpush2.msra.mxu0 0.0
    %1452 = vmatprep.subr.mxu0 0.0
    %1453 = vmatpush2.msra.mxu0 0.0
    %1454 = vmatprep.subr.mxu0 0.0
    %1455 = vmatpush2.msra.mxu0 0.0
    %1456 = vmatprep.subr.mxu0 0.0
    %1457 = vmatpush2.msra.mxu0 0.0
    %1458 = vmatprep.subr.mxu0 0.0
    %1459 = vmatpush2.msra.mxu0 0.0
    %1460 = vmatprep.subr.mxu0 0.0
    %1461 = vmatpush2.msra.mxu0 0.0
    %1462 = vmatprep.subr.mxu0 0.0
    %1463 = vmatpush2.msra.mxu0 0.0
    %1464 = vmatprep.mubr.f32.mxu0 0.0
    %1465 = vmatmul.mubr.f32.gmra.mxu0 %v1321
    %v1466 = vpop.f32.mrf.mxu0
    %v1467 = vadd.f32 0.0, %v1466
    %v1468 = vpop.f32.mrf.mxu0
    %v1469 = vadd.f32 0.0, %v1468
    %1470 = vdwg.mxu0
    %v1471 = vadd.f32 %v1325, %v1396
    %v1472 = vadd.f32 %v1326, %v1398
    %v1473 = vadd.f32 %v1327, %v1467
    %v1474 = vadd.f32 %v1328, %v1469
    %v1475 = vxor.u32 %v1471, 2147483648
    %v1476 = vmul.f32 %v1475, 1.442695
    %v1477 = vpow.pop %v1476
    %v1478 = vadd.f32 %v1477, 1.0
    %v1479 = vrcp.pop %v1478
    %v1480 = vmul.f32 1.0, %v1479
    %v1481 = vxor.u32 %v1472, 2147483648
    %v1482 = vmul.f32 %v1481, 1.442695
    %v1483 = vpow.pop %v1482
    %v1484 = vadd.f32 %v1483, 1.0
    %v1485 = vrcp.pop %v1484
    %v1486 = vmul.f32 1.0, %v1485
    %v1487 = vtanh.pop %v1473
    %v1488 = vxor.u32 %v1474, 2147483648
    %v1489 = vmul.f32 %v1488, 1.442695
    %v1490 = vpow.pop %v1489
    %v1491 = vadd.f32 %v1490, 1.0
    %v1492 = vrcp.pop %v1491
    %v1493 = vmul.f32 1.0, %v1492
    %v1494 = vmul.f32 %v1486, %v1319
    %v1495 = vmul.f32 %v1480, %v1487
    %v1496 = vadd.f32 %v1494, %v1495
    %v1497 = vtanh.pop %v1496
    %v1498 = vmul.f32 %v1493, %v1497
    %s1499 = scalar_lea.vmem [#allocation4], 56
    %1500 = vst [vmem:[%s1499] sm:$0xff] %v1498
    %1501 = vst [vmem:[#allocation2] sm:$0xff] %v1498
    %1502 = vst [vmem:[#allocation3] sm:$0xff] %v1496
    // Predicated region
    $region14: #{encoder_forward.3} parent=1 // pred_check
      %p1503 = pneg %p15
    $region15: #{encoder_forward.3} parent=1 // pred_check_branch
      %1505 = sbr.rel (%p1503) target = $region17
    $region16: #{encoder_forward.3} parent=1 // pred_region
      %1506 = vst [vmem:[%s3] sm:$0xff] %v1498
      %1507 = vst [vmem:[%s4] sm:$0xff] %v1496
    $region17: #{encoder_forward.3} parent=1 // pred_fallthru
      _
    // Predicated region
    $region18: #{encoder_forward.3} parent=1 // pred_check
      _
    $region19: #{encoder_forward.3} parent=1 // pred_check_branch
      %1509 = sbr.rel (0) target = $region21
    $region20: #{encoder_forward.3} parent=1 // pred_region
      %s1511 = ssub.s32 1024, 1024
      %1512 = vsyncadd [#allocation5], %s1511
      %s1513 = sshll.u32 [#allocation4], 4
      %s1514 = int_to_ptr.vmem [resolvable:$true] %s1513
      %1519 = dma.vmem_to_hbm [thread:$0]  %s1514, 1024, %s2, [#allocation5], 128, 128, 8
    $region21: #{encoder_forward.3} parent=1 // pred_fallthru
      _
    // Predicated region
    $region22: #{encoder_forward.3} parent=1 // pred_check
      _
    $region23: #{encoder_forward.3} parent=1 // pred_check_branch
      %1521 = sbr.rel (0) target = $region25
    $region24: #{encoder_forward.3} parent=1 // pred_region
      _
    $region25: #{encoder_forward.3} parent=1 // pred_fallthru
      _
    // Predicated region
    $region26: #{encoder_forward.3} parent=1 // pred_check
      _
    $region27: #{encoder_forward.3} parent=1 // pred_check_branch
      %1523 = sbr.rel (0) target = $region29
    $region28: #{encoder_forward.3} parent=1 // pred_region
      _
    $region29: #{encoder_forward.3} parent=1 // pred_fallthru
      _
    // Predicated region
    $region30: #{encoder_forward.3} parent=1 // pred_check
      _
    $region31: #{encoder_forward.3} parent=1 // pred_check_branch
      %1525 = sbr.rel (0) target = $region33
    $region32: #{encoder_forward.3} parent=1 // pred_region
      %1526 = dma.done [#allocation5], 1024
    $region33: #{encoder_forward.3} parent=1 // pred_fallthru
      _
    // Predicated region
    $region34: #{encoder_forward.3} parent=1 // pred_check
      _
    $region35: #{encoder_forward.3} parent=1 // pred_check_branch
      %1528 = sbr.rel (0) target = $region37
    $region36: #{encoder_forward.3} parent=1 // pred_region
      _
    $region37: #{encoder_forward.3} parent=1 // pred_fallthru
      _
    // Predicated region
    $region38: #{encoder_forward.3} parent=1 // pred_check
      _
    $region39: #{encoder_forward.3} parent=1 // pred_check_branch
      %1530 = sbr.rel (0) target = $region41
    $region40: #{encoder_forward.3} parent=1 // pred_region
      _
    $region41: #{encoder_forward.3} parent=1 // pred_fallthru
      _
    %1531 = vsyncpa [#allocation5], 1

</llo_original>
